<compile_context>
chip_gen: v7x
topology: tpu7x:2x2x1
jax: 0.10.0
libtpu: 0.0.40
codegen_flags: <defaults>
</compile_context>

<pallas_src>
import itertools
from functools import partial

import jax
import jax.numpy as jnp
from jax.experimental import pallas as pl
from jax.experimental.pallas import tpu as pltpu


def _mm(a, b):
    # Single-pass bf16 MXU matmul with f32 accumulation.  astype is a no-op for
    # operands that already arrive in bf16 from the wrapper.
    return jnp.dot(a.astype(jnp.bfloat16), b.astype(jnp.bfloat16),
                   preferred_element_type=jnp.float32)


def idmpnn_kernel(xg_ref, adj_ref, tm_ref, vld_ref, idp_ref, mones_ref,
                  win_ref, bin_ref,
                  w1_ref, b1_ref, w2_ref, b2_ref, g_ref, be_ref,
                  ws1_ref, bs1_ref, ws2_ref, bs2_ref, wout_ref,
                  out_ref, acc_ref, *, num_layer, B, kP, hid, inv_perm):
    cc = pl.program_id(1)                       # reduction (chunk) axis
    last = pl.num_programs(1) - 1               # computed OUTSIDE pl.when bodies

    @pl.when(cc == 0)
    def _init():
        acc_ref[...] = jnp.zeros_like(acc_ref)

    # inmlp on the gathered, permutation-replicated node rows: (B*kP, in_dim) @ (in_dim, hid)
    x = _mm(xg_ref[0], win_ref[...]) + bin_ref[...]            # (B*kP, hid) f32
    x = x * idp_ref[...].astype(jnp.float32)                   # id-embedding gate, (b,i,p) rows

    adj = adj_ref[0]                                           # (B, kP, kP) bf16, hoisted out of layer loop
    for l in range(num_layer):
        # message passing: per-subgraph kron(subadj_b, I_P) @ x_b as a batched MXU matmul
        xb = x.astype(jnp.bfloat16).reshape(B, kP, hid)        # kP is sublane-aligned here (24 = 3*8)
        h = jnp.einsum('bij,bjd->bid', adj, xb,
                       preferred_element_type=jnp.float32).reshape(B * kP, hid)
        h = jnp.maximum(_mm(h, w1_ref[l]) + b1_ref[l], 0.0)    # Linear + ReLU
        h = _mm(h, w2_ref[l]) + b2_ref[l]                      # Linear
        mu = jnp.mean(h, axis=-1, keepdims=True)               # one-pass LayerNorm stats
        var = jnp.mean(h * h, axis=-1, keepdims=True) - mu * mu
        h = (h - mu) * jax.lax.rsqrt(var + 1e-5)
        h = jnp.maximum(h * g_ref[l] + be_ref[l], 0.0)         # affine + ReLU
        x = x + h                                              # residual

    xs = _mm(tm_ref[0], x)                                     # (B*P, hid) masked slot-sum
    xs = jnp.maximum(_mm(xs, ws1_ref[...]) + bs1_ref[...], 0.0)       # setmlp1
    xm = _mm(mones_ref[...], xs) * inv_perm                    # (B, hid) mean over permutations
    xm = jnp.maximum(_mm(xm, ws2_ref[...]) + bs2_ref[...], 0.0)       # setmlp2
    acc_ref[...] = acc_ref[...] + _mm(vld_ref[0], xm)          # (1, hid) sum over valid subgraphs

    @pl.when(cc == last)
    def _fin():
        out_ref[...] = _mm(acc_ref[...], wout_ref[...])        # outmlp (bias added in wrapper)


def _tpu_plan():
    """Generation-aware (num_parallel_cores, per-core MXU row target)."""
    try:
        dev = jax.devices()[0]
        kind = dev.device_kind.lower() if dev.platform == "tpu" else ""
    except Exception:
        kind = ""
    if "v7" in kind:
        return 2, 256          # two TensorCores per chip, 256-wide MXU
    if "v6" in kind:
        return 1, 256          # single TC, 256-wide MXU
    return 1, 128              # v5e / older / non-TPU (interpret) fallback


def idmpnn_forward(x, subadj, subgs, params, allperm, num_layer,
                   num_parallel=None, row_target=None):
    f32, bf16 = jnp.float32, jnp.bfloat16
    ns, k = subgs.shape
    P = allperm.shape[0]
    kP = k * P
    in_dim = x.shape[1]
    hid = params['emb'].shape[1]
    out_dim = params['wout'].shape[1]
    L = num_layer

    auto_npar, auto_rows = _tpu_plan()
    npar = auto_npar if num_parallel is None else num_parallel
    rows = auto_rows if row_target is None else row_target
    npar = max(1, min(npar, ns))
    B = max(1, min(-(-ns // npar), -(-rows // kP)))       # fill MXU rows, few fat steps
    nchunks = -(-ns // (npar * B))
    NC = npar * nchunks
    ns_pad = NC * B
    BkP = B * kP

    pad = ns_pad - ns
    subgs_p = jnp.pad(subgs, ((0, pad), (0, 0)))
    subadj_p = jnp.pad(subadj.astype(f32), ((0, pad), (0, 0), (0, 0)))
    valid = (jnp.arange(ns_pad) < ns).astype(bf16)

    # --- glue (indexing / structural constants), plain JAX, constants pre-cast to bf16 ---
    # gather node features with permutation replication folded in (rows b-major, i-major, p-minor)
    gat_idx = jnp.repeat(subgs_p, P, axis=1)                              # (ns_pad, kP); index -1 wraps, as in the ref
    xg = x[gat_idx].astype(bf16).reshape(NC, BkP, in_dim)

    eyeP = jnp.eye(P, dtype=f32)
    eyeB = jnp.eye(B, dtype=f32)
    # per-subgraph kron(subadj_b, I_P) blocks (NOT block-diagonal over B)
    adj = jnp.einsum('sij,pq->sipjq', subadj_p, eyeP).reshape(NC, B, kP, kP).astype(bf16)

    mask = (subgs_p >= 0).astype(f32)                                     # (ns_pad, k) padded-slot mask
    T0 = jnp.tile(eyeP, (1, k))                                           # (P, kP) slot-sum selector
    Ts = T0[None] * jnp.repeat(mask, P, axis=1)[:, None, :]               # pad mask folded into selector
    Tm = jnp.einsum('cbpr,bd->cbpdr', Ts.reshape(NC, B, P, kP),
                    eyeB).reshape(NC, B * P, BkP).astype(bf16)
    vld = valid.reshape(NC, 1, B)                                         # per-chunk subgraph validity weights
    idp_big = jnp.tile(params['emb'][allperm.T.reshape(-1)], (B, 1)).astype(bf16)   # (B*kP, hid)
    Mones = jnp.repeat(eyeB, P, axis=1).astype(bf16)                      # (B, B*P) per-subgraph sum over perms
    # TODO(synk): subgbatch / xoffset path (global_add_pool over graph batches) not implemented;
    # this kernel covers the subgbatch=None branch of the reference forward.

    per_chunk3 = lambda cp, cc: (cp * nchunks + cc, 0, 0)
    per_chunk4 = lambda cp, cc: (cp * nchunks + cc, 0, 0, 0)
    full2 = lambda cp, cc: (0, 0)
    full3 = lambda cp, cc: (0, 0, 0)

    in_specs = [
        pl.BlockSpec((1, BkP, in_dim), per_chunk3),    # gathered raw node features (perm-replicated)
        pl.BlockSpec((1, B, kP, kP), per_chunk4),      # per-subgraph kron(subadj, I_P) blocks
        pl.BlockSpec((1, B * P, BkP), per_chunk3),     # slot-sum selector with pad mask folded in
        pl.BlockSpec((1, 1, B), per_chunk3),           # subgraph validity weights
        pl.BlockSpec((BkP, hid), full2),               # id-embedding, (b,i,p)-major rows
        pl.BlockSpec((B, B * P), full2),               # sum-over-permutations selector
        pl.BlockSpec((in_dim, hid), full2),            # inmlp W (bf16)
        pl.BlockSpec((1, hid), full2),                 # inmlp b (f32)
        pl.BlockSpec((L, hid, hid), full3),            # mlps Linear1 W (bf16)
        pl.BlockSpec((L, 1, hid), full3),              # mlps Linear1 b (f32)
        pl.BlockSpec((L, hid, hid), full3),            # mlps Linear2 W (bf16)
        pl.BlockSpec((L, 1, hid), full3),              # mlps Linear2 b (f32)
        pl.BlockSpec((L, 1, hid), full3),              # LayerNorm gamma (f32)
        pl.BlockSpec((L, 1, hid), full3),              # LayerNorm beta (f32)
        pl.BlockSpec((hid, hid), full2),               # setmlp1 W (bf16)
        pl.BlockSpec((1, hid), full2),                 # setmlp1 b (f32)
        pl.BlockSpec((hid, hid), full2),               # setmlp2 W (bf16)
        pl.BlockSpec((1, hid), full2),                 # setmlp2 b (f32)
        pl.BlockSpec((hid, out_dim), full2),           # outmlp W (bf16)
    ]

    c = lambda t: t.astype(bf16)
    out = pl.pallas_call(
        partial(idmpnn_kernel, num_layer=L, B=B, kP=kP, hid=hid, inv_perm=1.0 / P),
        out_shape=jax.ShapeDtypeStruct((npar, out_dim), f32),
        grid=(npar, nchunks),
        in_specs=in_specs,
        out_specs=pl.BlockSpec((1, out_dim), lambda cp, cc: (cp, 0)),
        scratch_shapes=[pltpu.VMEM((1, hid), f32)],
        compiler_params=pltpu.CompilerParams(
            dimension_semantics=("parallel", "arbitrary")),
    )(xg, adj, Tm, vld, idp_big, Mones,
      c(params['win']), params['bin'],
      c(params['w1']), params['b1'], c(params['w2']), params['b2'],
      params['g'], params['be'],
      c(params['ws1']), params['bs1'], c(params['ws2']), params['bs2'],
      c(params['wout']))
    # combine per-core partials; output bias added exactly once here
    return out.sum(axis=0) + params['bout'][0]


def idmpnn_ref(x, subadj, subgs, params, allperm, num_layer):
    """Pure-JAX (f32, HIGHEST precision) mirror of the PyTorch forward (subgbatch=None path)."""
    HP = jax.lax.Precision.HIGHEST
    h = jnp.einsum('nd,dh->nh', x, params['win'], precision=HP) + params['bin'][0]
    h = h[subgs]                                              # (ns, k, hid)
    idp = params['emb'][allperm]                              # (P, k, hid)
    h = h[:, None, :, :] * idp[None]                          # (ns, P, k, hid)
    for l in range(num_layer):
        m = jnp.einsum('nij,npjd->npid', subadj, h, precision=HP)
        m = jax.nn.relu(jnp.einsum('npkd,dh->npkh', m, params['w1'][l], precision=HP)
                        + params['b1'][l, 0])
        m = jnp.einsum('npkd,dh->npkh', m, params['w2'][l], precision=HP) + params['b2'][l, 0]
        mu = m.mean(-1, keepdims=True)
        var = jnp.square(m - mu).mean(-1, keepdims=True)
        m = (m - mu) * jax.lax.rsqrt(var + 1e-5) * params['g'][l, 0] + params['be'][l, 0]
        m = jax.nn.relu(m)
        h = h + m
    h = jnp.where((subgs < 0)[:, None, :, None], 0.0, h)
    h = h.sum(axis=2)                                         # sum over k node slots
    h = jax.nn.relu(jnp.einsum('npd,dh->nph', h, params['ws1'], precision=HP) + params['bs1'][0])
    h = h.mean(axis=1)                                        # mean over permutations
    h = jax.nn.relu(jnp.einsum('nd,dh->nh', h, params['ws2'], precision=HP) + params['bs2'][0])
    h = h.sum(axis=0)                                         # sum over subgraphs
    return jnp.einsum('d,do->o', h, params['wout'], precision=HP) + params['bout'][0]


if __name__ == "__main__":
    # module hyper-parameters (small, consistent with IDMPNN.__init__)
    k, in_dim, hid, out_dim, num_layer = 4, 8, 32, 8, 2
    N, ns = 16, 6

    # allperm: all permutations of [1..k-1] with a leading 0 column -> (P, k)
    allperm = jnp.array([(0,) + p for p in itertools.permutations(range(1, k))],
                        dtype=jnp.int32)
    P = allperm.shape[0]

    key = jax.random.PRNGKey(0)
    ks = jax.random.split(key, 20)
    rnd = lambda kk, shape: 0.1 * jax.random.normal(kk, shape, jnp.float32)

    params = {
        'emb':  rnd(ks[0], (k, hid)),
        'win':  rnd(ks[1], (in_dim, hid)),    'bin':  rnd(ks[2], (1, hid)),
        'w1':   rnd(ks[3], (num_layer, hid, hid)), 'b1': rnd(ks[4], (num_layer, 1, hid)),
        'w2':   rnd(ks[5], (num_layer, hid, hid)), 'b2': rnd(ks[6], (num_layer, 1, hid)),
        'g':    jnp.ones((num_layer, 1, hid), jnp.float32),
        'be':   jnp.zeros((num_layer, 1, hid), jnp.float32),
        'ws1':  rnd(ks[7], (hid, hid)),       'bs1':  rnd(ks[8], (1, hid)),
        'ws2':  rnd(ks[9], (hid, hid)),       'bs2':  rnd(ks[10], (1, hid)),
        'wout': rnd(ks[11], (hid, out_dim)),  'bout': rnd(ks[12], (1, out_dim)),
    }

    # inputs
    x = jax.random.normal(ks[13], (N, in_dim), jnp.float32)
    a = (jax.random.uniform(ks[14], (ns, k, k)) < 0.5).astype(jnp.float32)
    subadj = ((a + jnp.swapaxes(a, 1, 2)) > 0).astype(jnp.float32)         # (ns, k, k)
    subgs = jax.random.randint(ks[15], (ns, k), 0, N, dtype=jnp.int32)     # (ns, k)
    subgs = subgs.at[0, 3].set(-1).at[2, 1].set(-1)                        # padded slots

    out = idmpnn_forward(x, subadj, subgs, params, allperm, num_layer)
    out = jax.block_until_ready(out)

    ref = idmpnn_ref(x, subadj, subgs, params, allperm, num_layer)
    assert out.shape == (out_dim,)
    # bf16 single-pass MXU matmuls (f32 accumulation) vs fp32-HIGHEST reference -> relaxed tolerance
    assert jnp.allclose(out, ref, rtol=5e-2, atol=5e-2), (out, ref)

    print("KERNEL_OK")
</pallas_src>

<mosaic_0001>
module attributes {stable_mosaic.version = 11 : i64} {
  func.func @idmpnn_kernel(%arg0: i32, %arg1: i32, %arg2: memref<1x144x8xbf16, #tpu.memory_space<vmem>>, %arg3: memref<1x6x24x24xbf16, #tpu.memory_space<vmem>>, %arg4: memref<1x36x144xbf16, #tpu.memory_space<vmem>>, %arg5: memref<1x1x6xbf16, #tpu.memory_space<vmem>>, %arg6: memref<144x32xbf16, #tpu.memory_space<vmem>>, %arg7: memref<6x36xbf16, #tpu.memory_space<vmem>>, %arg8: memref<8x32xbf16, #tpu.memory_space<vmem>>, %arg9: memref<1x32xf32, #tpu.memory_space<vmem>>, %arg10: memref<2x32x32xbf16, #tpu.memory_space<vmem>>, %arg11: memref<2x1x32xf32, #tpu.memory_space<vmem>>, %arg12: memref<2x32x32xbf16, #tpu.memory_space<vmem>>, %arg13: memref<2x1x32xf32, #tpu.memory_space<vmem>>, %arg14: memref<2x1x32xf32, #tpu.memory_space<vmem>>, %arg15: memref<2x1x32xf32, #tpu.memory_space<vmem>>, %arg16: memref<32x32xbf16, #tpu.memory_space<vmem>>, %arg17: memref<1x32xf32, #tpu.memory_space<vmem>>, %arg18: memref<32x32xbf16, #tpu.memory_space<vmem>>, %arg19: memref<1x32xf32, #tpu.memory_space<vmem>>, %arg20: memref<32x8xbf16, #tpu.memory_space<vmem>>, %arg21: memref<1x8xf32, #tpu.memory_space<vmem>>, %arg22: memref<1x32xf32, #tpu.memory_space<vmem>>) attributes {dimension_semantics = [#tpu.dimension_semantics<parallel>, #tpu.dimension_semantics<arbitrary>], iteration_bounds = array<i64: 1, 1>, scalar_prefetch = 0 : i64, scratch_operands = 1 : i64, tpu.core_type = #tpu.core_type<tc>, window_params = [{transform_indices = @transform_0, window_bounds = array<i64: 1, 144, 8>}, {transform_indices = @transform_1, window_bounds = array<i64: 1, 6, 24, 24>}, {transform_indices = @transform_2, window_bounds = array<i64: 1, 36, 144>}, {transform_indices = @transform_3, window_bounds = array<i64: 1, 1, 6>}, {pipeline_mode = #tpu.pipeline_mode<synchronous>, transform_indices = @transform_4, window_bounds = array<i64: 144, 32>}, {pipeline_mode = #tpu.pipeline_mode<synchronous>, transform_indices = @transform_5, window_bounds = array<i64: 6, 36>}, {pipeline_mode = #tpu.pipeline_mode<synchronous>, transform_indices = @transform_6, window_bounds = array<i64: 8, 32>}, {pipeline_mode = #tpu.pipeline_mode<synchronous>, transform_indices = @transform_7, window_bounds = array<i64: 1, 32>}, {pipeline_mode = #tpu.pipeline_mode<synchronous>, transform_indices = @transform_8, window_bounds = array<i64: 2, 32, 32>}, {pipeline_mode = #tpu.pipeline_mode<synchronous>, transform_indices = @transform_9, window_bounds = array<i64: 2, 1, 32>}, {pipeline_mode = #tpu.pipeline_mode<synchronous>, transform_indices = @transform_10, window_bounds = array<i64: 2, 32, 32>}, {pipeline_mode = #tpu.pipeline_mode<synchronous>, transform_indices = @transform_11, window_bounds = array<i64: 2, 1, 32>}, {pipeline_mode = #tpu.pipeline_mode<synchronous>, transform_indices = @transform_12, window_bounds = array<i64: 2, 1, 32>}, {pipeline_mode = #tpu.pipeline_mode<synchronous>, transform_indices = @transform_13, window_bounds = array<i64: 2, 1, 32>}, {pipeline_mode = #tpu.pipeline_mode<synchronous>, transform_indices = @transform_14, window_bounds = array<i64: 32, 32>}, {pipeline_mode = #tpu.pipeline_mode<synchronous>, transform_indices = @transform_15, window_bounds = array<i64: 1, 32>}, {pipeline_mode = #tpu.pipeline_mode<synchronous>, transform_indices = @transform_16, window_bounds = array<i64: 32, 32>}, {pipeline_mode = #tpu.pipeline_mode<synchronous>, transform_indices = @transform_17, window_bounds = array<i64: 1, 32>}, {pipeline_mode = #tpu.pipeline_mode<synchronous>, transform_indices = @transform_18, window_bounds = array<i64: 32, 8>}, {transform_indices = @transform_19, window_bounds = array<i64: 1, 8>}]} {
    %c0_i32 = arith.constant 0 : i32
    %0 = arith.cmpi eq, %arg1, %c0_i32 : i32
    %1 = arith.extui %0 : i1 to i32
    %c0_i32_0 = arith.constant 0 : i32
    %2 = arith.cmpi ne, %1, %c0_i32_0 : i32
    scf.if %2 {
      %cst_98 = arith.constant 0.000000e+00 : f32
      %152 = vector.broadcast %cst_98 : f32 to vector<1x32xf32>
      %c0_99 = arith.constant 0 : index
      %c0_100 = arith.constant 0 : index
      %153 = vector.load %arg22[%c0_99, %c0_100] : memref<1x32xf32, #tpu.memory_space<vmem>>, vector<1x32xf32>
      tpu.vector_store %arg22[%c0_99, %c0_100], %152 {strides = array<i32>} : memref<1x32xf32, #tpu.memory_space<vmem>>, vector<1x32xf32>,
    } else {
    }
    %c0 = arith.constant 0 : index
    %c0_1 = arith.constant 0 : index
    %c0_2 = arith.constant 0 : index
    %3 = vector.load %arg2[%c0, %c0_1, %c0_2] : memref<1x144x8xbf16, #tpu.memory_space<vmem>>, vector<1x144x8xbf16>
    %4 = vector.shape_cast %3 : vector<1x144x8xbf16> to vector<144x8xbf16>
    %c0_3 = arith.constant 0 : index
    %c0_4 = arith.constant 0 : index
    %5 = vector.load %arg8[%c0_3, %c0_4] : memref<8x32xbf16, #tpu.memory_space<vmem>>, vector<8x32xbf16>
    %cst = arith.constant dense<0.000000e+00> : vector<144x32xf32>
    %6 = tpu.matmul %4, %5, %cst {dimension_numbers = #tpu.dot_dimension_numbers<[1], [0], [0], [1], [0, 0, 1, 1], [], []>} : vector<144x8xbf16>, vector<8x32xbf16>, vector<144x32xf32> -> vector<144x32xf32>
    %c0_5 = arith.constant 0 : index
    %c0_6 = arith.constant 0 : index
    %7 = vector.load %arg9[%c0_5, %c0_6] : memref<1x32xf32, #tpu.memory_space<vmem>>, vector<1x32xf32>
    %8 = vector.broadcast %7 : vector<1x32xf32> to vector<144x32xf32>
    %9 = arith.addf %6, %8 : vector<144x32xf32>
    %c0_7 = arith.constant 0 : index
    %c0_8 = arith.constant 0 : index
    %10 = vector.load %arg6[%c0_7, %c0_8] : memref<144x32xbf16, #tpu.memory_space<vmem>>, vector<144x32xbf16>
    %11 = arith.extf %10 : vector<144x32xbf16> to vector<144x32xf32>
    %12 = arith.mulf %9, %11 : vector<144x32xf32>
    %c0_9 = arith.constant 0 : index
    %c0_10 = arith.constant 0 : index
    %c0_11 = arith.constant 0 : index
    %c0_12 = arith.constant 0 : index
    %13 = vector.load %arg3[%c0_9, %c0_10, %c0_11, %c0_12] : memref<1x6x24x24xbf16, #tpu.memory_space<vmem>>, vector<1x6x24x24xbf16>
    %14 = vector.shape_cast %13 : vector<1x6x24x24xbf16> to vector<6x24x24xbf16>
    %15 = arith.truncf %12 : vector<144x32xf32> to vector<144x32xbf16>
    %16 = vector.shape_cast %15 : vector<144x32xbf16> to vector<6x24x32xbf16>
    "tpu.trace_start"() <{level = 10 : i32, message = "bij,bjd->bid"}> : () -> ()
    %cst_13 = arith.constant dense<0.000000e+00> : vector<6x24x32xf32>
    %17 = tpu.matmul %14, %16, %cst_13 {dimension_numbers = #tpu.dot_dimension_numbers<[2], [1], [1], [2], [0, 0, 0, 1, 1, 2], [0], [0]>} : vector<6x24x24xbf16>, vector<6x24x32xbf16>, vector<6x24x32xf32> -> vector<6x24x32xf32>
    "tpu.trace_stop"() : () -> ()
    %18 = vector.shape_cast %17 : vector<6x24x32xf32> to vector<144x32xf32>
    %c0_14 = arith.constant 0 : index
    %c0_15 = arith.constant 0 : index
    %c0_16 = arith.constant 0 : index
    %19 = vector.load %arg10[%c0_14, %c0_15, %c0_16] : memref<2x32x32xbf16, #tpu.memory_space<vmem>>, vector<1x32x32xbf16>
    %20 = vector.shape_cast %19 : vector<1x32x32xbf16> to vector<32x32xbf16>
    %21 = arith.truncf %18 : vector<144x32xf32> to vector<144x32xbf16>
    %cst_17 = arith.constant dense<0.000000e+00> : vector<144x32xf32>
    %22 = tpu.matmul %21, %20, %cst_17 {dimension_numbers = #tpu.dot_dimension_numbers<[1], [0], [0], [1], [0, 0, 1, 1], [], []>} : vector<144x32xbf16>, vector<32x32xbf16>, vector<144x32xf32> -> vector<144x32xf32>
    %c0_18 = arith.constant 0 : index
    %c0_19 = arith.constant 0 : index
    %c0_20 = arith.constant 0 : index
    %23 = vector.load %arg11[%c0_18, %c0_19, %c0_20] : memref<2x1x32xf32, #tpu.memory_space<vmem>>, vector<1x1x32xf32>
    %24 = vector.shape_cast %23 : vector<1x1x32xf32> to vector<1x32xf32>
    %25 = vector.broadcast %24 : vector<1x32xf32> to vector<144x32xf32>
    %26 = arith.addf %22, %25 : vector<144x32xf32>
    %cst_21 = arith.constant 0.000000e+00 : f32
    %27 = vector.broadcast %cst_21 : f32 to vector<144x32xf32>
    %28 = arith.maximumf %26, %27 : vector<144x32xf32>
    %c0_22 = arith.constant 0 : index
    %c0_23 = arith.constant 0 : index
    %c0_24 = arith.constant 0 : index
    %29 = vector.load %arg12[%c0_22, %c0_23, %c0_24] : memref<2x32x32xbf16, #tpu.memory_space<vmem>>, vector<1x32x32xbf16>
    %30 = vector.shape_cast %29 : vector<1x32x32xbf16> to vector<32x32xbf16>
    %31 = arith.truncf %28 : vector<144x32xf32> to vector<144x32xbf16>
    %cst_25 = arith.constant dense<0.000000e+00> : vector<144x32xf32>
    %32 = tpu.matmul %31, %30, %cst_25 {dimension_numbers = #tpu.dot_dimension_numbers<[1], [0], [0], [1], [0, 0, 1, 1], [], []>} : vector<144x32xbf16>, vector<32x32xbf16>, vector<144x32xf32> -> vector<144x32xf32>
    %c0_26 = arith.constant 0 : index
    %c0_27 = arith.constant 0 : index
    %c0_28 = arith.constant 0 : index
    %33 = vector.load %arg13[%c0_26, %c0_27, %c0_28] : memref<2x1x32xf32, #tpu.memory_space<vmem>>, vector<1x1x32xf32>
    %34 = vector.shape_cast %33 : vector<1x1x32xf32> to vector<1x32xf32>
    %35 = vector.broadcast %34 : vector<1x32xf32> to vector<144x32xf32>
    %36 = arith.addf %32, %35 : vector<144x32xf32>
    %cst_29 = arith.constant dense<0.000000e+00> : vector<144xf32>
    %37 = vector.multi_reduction <add>, %36, %cst_29 [1] : vector<144x32xf32> to vector<144xf32>
    %38 = vector.shape_cast %37 : vector<144xf32> to vector<144x1xf32>
    %cst_30 = arith.constant 3.200000e+01 : f32
    %39 = vector.broadcast %cst_30 : f32 to vector<144x1xf32>
    %40 = arith.divf %38, %39 : vector<144x1xf32>
    %41 = arith.mulf %36, %36 : vector<144x32xf32>
    %cst_31 = arith.constant dense<0.000000e+00> : vector<144xf32>
    %42 = vector.multi_reduction <add>, %41, %cst_31 [1] : vector<144x32xf32> to vector<144xf32>
    %43 = vector.shape_cast %42 : vector<144xf32> to vector<144x1xf32>
    %cst_32 = arith.constant 3.200000e+01 : f32
    %44 = vector.broadcast %cst_32 : f32 to vector<144x1xf32>
    %45 = arith.divf %43, %44 : vector<144x1xf32>
    %46 = arith.mulf %40, %40 : vector<144x1xf32>
    %47 = arith.subf %45, %46 : vector<144x1xf32>
    %48 = vector.broadcast %40 : vector<144x1xf32> to vector<144x32xf32>
    %49 = arith.subf %36, %48 : vector<144x32xf32>
    %cst_33 = arith.constant 9.99999974E-6 : f32
    %50 = vector.broadcast %cst_33 : f32 to vector<144x1xf32>
    %51 = arith.addf %47, %50 : vector<144x1xf32>
    %52 = math.rsqrt %51 : vector<144x1xf32>
    %53 = vector.broadcast %52 : vector<144x1xf32> to vector<144x32xf32>
    %54 = arith.mulf %49, %53 : vector<144x32xf32>
    %c0_34 = arith.constant 0 : index
    %c0_35 = arith.constant 0 : index
    %c0_36 = arith.constant 0 : index
    %55 = vector.load %arg14[%c0_34, %c0_35, %c0_36] : memref<2x1x32xf32, #tpu.memory_space<vmem>>, vector<1x1x32xf32>
    %56 = vector.shape_cast %55 : vector<1x1x32xf32> to vector<1x32xf32>
    %57 = vector.broadcast %56 : vector<1x32xf32> to vector<144x32xf32>
    %58 = arith.mulf %54, %57 : vector<144x32xf32>
    %c0_37 = arith.constant 0 : index
    %c0_38 = arith.constant 0 : index
    %c0_39 = arith.constant 0 : index
    %59 = vector.load %arg15[%c0_37, %c0_38, %c0_39] : memref<2x1x32xf32, #tpu.memory_space<vmem>>, vector<1x1x32xf32>
    %60 = vector.shape_cast %59 : vector<1x1x32xf32> to vector<1x32xf32>
    %61 = vector.broadcast %60 : vector<1x32xf32> to vector<144x32xf32>
    %62 = arith.addf %58, %61 : vector<144x32xf32>
    %cst_40 = arith.constant 0.000000e+00 : f32
    %63 = vector.broadcast %cst_40 : f32 to vector<144x32xf32>
    %64 = arith.maximumf %62, %63 : vector<144x32xf32>
    %65 = arith.addf %12, %64 : vector<144x32xf32>
    %66 = arith.truncf %65 : vector<144x32xf32> to vector<144x32xbf16>
    %67 = vector.shape_cast %66 : vector<144x32xbf16> to vector<6x24x32xbf16>
    "tpu.trace_start"() <{level = 10 : i32, message = "bij,bjd->bid"}> : () -> ()
    %cst_41 = arith.constant dense<0.000000e+00> : vector<6x24x32xf32>
    %68 = tpu.matmul %14, %67, %cst_41 {dimension_numbers = #tpu.dot_dimension_numbers<[2], [1], [1], [2], [0, 0, 0, 1, 1, 2], [0], [0]>} : vector<6x24x24xbf16>, vector<6x24x32xbf16>, vector<6x24x32xf32> -> vector<6x24x32xf32>
    "tpu.trace_stop"() : () -> ()
    %69 = vector.shape_cast %68 : vector<6x24x32xf32> to vector<144x32xf32>
    %c1 = arith.constant 1 : index
    %c0_42 = arith.constant 0 : index
    %c0_43 = arith.constant 0 : index
    %70 = vector.load %arg10[%c1, %c0_42, %c0_43] : memref<2x32x32xbf16, #tpu.memory_space<vmem>>, vector<1x32x32xbf16>
    %71 = vector.shape_cast %70 : vector<1x32x32xbf16> to vector<32x32xbf16>
    %72 = arith.truncf %69 : vector<144x32xf32> to vector<144x32xbf16>
    %cst_44 = arith.constant dense<0.000000e+00> : vector<144x32xf32>
    %73 = tpu.matmul %72, %71, %cst_44 {dimension_numbers = #tpu.dot_dimension_numbers<[1], [0], [0], [1], [0, 0, 1, 1], [], []>} : vector<144x32xbf16>, vector<32x32xbf16>, vector<144x32xf32> -> vector<144x32xf32>
    %c1_45 = arith.constant 1 : index
    %c0_46 = arith.constant 0 : index
    %c0_47 = arith.constant 0 : index
    %74 = vector.load %arg11[%c1_45, %c0_46, %c0_47] : memref<2x1x32xf32, #tpu.memory_space<vmem>>, vector<1x1x32xf32>
    %75 = vector.shape_cast %74 : vector<1x1x32xf32> to vector<1x32xf32>
    %76 = vector.broadcast %75 : vector<1x32xf32> to vector<144x32xf32>
    %77 = arith.addf %73, %76 : vector<144x32xf32>
    %cst_48 = arith.constant 0.000000e+00 : f32
    %78 = vector.broadcast %cst_48 : f32 to vector<144x32xf32>
    %79 = arith.maximumf %77, %78 : vector<144x32xf32>
    %c1_49 = arith.constant 1 : index
    %c0_50 = arith.constant 0 : index
    %c0_51 = arith.constant 0 : index
    %80 = vector.load %arg12[%c1_49, %c0_50, %c0_51] : memref<2x32x32xbf16, #tpu.memory_space<vmem>>, vector<1x32x32xbf16>
    %81 = vector.shape_cast %80 : vector<1x32x32xbf16> to vector<32x32xbf16>
    %82 = arith.truncf %79 : vector<144x32xf32> to vector<144x32xbf16>
    %cst_52 = arith.constant dense<0.000000e+00> : vector<144x32xf32>
    %83 = tpu.matmul %82, %81, %cst_52 {dimension_numbers = #tpu.dot_dimension_numbers<[1], [0], [0], [1], [0, 0, 1, 1], [], []>} : vector<144x32xbf16>, vector<32x32xbf16>, vector<144x32xf32> -> vector<144x32xf32>
    %c1_53 = arith.constant 1 : index
    %c0_54 = arith.constant 0 : index
    %c0_55 = arith.constant 0 : index
    %84 = vector.load %arg13[%c1_53, %c0_54, %c0_55] : memref<2x1x32xf32, #tpu.memory_space<vmem>>, vector<1x1x32xf32>
    %85 = vector.shape_cast %84 : vector<1x1x32xf32> to vector<1x32xf32>
    %86 = vector.broadcast %85 : vector<1x32xf32> to vector<144x32xf32>
    %87 = arith.addf %83, %86 : vector<144x32xf32>
    %cst_56 = arith.constant dense<0.000000e+00> : vector<144xf32>
    %88 = vector.multi_reduction <add>, %87, %cst_56 [1] : vector<144x32xf32> to vector<144xf32>
    %89 = vector.shape_cast %88 : vector<144xf32> to vector<144x1xf32>
    %cst_57 = arith.constant 3.200000e+01 : f32
    %90 = vector.broadcast %cst_57 : f32 to vector<144x1xf32>
    %91 = arith.divf %89, %90 : vector<144x1xf32>
    %92 = arith.mulf %87, %87 : vector<144x32xf32>
    %cst_58 = arith.constant dense<0.000000e+00> : vector<144xf32>
    %93 = vector.multi_reduction <add>, %92, %cst_58 [1] : vector<144x32xf32> to vector<144xf32>
    %94 = vector.shape_cast %93 : vector<144xf32> to vector<144x1xf32>
    %cst_59 = arith.constant 3.200000e+01 : f32
    %95 = vector.broadcast %cst_59 : f32 to vector<144x1xf32>
    %96 = arith.divf %94, %95 : vector<144x1xf32>
    %97 = arith.mulf %91, %91 : vector<144x1xf32>
    %98 = arith.subf %96, %97 : vector<144x1xf32>
    %99 = vector.broadcast %91 : vector<144x1xf32> to vector<144x32xf32>
    %100 = arith.subf %87, %99 : vector<144x32xf32>
    %cst_60 = arith.constant 9.99999974E-6 : f32
    %101 = vector.broadcast %cst_60 : f32 to vector<144x1xf32>
    %102 = arith.addf %98, %101 : vector<144x1xf32>
    %103 = math.rsqrt %102 : vector<144x1xf32>
    %104 = vector.broadcast %103 : vector<144x1xf32> to vector<144x32xf32>
    %105 = arith.mulf %100, %104 : vector<144x32xf32>
    %c1_61 = arith.constant 1 : index
    %c0_62 = arith.constant 0 : index
    %c0_63 = arith.constant 0 : index
    %106 = vector.load %arg14[%c1_61, %c0_62, %c0_63] : memref<2x1x32xf32, #tpu.memory_space<vmem>>, vector<1x1x32xf32>
    %107 = vector.shape_cast %106 : vector<1x1x32xf32> to vector<1x32xf32>
    %108 = vector.broadcast %107 : vector<1x32xf32> to vector<144x32xf32>
    %109 = arith.mulf %105, %108 : vector<144x32xf32>
    %c1_64 = arith.constant 1 : index
    %c0_65 = arith.constant 0 : index
    %c0_66 = arith.constant 0 : index
    %110 = vector.load %arg15[%c1_64, %c0_65, %c0_66] : memref<2x1x32xf32, #tpu.memory_space<vmem>>, vector<1x1x32xf32>
    %111 = vector.shape_cast %110 : vector<1x1x32xf32> to vector<1x32xf32>
    %112 = vector.broadcast %111 : vector<1x32xf32> to vector<144x32xf32>
    %113 = arith.addf %109, %112 : vector<144x32xf32>
    %cst_67 = arith.constant 0.000000e+00 : f32
    %114 = vector.broadcast %cst_67 : f32 to vector<144x32xf32>
    %115 = arith.maximumf %113, %114 : vector<144x32xf32>
    %116 = arith.addf %65, %115 : vector<144x32xf32>
    %c0_68 = arith.constant 0 : index
    %c0_69 = arith.constant 0 : index
    %c0_70 = arith.constant 0 : index
    %117 = vector.load %arg4[%c0_68, %c0_69, %c0_70] : memref<1x36x144xbf16, #tpu.memory_space<vmem>>, vector<1x36x144xbf16>
    %118 = vector.shape_cast %117 : vector<1x36x144xbf16> to vector<36x144xbf16>
    %119 = arith.truncf %116 : vector<144x32xf32> to vector<144x32xbf16>
    %cst_71 = arith.constant dense<0.000000e+00> : vector<36x32xf32>
    %120 = tpu.matmul %118, %119, %cst_71 {dimension_numbers = #tpu.dot_dimension_numbers<[1], [0], [0], [1], [0, 0, 1, 1], [], []>} : vector<36x144xbf16>, vector<144x32xbf16>, vector<36x32xf32> -> vector<36x32xf32>
    %c0_72 = arith.constant 0 : index
    %c0_73 = arith.constant 0 : index
    %121 = vector.load %arg16[%c0_72, %c0_73] : memref<32x32xbf16, #tpu.memory_space<vmem>>, vector<32x32xbf16>
    %122 = arith.truncf %120 : vector<36x32xf32> to vector<36x32xbf16>
    %cst_74 = arith.constant dense<0.000000e+00> : vector<36x32xf32>
    %123 = tpu.matmul %122, %121, %cst_74 {dimension_numbers = #tpu.dot_dimension_numbers<[1], [0], [0], [1], [0, 0, 1, 1], [], []>} : vector<36x32xbf16>, vector<32x32xbf16>, vector<36x32xf32> -> vector<36x32xf32>
    %c0_75 = arith.constant 0 : index
    %c0_76 = arith.constant 0 : index
    %124 = vector.load %arg17[%c0_75, %c0_76] : memref<1x32xf32, #tpu.memory_space<vmem>>, vector<1x32xf32>
    %125 = vector.broadcast %124 : vector<1x32xf32> to vector<36x32xf32>
    %126 = arith.addf %123, %125 : vector<36x32xf32>
    %cst_77 = arith.constant 0.000000e+00 : f32
    %127 = vector.broadcast %cst_77 : f32 to vector<36x32xf32>
    %128 = arith.maximumf %126, %127 : vector<36x32xf32>
    %c0_78 = arith.constant 0 : index
    %c0_79 = arith.constant 0 : index
    %129 = vector.load %arg7[%c0_78, %c0_79] : memref<6x36xbf16, #tpu.memory_space<vmem>>, vector<6x36xbf16>
    %130 = arith.truncf %128 : vector<36x32xf32> to vector<36x32xbf16>
    %cst_80 = arith.constant dense<0.000000e+00> : vector<6x32xf32>
    %131 = tpu.matmul %129, %130, %cst_80 {dimension_numbers = #tpu.dot_dimension_numbers<[1], [0], [0], [1], [0, 0, 1, 1], [], []>} : vector<6x36xbf16>, vector<36x32xbf16>, vector<6x32xf32> -> vector<6x32xf32>
    %cst_81 = arith.constant 0.166666672 : f32
    %132 = vector.broadcast %cst_81 : f32 to vector<6x32xf32>
    %133 = arith.mulf %131, %132 : vector<6x32xf32>
    %c0_82 = arith.constant 0 : index
    %c0_83 = arith.constant 0 : index
    %134 = vector.load %arg18[%c0_82, %c0_83] : memref<32x32xbf16, #tpu.memory_space<vmem>>, vector<32x32xbf16>
    %135 = arith.truncf %133 : vector<6x32xf32> to vector<6x32xbf16>
    %cst_84 = arith.constant dense<0.000000e+00> : vector<6x32xf32>
    %136 = tpu.matmul %135, %134, %cst_84 {dimension_numbers = #tpu.dot_dimension_numbers<[1], [0], [0], [1], [0, 0, 1, 1], [], []>} : vector<6x32xbf16>, vector<32x32xbf16>, vector<6x32xf32> -> vector<6x32xf32>
    %c0_85 = arith.constant 0 : index
    %c0_86 = arith.constant 0 : index
    %137 = vector.load %arg19[%c0_85, %c0_86] : memref<1x32xf32, #tpu.memory_space<vmem>>, vector<1x32xf32>
    %138 = vector.broadcast %137 : vector<1x32xf32> to vector<6x32xf32>
    %139 = arith.addf %136, %138 : vector<6x32xf32>
    %cst_87 = arith.constant 0.000000e+00 : f32
    %140 = vector.broadcast %cst_87 : f32 to vector<6x32xf32>
    %141 = arith.maximumf %139, %140 : vector<6x32xf32>
    %c0_88 = arith.constant 0 : index
    %c0_89 = arith.constant 0 : index
    %142 = vector.load %arg22[%c0_88, %c0_89] : memref<1x32xf32, #tpu.memory_space<vmem>>, vector<1x32xf32>
    %c0_90 = arith.constant 0 : index
    %c0_91 = arith.constant 0 : index
    %c0_92 = arith.constant 0 : index
    %143 = vector.load %arg5[%c0_90, %c0_91, %c0_92] : memref<1x1x6xbf16, #tpu.memory_space<vmem>>, vector<1x1x6xbf16>
    %144 = vector.shape_cast %143 : vector<1x1x6xbf16> to vector<1x6xbf16>
    %145 = arith.truncf %141 : vector<6x32xf32> to vector<6x32xbf16>
    %cst_93 = arith.constant dense<0.000000e+00> : vector<1x32xf32>
    %146 = tpu.matmul %144, %145, %cst_93 {dimension_numbers = #tpu.dot_dimension_numbers<[1], [0], [0], [1], [0, 0, 1, 1], [], []>} : vector<1x6xbf16>, vector<6x32xbf16>, vector<1x32xf32> -> vector<1x32xf32>
    %147 = arith.addf %142, %146 : vector<1x32xf32>
    %c0_94 = arith.constant 0 : index
    %c0_95 = arith.constant 0 : index
    %148 = vector.load %arg22[%c0_94, %c0_95] : memref<1x32xf32, #tpu.memory_space<vmem>>, vector<1x32xf32>
    tpu.vector_store %arg22[%c0_94, %c0_95], %147 {strides = array<i32>} : memref<1x32xf32, #tpu.memory_space<vmem>>, vector<1x32xf32>,
    %c0_i32_96 = arith.constant 0 : i32
    %149 = arith.cmpi eq, %arg1, %c0_i32_96 : i32
    %150 = arith.extui %149 : i1 to i32
    %c0_i32_97 = arith.constant 0 : i32
    %151 = arith.cmpi ne, %150, %c0_i32_97 : i32
    scf.if %151 {
      %c0_98 = arith.constant 0 : index
      %c0_99 = arith.constant 0 : index
      %152 = vector.load %arg22[%c0_98, %c0_99] : memref<1x32xf32, #tpu.memory_space<vmem>>, vector<1x32xf32>
      %c0_100 = arith.constant 0 : index
      %c0_101 = arith.constant 0 : index
      %153 = vector.load %arg20[%c0_100, %c0_101] : memref<32x8xbf16, #tpu.memory_space<vmem>>, vector<32x8xbf16>
      %154 = arith.truncf %152 : vector<1x32xf32> to vector<1x32xbf16>
      %cst_102 = arith.constant dense<0.000000e+00> : vector<1x8xf32>
      %155 = tpu.matmul %154, %153, %cst_102 {dimension_numbers = #tpu.dot_dimension_numbers<[1], [0], [0], [1], [0, 0, 1, 1], [], []>} : vector<1x32xbf16>, vector<32x8xbf16>, vector<1x8xf32> -> vector<1x8xf32>
      %c0_103 = arith.constant 0 : index
      %c0_104 = arith.constant 0 : index
      %156 = vector.load %arg21[%c0_103, %c0_104] : memref<1x8xf32, #tpu.memory_space<vmem>>, vector<1x8xf32>
      tpu.vector_store %arg21[%c0_103, %c0_104], %155 {strides = array<i32>} : memref<1x8xf32, #tpu.memory_space<vmem>>, vector<1x8xf32>,
    } else {
    }
    return
  }
  func.func @transform_0(%arg0: i32, %arg1: i32) -> (i32, i32, i32) {
    %c1_i32 = arith.constant 1 : i32
    %0 = arith.muli %arg0, %c1_i32 : i32
    %1 = arith.addi %0, %arg1 : i32
    %c0_i32 = arith.constant 0 : i32
    %c0_i32_0 = arith.constant 0 : i32
    %c0_i32_1 = arith.constant 0 : i32
    return %1, %c0_i32, %c0_i32_0 : i32, i32, i32
  }
  func.func @transform_1(%arg0: i32, %arg1: i32) -> (i32, i32, i32, i32) {
    %c1_i32 = arith.constant 1 : i32
    %0 = arith.muli %arg0, %c1_i32 : i32
    %1 = arith.addi %0, %arg1 : i32
    %c0_i32 = arith.constant 0 : i32
    %c0_i32_0 = arith.constant 0 : i32
    %c0_i32_1 = arith.constant 0 : i32
    %c0_i32_2 = arith.constant 0 : i32
    return %1, %c0_i32, %c0_i32_0, %c0_i32_1 : i32, i32, i32, i32
  }
  func.func @transform_2(%arg0: i32, %arg1: i32) -> (i32, i32, i32) {
    %c1_i32 = arith.constant 1 : i32
    %0 = arith.muli %arg0, %c1_i32 : i32
    %1 = arith.addi %0, %arg1 : i32
    %c0_i32 = arith.constant 0 : i32
    %c0_i32_0 = arith.constant 0 : i32
    %c0_i32_1 = arith.constant 0 : i32
    return %1, %c0_i32, %c0_i32_0 : i32, i32, i32
  }
  func.func @transform_3(%arg0: i32, %arg1: i32) -> (i32, i32, i32) {
    %c1_i32 = arith.constant 1 : i32
    %0 = arith.muli %arg0, %c1_i32 : i32
    %1 = arith.addi %0, %arg1 : i32
    %c0_i32 = arith.constant 0 : i32
    %c0_i32_0 = arith.constant 0 : i32
    %c0_i32_1 = arith.constant 0 : i32
    return %1, %c0_i32, %c0_i32_0 : i32, i32, i32
  }
  func.func @transform_4(%arg0: i32, %arg1: i32) -> (i32, i32) {
    %c0_i32 = arith.constant 0 : i32
    %c0_i32_0 = arith.constant 0 : i32
    %c0_i32_1 = arith.constant 0 : i32
    return %c0_i32, %c0_i32_0 : i32, i32
  }
  func.func @transform_5(%arg0: i32, %arg1: i32) -> (i32, i32) {
    %c0_i32 = arith.constant 0 : i32
    %c0_i32_0 = arith.constant 0 : i32
    %c0_i32_1 = arith.constant 0 : i32
    return %c0_i32, %c0_i32_0 : i32, i32
  }
  func.func @transform_6(%arg0: i32, %arg1: i32) -> (i32, i32) {
    %c0_i32 = arith.constant 0 : i32
    %c0_i32_0 = arith.constant 0 : i32
    %c0_i32_1 = arith.constant 0 : i32
    return %c0_i32, %c0_i32_0 : i32, i32
  }
  func.func @transform_7(%arg0: i32, %arg1: i32) -> (i32, i32) {
    %c0_i32 = arith.constant 0 : i32
    %c0_i32_0 = arith.constant 0 : i32
    %c0_i32_1 = arith.constant 0 : i32
    return %c0_i32, %c0_i32_0 : i32, i32
  }
  func.func @transform_8(%arg0: i32, %arg1: i32) -> (i32, i32, i32) {
    %c0_i32 = arith.constant 0 : i32
    %c0_i32_0 = arith.constant 0 : i32
    %c0_i32_1 = arith.constant 0 : i32
    %c0_i32_2 = arith.constant 0 : i32
    return %c0_i32, %c0_i32_0, %c0_i32_1 : i32, i32, i32
  }
  func.func @transform_9(%arg0: i32, %arg1: i32) -> (i32, i32, i32) {
    %c0_i32 = arith.constant 0 : i32
    %c0_i32_0 = arith.constant 0 : i32
    %c0_i32_1 = arith.constant 0 : i32
    %c0_i32_2 = arith.constant 0 : i32
    return %c0_i32, %c0_i32_0, %c0_i32_1 : i32, i32, i32
  }
  func.func @transform_10(%arg0: i32, %arg1: i32) -> (i32, i32, i32) {
    %c0_i32 = arith.constant 0 : i32
    %c0_i32_0 = arith.constant 0 : i32
    %c0_i32_1 = arith.constant 0 : i32
    %c0_i32_2 = arith.constant 0 : i32
    return %c0_i32, %c0_i32_0, %c0_i32_1 : i32, i32, i32
  }
  func.func @transform_11(%arg0: i32, %arg1: i32) -> (i32, i32, i32) {
    %c0_i32 = arith.constant 0 : i32
    %c0_i32_0 = arith.constant 0 : i32
    %c0_i32_1 = arith.constant 0 : i32
    %c0_i32_2 = arith.constant 0 : i32
    return %c0_i32, %c0_i32_0, %c0_i32_1 : i32, i32, i32
  }
  func.func @transform_12(%arg0: i32, %arg1: i32) -> (i32, i32, i32) {
    %c0_i32 = arith.constant 0 : i32
    %c0_i32_0 = arith.constant 0 : i32
    %c0_i32_1 = arith.constant 0 : i32
    %c0_i32_2 = arith.constant 0 : i32
    return %c0_i32, %c0_i32_0, %c0_i32_1 : i32, i32, i32
  }
  func.func @transform_13(%arg0: i32, %arg1: i32) -> (i32, i32, i32) {
    %c0_i32 = arith.constant 0 : i32
    %c0_i32_0 = arith.constant 0 : i32
    %c0_i32_1 = arith.constant 0 : i32
    %c0_i32_2 = arith.constant 0 : i32
    return %c0_i32, %c0_i32_0, %c0_i32_1 : i32, i32, i32
  }
  func.func @transform_14(%arg0: i32, %arg1: i32) -> (i32, i32) {
    %c0_i32 = arith.constant 0 : i32
    %c0_i32_0 = arith.constant 0 : i32
    %c0_i32_1 = arith.constant 0 : i32
    return %c0_i32, %c0_i32_0 : i32, i32
  }
  func.func @transform_15(%arg0: i32, %arg1: i32) -> (i32, i32) {
    %c0_i32 = arith.constant 0 : i32
    %c0_i32_0 = arith.constant 0 : i32
    %c0_i32_1 = arith.constant 0 : i32
    return %c0_i32, %c0_i32_0 : i32, i32
  }
  func.func @transform_16(%arg0: i32, %arg1: i32) -> (i32, i32) {
    %c0_i32 = arith.constant 0 : i32
    %c0_i32_0 = arith.constant 0 : i32
    %c0_i32_1 = arith.constant 0 : i32
    return %c0_i32, %c0_i32_0 : i32, i32
  }
  func.func @transform_17(%arg0: i32, %arg1: i32) -> (i32, i32) {
    %c0_i32 = arith.constant 0 : i32
    %c0_i32_0 = arith.constant 0 : i32
    %c0_i32_1 = arith.constant 0 : i32
    return %c0_i32, %c0_i32_0 : i32, i32
  }
  func.func @transform_18(%arg0: i32, %arg1: i32) -> (i32, i32) {
    %c0_i32 = arith.constant 0 : i32
    %c0_i32_0 = arith.constant 0 : i32
    %c0_i32_1 = arith.constant 0 : i32
    return %c0_i32, %c0_i32_0 : i32, i32
  }
  func.func @transform_19(%arg0: i32, %arg1: i32) -> (i32, i32) {
    %c0_i32 = arith.constant 0 : i32
    %c0_i32_0 = arith.constant 0 : i32
    return %arg0, %c0_i32 : i32, i32
  }
}

</mosaic_0001>

<llo_original>
// kernel: tpu_custom_call.1
$region0: #{tpu_custom_call.1}
  #allocation0 [shape = 'u32[]', space=smem, size = 0x4, offset = 0x4, fixed_abs, tag = 'smem constant byte address 0x4 - core index']
  #allocation1 [shape = 'u32[144,128]{1,0:T(1,128)}', space=vmem, size = 0x12000, scoped, tag = 'internal scratch']
  #allocation2 [shape = 'f32[1,32]{1,0:T(1,128)}', space=vmem, size = 0x200, scoped, tag = 'scratch operand']
  %s0 = inlined_call_operand.vmem [shape: bf16[1,144,8], index: 0, kind: input, shape index: {}]
  %s1 = inlined_call_operand.vmem [shape: bf16[1,6,24,24], index: 1, kind: input, shape index: {}]
  %s2 = inlined_call_operand.vmem [shape: bf16[1,36,144], index: 2, kind: input, shape index: {}]
  %s3 = inlined_call_operand.vmem [shape: bf16[1,1,6], index: 3, kind: input, shape index: {}]
  %s4 = inlined_call_operand.vmem [shape: bf16[144,32], index: 4, kind: input, shape index: {}]
  %s5 = inlined_call_operand.hbm [shape: bf16[6,36], index: 5, kind: input, shape index: {}]
  %s6 = inlined_call_operand.hbm [shape: bf16[8,32], index: 6, kind: input, shape index: {}]
  %s7 = inlined_call_operand.hbm [shape: f32[1,32], index: 7, kind: input, shape index: {}]
  %s8 = inlined_call_operand.vmem [shape: bf16[2,32,32], index: 8, kind: input, shape index: {}]
  %s9 = inlined_call_operand.hbm [shape: f32[2,1,32], index: 9, kind: input, shape index: {}]
  %s10 = inlined_call_operand.vmem [shape: bf16[2,32,32], index: 10, kind: input, shape index: {}]
  %s11 = inlined_call_operand.hbm [shape: f32[2,1,32], index: 11, kind: input, shape index: {}]
  %s12 = inlined_call_operand.vmem [shape: f32[2,1,32], index: 12, kind: input, shape index: {}]
  %s13 = inlined_call_operand.vmem [shape: f32[2,1,32], index: 13, kind: input, shape index: {}]
  %s14 = inlined_call_operand.vmem [shape: bf16[32,32], index: 14, kind: input, shape index: {}]
  %s15 = inlined_call_operand.vmem [shape: f32[1,32], index: 15, kind: input, shape index: {}]
  %s16 = inlined_call_operand.vmem [shape: bf16[32,32], index: 16, kind: input, shape index: {}]
  %s17 = inlined_call_operand.vmem [shape: f32[1,32], index: 17, kind: input, shape index: {}]
  %s18 = inlined_call_operand.vmem [shape: bf16[32,8], index: 18, kind: input, shape index: {}]
  %s19 = inlined_call_operand.hbm [shape: f32[1,8], index: 19, kind: output, shape index: {}]
  %s20 = sld [smem:[#allocation0]]
  $region114: #{tpu_custom_call.1} parent=0
    _
  %s22 = ssub.s32 1, %s20
  %s23 = scalar_select 0, %s22, %s20
  $region1: #{tpu_custom_call.1} parent=0
    #allocation3 [shape = 'u8[2048]{0}', space=vmem, size = 0x800, scoped, tag = 'input window, operand 5, single buffered']
    #allocation4 [shape = 's32[1]{0}', space=sflag, size = 0x4, scoped, tag = 'scoped memory for tpu_custom_call.1']
    #allocation5 [shape = 's32[1]{0}', space=sflag, size = 0x4, scoped, tag = 'scoped memory for tpu_custom_call.1']
    #allocation6 [shape = 'u8[2048]{0}', space=vmem, size = 0x800, scoped, tag = 'input window, operand 6, single buffered']
    #allocation7 [shape = 's32[1]{0}', space=sflag, size = 0x4, scoped, tag = 'scoped memory for tpu_custom_call.1']
    #allocation8 [shape = 'u8[512]{0}', space=vmem, size = 0x400, scoped, tag = 'input window, operand 7, single buffered']
    #allocation9 [shape = 'u8[1024]{0}', space=vmem, size = 0x400, scoped, tag = 'input window, operand 9, single buffered']
    #allocation10 [shape = 's32[1]{0}', space=sflag, size = 0x4, scoped, tag = 'scoped memory for tpu_custom_call.1']
    #allocation11 [shape = 'u8[1024]{0}', space=vmem, size = 0x400, scoped, tag = 'input window, operand 11, single buffered']
    #allocation12 [shape = 'u8[512]{0}', space=vmem, size = 0x400, scoped, tag = 'output window, operand 0, single buffered']
    %24 = vsyncpa [#allocation4], 0
    %25 = vsyncpa [#allocation7], 0
    %26 = vsyncpa [#allocation10], 0
    %27 = vsyncpa [#allocation5], 0
    // Predicated region
    $region2: #{tpu_custom_call.1} parent=1 // pred_check
      _
    $region3: #{tpu_custom_call.1} parent=1 // pred_check_branch
      %29 = sbr.rel (0) target = $region5
    $region4: #{tpu_custom_call.1} parent=1 // pred_region
      %s30 = sadd.s32 0, 0
      %p31 = scmp.lt.s32.totalorder %s30, 0
      %s32 = scalar_select %p31, %s30, 0
      %s33 = smul.addr %s32, 18
      %s34 = smul.addr %s33, 4
      %s35 = scalar_lea.vmem %s0, %s34
      %s36 = sadd.s32 0, 0
    $region5: #{tpu_custom_call.1} parent=1 // pred_fallthru
      _
    // Predicated region
    $region6: #{tpu_custom_call.1} parent=1 // pred_check
      _
    $region7: #{tpu_custom_call.1} parent=1 // pred_check_branch
      %38 = sbr.rel (0) target = $region9
    $region8: #{tpu_custom_call.1} parent=1 // pred_region
      %s39 = sadd.s32 0, 0
      %p40 = scmp.lt.s32.totalorder %s39, 0
      %s41 = scalar_select %p40, %s39, 0
      %s42 = smul.addr %s41, 18
      %s43 = smul.addr %s42, 4
      %s44 = scalar_lea.vmem %s1, %s43
      %s45 = sadd.s32 0, 0
    $region9: #{tpu_custom_call.1} parent=1 // pred_fallthru
      _
    // Predicated region
    $region10: #{tpu_custom_call.1} parent=1 // pred_check
      _
    $region11: #{tpu_custom_call.1} parent=1 // pred_check_branch
      %47 = sbr.rel (0) target = $region13
    $region12: #{tpu_custom_call.1} parent=1 // pred_region
      %s48 = sadd.s32 0, 0
      %p49 = scmp.lt.s32.totalorder %s48, 0
      %s50 = scalar_select %p49, %s48, 0
      %s51 = smul.addr %s50, 10
      %s52 = smul.addr %s51, 4
      %s53 = scalar_lea.vmem %s2, %s52
      %s54 = sadd.s32 0, 0
    $region13: #{tpu_custom_call.1} parent=1 // pred_fallthru
      _
    // Predicated region
    $region14: #{tpu_custom_call.1} parent=1 // pred_check
      _
    $region15: #{tpu_custom_call.1} parent=1 // pred_check_branch
      %56 = sbr.rel (0) target = $region17
    $region16: #{tpu_custom_call.1} parent=1 // pred_region
      %s57 = sadd.s32 0, 0
      %p58 = scmp.lt.s32.totalorder %s57, 0
      %s59 = scalar_select %p58, %s57, 0
      %s60 = scalar_lea.vmem %s3, %s59
      %s61 = sadd.s32 0, 0
    $region17: #{tpu_custom_call.1} parent=1 // pred_fallthru
      _
    // Predicated region
    $region18: #{tpu_custom_call.1} parent=1 // pred_check
      _
    $region19: #{tpu_custom_call.1} parent=1 // pred_check_branch
      %63 = sbr.rel (0) target = $region21
    $region20: #{tpu_custom_call.1} parent=1 // pred_region
      _
    $region21: #{tpu_custom_call.1} parent=1 // pred_fallthru
      _
    // Predicated region
    $region22: #{tpu_custom_call.1} parent=1 // pred_check
      _
    $region23: #{tpu_custom_call.1} parent=1 // pred_check_branch
      %65 = sbr.rel (0) target = $region25
    $region24: #{tpu_custom_call.1} parent=1 // pred_region
      %s67 = ssub.s32 64, 64
      %68 = vsyncadd [#allocation4], %s67
      %s70 = sshll.u32 [#allocation3], 4
      %s71 = int_to_ptr.vmem [resolvable:$true] %s70
      %73 = dma.hbm_to_vmem [thread:$0]  %s5, 64, %s71, [#allocation4]
    $region25: #{tpu_custom_call.1} parent=1 // pred_fallthru
      _
    // Predicated region
    $region26: #{tpu_custom_call.1} parent=1 // pred_check
      _
    $region27: #{tpu_custom_call.1} parent=1 // pred_check_branch
      %75 = sbr.rel (0) target = $region29
    $region28: #{tpu_custom_call.1} parent=1 // pred_region
      %s77 = ssub.s32 64, 64
      %78 = vsyncadd [#allocation7], %s77
      %s80 = sshll.u32 [#allocation6], 4
      %s81 = int_to_ptr.vmem [resolvable:$true] %s80
      %83 = dma.hbm_to_vmem [thread:$0]  %s6, 64, %s81, [#allocation7]
    $region29: #{tpu_custom_call.1} parent=1 // pred_fallthru
      _
    // Predicated region
    $region30: #{tpu_custom_call.1} parent=1 // pred_check
      _
    $region31: #{tpu_custom_call.1} parent=1 // pred_check_branch
      %85 = sbr.rel (0) target = $region33
    $region32: #{tpu_custom_call.1} parent=1 // pred_region
      %s87 = ssub.s32 16, 16
      %88 = vsyncadd [#allocation7], %s87
      %s90 = sshll.u32 [#allocation8], 4
      %s91 = int_to_ptr.vmem [resolvable:$true] %s90
      %93 = dma.hbm_to_vmem [thread:$0]  %s7, 16, %s91, [#allocation7]
    $region33: #{tpu_custom_call.1} parent=1 // pred_fallthru
      _
    // Predicated region
    $region34: #{tpu_custom_call.1} parent=1 // pred_check
      _
    $region35: #{tpu_custom_call.1} parent=1 // pred_check_branch
      %95 = sbr.rel (0) target = $region37
    $region36: #{tpu_custom_call.1} parent=1 // pred_region
      _
    $region37: #{tpu_custom_call.1} parent=1 // pred_fallthru
      _
    // Predicated region
    $region38: #{tpu_custom_call.1} parent=1 // pred_check
      _
    $region39: #{tpu_custom_call.1} parent=1 // pred_check_branch
      %97 = sbr.rel (0) target = $region41
    $region40: #{tpu_custom_call.1} parent=1 // pred_region
      %s99 = ssub.s32 32, 32
      %100 = vsyncadd [#allocation10], %s99
      %s101 = sshll.u32 [#allocation9], 4
      %s102 = int_to_ptr.vmem [resolvable:$true] %s101
      %107 = dma.hbm_to_vmem [thread:$0]  %s9, 32, %s102, [#allocation10], 16, 16, 1
    $region41: #{tpu_custom_call.1} parent=1 // pred_fallthru
      _
    // Predicated region
    $region42: #{tpu_custom_call.1} parent=1 // pred_check
      _
    $region43: #{tpu_custom_call.1} parent=1 // pred_check_branch
      %109 = sbr.rel (0) target = $region45
    $region44: #{tpu_custom_call.1} parent=1 // pred_region
      _
    $region45: #{tpu_custom_call.1} parent=1 // pred_fallthru
      _
    // Predicated region
    $region46: #{tpu_custom_call.1} parent=1 // pred_check
      _
    $region47: #{tpu_custom_call.1} parent=1 // pred_check_branch
      %111 = sbr.rel (0) target = $region49
    $region48: #{tpu_custom_call.1} parent=1 // pred_region
      %s113 = ssub.s32 32, 32
      %114 = vsyncadd [#allocation10], %s113
      %s115 = sshll.u32 [#allocation11], 4
      %s116 = int_to_ptr.vmem [resolvable:$true] %s115
      %121 = dma.hbm_to_vmem [thread:$0]  %s11, 32, %s116, [#allocation10], 16, 16, 1
    $region49: #{tpu_custom_call.1} parent=1 // pred_fallthru
      _
    // Predicated region
    $region50: #{tpu_custom_call.1} parent=1 // pred_check
      _
    $region51: #{tpu_custom_call.1} parent=1 // pred_check_branch
      %123 = sbr.rel (0) target = $region53
    $region52: #{tpu_custom_call.1} parent=1 // pred_region
      _
    $region53: #{tpu_custom_call.1} parent=1 // pred_fallthru
      _
    // Predicated region
    $region54: #{tpu_custom_call.1} parent=1 // pred_check
      _
    $region55: #{tpu_custom_call.1} parent=1 // pred_check_branch
      %125 = sbr.rel (0) target = $region57
    $region56: #{tpu_custom_call.1} parent=1 // pred_region
      _
    $region57: #{tpu_custom_call.1} parent=1 // pred_fallthru
      _
    // Predicated region
    $region58: #{tpu_custom_call.1} parent=1 // pred_check
      _
    $region59: #{tpu_custom_call.1} parent=1 // pred_check_branch
      %127 = sbr.rel (0) target = $region61
    $region60: #{tpu_custom_call.1} parent=1 // pred_region
      _
    $region61: #{tpu_custom_call.1} parent=1 // pred_fallthru
      _
    // Predicated region
    $region62: #{tpu_custom_call.1} parent=1 // pred_check
      _
    $region63: #{tpu_custom_call.1} parent=1 // pred_check_branch
      %129 = sbr.rel (0) target = $region65
    $region64: #{tpu_custom_call.1} parent=1 // pred_region
      _
    $region65: #{tpu_custom_call.1} parent=1 // pred_fallthru
      _
    // Predicated region
    $region66: #{tpu_custom_call.1} parent=1 // pred_check
      _
    $region67: #{tpu_custom_call.1} parent=1 // pred_check_branch
      %131 = sbr.rel (0) target = $region69
    $region68: #{tpu_custom_call.1} parent=1 // pred_region
      _
    $region69: #{tpu_custom_call.1} parent=1 // pred_fallthru
      _
    // Predicated region
    $region70: #{tpu_custom_call.1} parent=1 // pred_check
      _
    $region71: #{tpu_custom_call.1} parent=1 // pred_check_branch
      %133 = sbr.rel (0) target = $region73
    $region72: #{tpu_custom_call.1} parent=1 // pred_region
      _
    $region73: #{tpu_custom_call.1} parent=1 // pred_fallthru
      _
    // Predicated region
    $region74: #{tpu_custom_call.1} parent=1 // pred_check
      _
    $region75: #{tpu_custom_call.1} parent=1 // pred_check_branch
      %135 = sbr.rel (0) target = $region77
    $region76: #{tpu_custom_call.1} parent=1 // pred_region
      _
    $region77: #{tpu_custom_call.1} parent=1 // pred_fallthru
      _
    // Predicated region
    $region78: #{tpu_custom_call.1} parent=1 // pred_check
      _
    $region79: #{tpu_custom_call.1} parent=1 // pred_check_branch
      %137 = sbr.rel (0) target = $region81
    $region80: #{tpu_custom_call.1} parent=1 // pred_region
      %138 = dma.done [#allocation4], 64
    $region81: #{tpu_custom_call.1} parent=1 // pred_fallthru
      _
    // Predicated region
    $region82: #{tpu_custom_call.1} parent=1 // pred_check
      _
    $region83: #{tpu_custom_call.1} parent=1 // pred_check_branch
      %140 = sbr.rel (0) target = $region85
    $region84: #{tpu_custom_call.1} parent=1 // pred_region
      %141 = dma.done [#allocation7], 64
    $region85: #{tpu_custom_call.1} parent=1 // pred_fallthru
      _
    // Predicated region
    $region86: #{tpu_custom_call.1} parent=1 // pred_check
      _
    $region87: #{tpu_custom_call.1} parent=1 // pred_check_branch
      %143 = sbr.rel (0) target = $region89
    $region88: #{tpu_custom_call.1} parent=1 // pred_region
      %144 = dma.done [#allocation7], 16
    $region89: #{tpu_custom_call.1} parent=1 // pred_fallthru
      _
    // Predicated region
    $region90: #{tpu_custom_call.1} parent=1 // pred_check
      _
    $region91: #{tpu_custom_call.1} parent=1 // pred_check_branch
      %146 = sbr.rel (0) target = $region93
    $region92: #{tpu_custom_call.1} parent=1 // pred_region
      %147 = dma.done [#allocation10], 32
    $region93: #{tpu_custom_call.1} parent=1 // pred_fallthru
      _
    // Predicated region
    $region94: #{tpu_custom_call.1} parent=1 // pred_check
      _
    $region95: #{tpu_custom_call.1} parent=1 // pred_check_branch
      %149 = sbr.rel (0) target = $region97
    $region96: #{tpu_custom_call.1} parent=1 // pred_region
      %150 = dma.done [#allocation10], 32
    $region97: #{tpu_custom_call.1} parent=1 // pred_fallthru
      _
    %s151 = sadd.s32 0, 0
    %p152 = scmp.lt.s32.totalorder %s151, 0
    %s153 = scalar_select %p152, %s151, 0
    %s154 = smul.addr %s153, 18
    %s155 = smul.addr %s154, 4
    %s156 = scalar_lea.vmem %s0, %s155
    %s157 = sadd.s32 0, 0
    %p158 = scmp.lt.s32.totalorder %s157, 0
    %s159 = scalar_select %p158, %s157, 0
    %s160 = smul.addr %s159, 18
    %s161 = smul.addr %s160, 4
    %s162 = scalar_lea.vmem %s1, %s161
    %s163 = sadd.s32 0, 0
    %p164 = scmp.lt.s32.totalorder %s163, 0
    %s165 = scalar_select %p164, %s163, 0
    %s166 = smul.addr %s165, 10
    %s167 = smul.addr %s166, 4
    %s168 = scalar_lea.vmem %s2, %s167
    %s169 = sadd.s32 0, 0
    %p170 = scmp.lt.s32.totalorder %s169, 0
    %s171 = scalar_select %p170, %s169, 0
    %s172 = scalar_lea.vmem %s3, %s171
    %s173 = sadd.s32 0, 0
    %p174 = scmp.lt.s32.totalorder %s173, 0
    %s175 = scalar_select %p174, %s173, 0
    %s176 = smul.addr %s175, 18
    %s177 = smul.addr %s176, 4
    %s178 = scalar_lea.vmem %s0, %s177
    %s179 = sadd.s32 0, 0
    %s180 = sadd.s32 0, 0
    %p181 = scmp.lt.s32.totalorder %s180, 0
    %s182 = scalar_select %p181, %s180, 0
    %s183 = smul.addr %s182, 18
    %s184 = smul.addr %s183, 4
    %s185 = scalar_lea.vmem %s1, %s184
    %s186 = sadd.s32 0, 0
    %s187 = sadd.s32 0, 0
    %p188 = scmp.lt.s32.totalorder %s187, 0
    %s189 = scalar_select %p188, %s187, 0
    %s190 = smul.addr %s189, 10
    %s191 = smul.addr %s190, 4
    %s192 = scalar_lea.vmem %s2, %s191
    %s193 = sadd.s32 0, 0
    %s194 = sadd.s32 0, 0
    %p195 = scmp.lt.s32.totalorder %s194, 0
    %s196 = scalar_select %p195, %s194, 0
    %s197 = scalar_lea.vmem %s3, %s196
    %s198 = sadd.s32 0, 0
    %p200 = scmp.eq.s32.totalorder 0, 0
    // Predicated region
    $region98: #{tpu_custom_call.1} parent=1 // pred_check
      %p201 = pneg %p200
    $region99: #{tpu_custom_call.1} parent=1 // pred_check_branch
      %203 = sbr.rel (%p201) target = $region101
    $region100: #{tpu_custom_call.1} parent=1 // pred_region
      %vm204 = vcmask 253952
      %205 = vst.msk [vmem:[#allocation2] sm:$0x1] %vm204, 0.0
    $region101: #{tpu_custom_call.1} parent=1 // pred_fallthru
      _
    %v206 = vld [vmem:[%s178] sm:$0xf]
    %v207 = vld [vmem:[%s178 + $0x4] sm:$0xf]
    %v208 = vld [vmem:[%s178 + $0x8] sm:$0xf]
    %v209 = vld [vmem:[%s178 + $0xc] sm:$0xf]
    %v210 = vld [vmem:[%s178 + $0x10] sm:$0xf]
    %v211 = vld [vmem:[%s178 + $0x14] sm:$0xf]
    %v212 = vld [vmem:[%s178 + $0x18] sm:$0xf]
    %v213 = vld [vmem:[%s178 + $0x1c] sm:$0xf]
    %v214 = vld [vmem:[%s178 + $0x20] sm:$0xf]
    %v215 = vld [vmem:[%s178 + $0x24] sm:$0xf]
    %v216 = vld [vmem:[%s178 + $0x28] sm:$0xf]
    %v217 = vld [vmem:[%s178 + $0x2c] sm:$0xf]
    %v218 = vld [vmem:[%s178 + $0x30] sm:$0xf]
    %v219 = vld [vmem:[%s178 + $0x34] sm:$0xf]
    %v220 = vld [vmem:[%s178 + $0x38] sm:$0xf]
    %v221 = vld [vmem:[%s178 + $0x3c] sm:$0xf]
    %v222 = vld [vmem:[%s178 + $0x40] sm:$0xf]
    %v223 = vld [vmem:[%s178 + $0x44] sm:$0xf]
    %v224 = vld [vmem:[#allocation6] sm:$0xf]
    %v225 = vld [vmem:[#allocation8] sm:$0x1]
    %v227 = vlaneseq
    %v228 = vshrl.u32 %v227, 7
    %v229 = vsub.s32 0, %v228
    %v230 = vrot.slane %v225, %v229
    %v250 = vunpack.c.l.b16 %v206
    %v251 = vunpack.c.l.b16 %v207
    %v252 = vunpack.c.l.b16 %v208
    %v253 = vunpack.c.l.b16 %v209
    %v254 = vunpack.c.l.b16 %v210
    %v255 = vunpack.c.l.b16 %v211
    %v256 = vunpack.c.l.b16 %v212
    %v257 = vunpack.c.l.b16 %v213
    %v258 = vunpack.c.l.b16 %v214
    %v259 = vunpack.c.l.b16 %v215
    %v260 = vunpack.c.l.b16 %v216
    %v261 = vunpack.c.l.b16 %v217
    %v262 = vunpack.c.l.b16 %v218
    %v263 = vunpack.c.l.b16 %v219
    %v264 = vunpack.c.l.b16 %v220
    %v265 = vunpack.c.l.b16 %v221
    %v266 = vunpack.c.l.b16 %v222
    %v267 = vunpack.c.l.b16 %v223
    %v268 = vpack.c.b16 %v251, %v250
    %v269 = vpack.c.b16 %v253, %v252
    %v270 = vpack.c.b16 %v255, %v254
    %v271 = vpack.c.b16 %v257, %v256
    %v272 = vpack.c.b16 %v259, %v258
    %v273 = vpack.c.b16 %v261, %v260
    %v274 = vpack.c.b16 %v263, %v262
    %v275 = vpack.c.b16 %v265, %v264
    %v276 = vpack.c.b16 %v267, %v266
    %vm277 = vcmask 64512
    %v279 = vsel %vm277, %v268, 0
    %v282 = vsel %vm277, %v269, 0
    %v285 = vsel %vm277, %v270, 0
    %v288 = vsel %vm277, %v271, 0
    %v291 = vsel %vm277, %v272, 0
    %v294 = vsel %vm277, %v273, 0
    %v297 = vsel %vm277, %v274, 0
    %v300 = vsel %vm277, %v275, 0
    %v303 = vsel %vm277, %v276, 0
    %vm305 = vcmask 1043456
    %v307 = vsel %vm305, %v224, 0
    %309 = vmatprep.subr.bf16.mxu0 0
    %310 = vmatpush1.bf16.msra.mxu0 %v307
    %311 = vmatprep.subr.bf16.mxu0 0
    %312 = vmatpush1.bf16.msra.mxu0 0
    %313 = vmatprep.subr.bf16.mxu0 0
    %314 = vmatpush1.bf16.msra.mxu0 0
    %315 = vmatprep.subr.bf16.mxu0 0
    %316 = vmatpush1.bf16.msra.mxu0 0
    %317 = vmatprep.subr.bf16.mxu0 0
    %318 = vmatpush1.bf16.msra.mxu0 0
    %319 = vmatprep.subr.bf16.mxu0 0
    %320 = vmatpush1.bf16.msra.mxu0 0
    %321 = vmatprep.subr.bf16.mxu0 0
    %322 = vmatpush1.bf16.msra.mxu0 0
    %323 = vmatprep.subr.bf16.mxu0 0
    %324 = vmatpush1.bf16.msra.mxu0 0
    %325 = vmatprep.subr.bf16.mxu0 0
    %326 = vmatpush1.bf16.msra.mxu0 0
    %327 = vmatprep.subr.bf16.mxu0 0
    %328 = vmatpush1.bf16.msra.mxu0 0
    %329 = vmatprep.subr.bf16.mxu0 0
    %330 = vmatpush1.bf16.msra.mxu0 0
    %331 = vmatprep.subr.bf16.mxu0 0
    %332 = vmatpush1.bf16.msra.mxu0 0
    %333 = vmatprep.subr.bf16.mxu0 0
    %334 = vmatpush1.bf16.msra.mxu0 0
    %335 = vmatprep.subr.bf16.mxu0 0
    %336 = vmatpush1.bf16.msra.mxu0 0
    %337 = vmatprep.subr.bf16.mxu0 0
    %338 = vmatpush1.bf16.msra.mxu0 0
    %339 = vmatprep.subr.bf16.mxu0 0
    %340 = vmatpush1.bf16.msra.mxu0 0
    %341 = vmatprep.mubr.bf16.mxu0 0
    %342 = vmatmul.mubr.bf16.gmra.mrb[0].mxu0 %v279
    %v343 = vpop.f32.mrb[0].mxu0
    %v344 = vadd.f32 %v230, %v343
    %v345 = vpop.f32.mrb[0].mxu0
    %v346 = vpop.f32.mrb[0].mxu0
    %v347 = vadd.f32 %v230, %v346
    %v348 = vpop.f32.mrb[0].mxu0
    %349 = vmatprep.mubr.bf16.mxu0 0
    %350 = vmatmul.mubr.bf16.gmra.mrb[0].mxu0 %v282
    %v351 = vpop.f32.mrb[0].mxu0
    %v352 = vadd.f32 %v230, %v351
    %v353 = vpop.f32.mrb[0].mxu0
    %v354 = vpop.f32.mrb[0].mxu0
    %v355 = vadd.f32 %v230, %v354
    %v356 = vpop.f32.mrb[0].mxu0
    %357 = vmatprep.mubr.bf16.mxu0 0
    %358 = vmatmul.mubr.bf16.gmra.mrb[0].mxu0 %v285
    %v359 = vpop.f32.mrb[0].mxu0
    %v360 = vadd.f32 %v230, %v359
    %v361 = vpop.f32.mrb[0].mxu0
    %v362 = vpop.f32.mrb[0].mxu0
    %v363 = vadd.f32 %v230, %v362
    %v364 = vpop.f32.mrb[0].mxu0
    %365 = vmatprep.mubr.bf16.mxu0 0
    %366 = vmatmul.mubr.bf16.gmra.mrb[0].mxu0 %v288
    %v367 = vpop.f32.mrb[0].mxu0
    %v368 = vadd.f32 %v230, %v367
    %v369 = vpop.f32.mrb[0].mxu0
    %v370 = vpop.f32.mrb[0].mxu0
    %v371 = vadd.f32 %v230, %v370
    %v372 = vpop.f32.mrb[0].mxu0
    %373 = vmatprep.mubr.bf16.mxu0 0
    %374 = vmatmul.mubr.bf16.gmra.mrb[0].mxu0 %v291
    %v375 = vpop.f32.mrb[0].mxu0
    %v376 = vadd.f32 %v230, %v375
    %v377 = vpop.f32.mrb[0].mxu0
    %v378 = vpop.f32.mrb[0].mxu0
    %v379 = vadd.f32 %v230, %v378
    %v380 = vpop.f32.mrb[0].mxu0
    %381 = vmatprep.mubr.bf16.mxu0 0
    %382 = vmatmul.mubr.bf16.gmra.mrb[0].mxu0 %v294
    %v383 = vpop.f32.mrb[0].mxu0
    %v384 = vadd.f32 %v230, %v383
    %v385 = vpop.f32.mrb[0].mxu0
    %v386 = vpop.f32.mrb[0].mxu0
    %v387 = vadd.f32 %v230, %v386
    %v388 = vpop.f32.mrb[0].mxu0
    %389 = vmatprep.mubr.bf16.mxu0 0
    %390 = vmatmul.mubr.bf16.gmra.mrb[0].mxu0 %v297
    %v391 = vpop.f32.mrb[0].mxu0
    %v392 = vadd.f32 %v230, %v391
    %v393 = vpop.f32.mrb[0].mxu0
    %v394 = vpop.f32.mrb[0].mxu0
    %v395 = vadd.f32 %v230, %v394
    %v396 = vpop.f32.mrb[0].mxu0
    %397 = vmatprep.mubr.bf16.mxu0 0
    %398 = vmatmul.mubr.bf16.gmra.mrb[0].mxu0 %v300
    %v399 = vpop.f32.mrb[0].mxu0
    %v400 = vadd.f32 %v230, %v399
    %v401 = vpop.f32.mrb[0].mxu0
    %v402 = vpop.f32.mrb[0].mxu0
    %v403 = vadd.f32 %v230, %v402
    %v404 = vpop.f32.mrb[0].mxu0
    %405 = vmatprep.mubr.bf16.mxu0 0
    %406 = vmatmul.mubr.bf16.gmra.mrb[0].mxu0 %v303
    %v407 = vpop.f32.mrb[0].mxu0
    %v408 = vadd.f32 %v230, %v407
    %v409 = vpop.f32.mrb[0].mxu0
    %v410 = vpop.f32.mrb[0].mxu0
    %v411 = vadd.f32 %v230, %v410
    %v412 = vpop.f32.mrb[0].mxu0
    %413 = vdwg.mxu0
    %v414 = vld [vmem:[%s4] sm:$0xf]
    %v415 = vld [vmem:[%s4 + $0x4] sm:$0xf]
    %v416 = vld [vmem:[%s4 + $0x8] sm:$0xf]
    %v417 = vld [vmem:[%s4 + $0xc] sm:$0xf]
    %v418 = vld [vmem:[%s4 + $0x10] sm:$0xf]
    %v419 = vld [vmem:[%s4 + $0x14] sm:$0xf]
    %v420 = vld [vmem:[%s4 + $0x18] sm:$0xf]
    %v421 = vld [vmem:[%s4 + $0x1c] sm:$0xf]
    %v422 = vld [vmem:[%s4 + $0x20] sm:$0xf]
    %v423 = vld [vmem:[%s4 + $0x24] sm:$0xf]
    %v424 = vld [vmem:[%s4 + $0x28] sm:$0xf]
    %v425 = vld [vmem:[%s4 + $0x2c] sm:$0xf]
    %v426 = vld [vmem:[%s4 + $0x30] sm:$0xf]
    %v427 = vld [vmem:[%s4 + $0x34] sm:$0xf]
    %v428 = vld [vmem:[%s4 + $0x38] sm:$0xf]
    %v429 = vld [vmem:[%s4 + $0x3c] sm:$0xf]
    %v430 = vld [vmem:[%s4 + $0x40] sm:$0xf]
    %v431 = vld [vmem:[%s4 + $0x44] sm:$0xf]
    %v432 = vunpack.c.l.bf16 %v414
    %v433 = vunpack.c.l.bf16 %v415
    %v434 = vunpack.c.l.bf16 %v416
    %v435 = vunpack.c.l.bf16 %v417
    %v436 = vunpack.c.l.bf16 %v418
    %v437 = vunpack.c.l.bf16 %v419
    %v438 = vunpack.c.l.bf16 %v420
    %v439 = vunpack.c.l.bf16 %v421
    %v440 = vunpack.c.l.bf16 %v422
    %v441 = vunpack.c.l.bf16 %v423
    %v442 = vunpack.c.l.bf16 %v424
    %v443 = vunpack.c.l.bf16 %v425
    %v444 = vunpack.c.l.bf16 %v426
    %v445 = vunpack.c.l.bf16 %v427
    %v446 = vunpack.c.l.bf16 %v428
    %v447 = vunpack.c.l.bf16 %v429
    %v448 = vunpack.c.l.bf16 %v430
    %v449 = vunpack.c.l.bf16 %v431
    %v450 = vmul.f32 %v344, %v432
    %v451 = vmul.f32 %v347, %v433
    %v452 = vmul.f32 %v352, %v434
    %v453 = vmul.f32 %v355, %v435
    %v454 = vmul.f32 %v360, %v436
    %v455 = vmul.f32 %v363, %v437
    %v456 = vmul.f32 %v368, %v438
    %v457 = vmul.f32 %v371, %v439
    %v458 = vmul.f32 %v376, %v440
    %v459 = vmul.f32 %v379, %v441
    %v460 = vmul.f32 %v384, %v442
    %v461 = vmul.f32 %v387, %v443
    %v462 = vmul.f32 %v392, %v444
    %v463 = vmul.f32 %v395, %v445
    %v464 = vmul.f32 %v400, %v446
    %v465 = vmul.f32 %v403, %v447
    %v466 = vmul.f32 %v408, %v448
    %v467 = vmul.f32 %v411, %v449
    %v468 = vld [vmem:[%s185] sm:$0xf]
    %v469 = vld [vmem:[%s185 + $0x4] sm:$0xf]
    %v470 = vld [vmem:[%s185 + $0x8] sm:$0xf]
    %v471 = vld [vmem:[%s185 + $0xc] sm:$0xf]
    %v472 = vld [vmem:[%s185 + $0x10] sm:$0xf]
    %v473 = vld [vmem:[%s185 + $0x14] sm:$0xf]
    %v474 = vld [vmem:[%s185 + $0x18] sm:$0xf]
    %v475 = vld [vmem:[%s185 + $0x1c] sm:$0xf]
    %v476 = vld [vmem:[%s185 + $0x20] sm:$0xf]
    %v477 = vld [vmem:[%s185 + $0x24] sm:$0xf]
    %v478 = vld [vmem:[%s185 + $0x28] sm:$0xf]
    %v479 = vld [vmem:[%s185 + $0x2c] sm:$0xf]
    %v480 = vld [vmem:[%s185 + $0x30] sm:$0xf]
    %v481 = vld [vmem:[%s185 + $0x34] sm:$0xf]
    %v482 = vld [vmem:[%s185 + $0x38] sm:$0xf]
    %v483 = vld [vmem:[%s185 + $0x3c] sm:$0xf]
    %v484 = vld [vmem:[%s185 + $0x40] sm:$0xf]
    %v485 = vld [vmem:[%s185 + $0x44] sm:$0xf]
    %v486 = vpack.c.bf16 %v451, %v450
    %v487 = vpack.c.bf16 %v453, %v452
    %v488 = vpack.c.bf16 %v455, %v454
    %v489 = vpack.c.bf16 %v457, %v456
    %v490 = vpack.c.bf16 %v459, %v458
    %v491 = vpack.c.bf16 %v461, %v460
    %v492 = vpack.c.bf16 %v463, %v462
    %v493 = vpack.c.bf16 %v465, %v464
    %v494 = vpack.c.bf16 %v467, %v466
    %v504 = vunpack.c.l.b16 %v486
    %v505 = vunpack.c.h.b16 %v486
    %v506 = vunpack.c.l.b16 %v487
    %v507 = vunpack.c.h.b16 %v487
    %v508 = vunpack.c.l.b16 %v488
    %v509 = vunpack.c.h.b16 %v488
    %v510 = vunpack.c.l.b16 %v489
    %v511 = vunpack.c.h.b16 %v489
    %v512 = vunpack.c.l.b16 %v490
    %v513 = vunpack.c.h.b16 %v490
    %v514 = vunpack.c.l.b16 %v491
    %v515 = vunpack.c.h.b16 %v491
    %v516 = vunpack.c.l.b16 %v492
    %v517 = vunpack.c.h.b16 %v492
    %v518 = vunpack.c.l.b16 %v493
    %v519 = vunpack.c.h.b16 %v493
    %v520 = vunpack.c.l.b16 %v494
    %v521 = vunpack.c.h.b16 %v494
    %v525 = vunpack.c.l.b16 %v468
    %v526 = vunpack.c.l.b16 %v469
    %v527 = vunpack.c.l.b16 %v470
    %v528 = vpack.c.b16 %v526, %v525
    %v529 = vpack.c.b16 %v527, %v527
    %v530 = vpack.c.b16 %v505, %v504
    %v531 = vpack.c.b16 %v506, %v506
    %vm533 = vcmask 195584
    %v535 = vsel %vm533, %v528, 0
    %v538 = vsel %vm533, %v529, 0
    %v541 = vsel %vm305, %v531, 0
    %543 = vmatprep.subr.bf16.mxu0 0
    %544 = vmatpush1.bf16.msra.mxu0 %v530
    %545 = vmatprep.subr.bf16.mxu0 0
    %546 = vmatpush1.bf16.msra.mxu0 %v541
    %547 = vmatprep.subr.bf16.mxu0 0
    %548 = vmatpush1.bf16.msra.mxu0 0
    %549 = vmatprep.subr.bf16.mxu0 0
    %550 = vmatpush1.bf16.msra.mxu0 0
    %551 = vmatprep.subr.bf16.mxu0 0
    %552 = vmatpush1.bf16.msra.mxu0 0
    %553 = vmatprep.subr.bf16.mxu0 0
    %554 = vmatpush1.bf16.msra.mxu0 0
    %555 = vmatprep.subr.bf16.mxu0 0
    %556 = vmatpush1.bf16.msra.mxu0 0
    %557 = vmatprep.subr.bf16.mxu0 0
    %558 = vmatpush1.bf16.msra.mxu0 0
    %559 = vmatprep.subr.bf16.mxu0 0
    %560 = vmatpush1.bf16.msra.mxu0 0
    %561 = vmatprep.subr.bf16.mxu0 0
    %562 = vmatpush1.bf16.msra.mxu0 0
    %563 = vmatprep.subr.bf16.mxu0 0
    %564 = vmatpush1.bf16.msra.mxu0 0
    %565 = vmatprep.subr.bf16.mxu0 0
    %566 = vmatpush1.bf16.msra.mxu0 0
    %567 = vmatprep.subr.bf16.mxu0 0
    %568 = vmatpush1.bf16.msra.mxu0 0
    %569 = vmatprep.subr.bf16.mxu0 0
    %570 = vmatpush1.bf16.msra.mxu0 0
    %571 = vmatprep.subr.bf16.mxu0 0
    %572 = vmatpush1.bf16.msra.mxu0 0
    %573 = vmatprep.subr.bf16.mxu0 0
    %574 = vmatpush1.bf16.msra.mxu0 0
    %575 = vmatprep.mubr.bf16.mxu0 0
    %576 = vmatmul.mubr.bf16.gmra.mrb[0].mxu0 %v535
    %v577 = vpop.f32.mrb[0].mxu0
    %v578 = vadd.f32 0.0, %v577
    %v579 = vpop.f32.mrb[0].mxu0
    %v580 = vpop.f32.mrb[0].mxu0
    %v581 = vadd.f32 0.0, %v580
    %v582 = vpop.f32.mrb[0].mxu0
    %583 = vmatprep.mubr.bf16.mxu0 0
    %584 = vmatmul.mubr.bf16.gmra.mrb[0].mxu0 %v538
    %v585 = vpop.f32.mrb[0].mxu0
    %v586 = vadd.f32 0.0, %v585
    %v587 = vpop.f32.mrb[0].mxu0
    %v588 = vpop.f32.mrb[0].mxu0
    %v589 = vpop.f32.mrb[0].mxu0
    %590 = vdwg.mxu0
    %v594 = vunpack.c.l.b16 %v471
    %v595 = vunpack.c.l.b16 %v472
    %v596 = vunpack.c.l.b16 %v473
    %v597 = vpack.c.b16 %v595, %v594
    %v598 = vpack.c.b16 %v596, %v596
    %v599 = vpack.c.b16 %v508, %v507
    %v600 = vpack.c.b16 %v509, %v509
    %v603 = vsel %vm533, %v597, 0
    %v606 = vsel %vm533, %v598, 0
    %v609 = vsel %vm305, %v600, 0
    %611 = vmatprep.subr.bf16.mxu0 0
    %612 = vmatpush1.bf16.msra.mxu0 %v599
    %613 = vmatprep.subr.bf16.mxu0 0
    %614 = vmatpush1.bf16.msra.mxu0 %v609
    %615 = vmatprep.subr.bf16.mxu0 0
    %616 = vmatpush1.bf16.msra.mxu0 0
    %617 = vmatprep.subr.bf16.mxu0 0
    %618 = vmatpush1.bf16.msra.mxu0 0
    %619 = vmatprep.subr.bf16.mxu0 0
    %620 = vmatpush1.bf16.msra.mxu0 0
    %621 = vmatprep.subr.bf16.mxu0 0
    %622 = vmatpush1.bf16.msra.mxu0 0
    %623 = vmatprep.subr.bf16.mxu0 0
    %624 = vmatpush1.bf16.msra.mxu0 0
    %625 = vmatprep.subr.bf16.mxu0 0
    %626 = vmatpush1.bf16.msra.mxu0 0
    %627 = vmatprep.subr.bf16.mxu0 0
    %628 = vmatpush1.bf16.msra.mxu0 0
    %629 = vmatprep.subr.bf16.mxu0 0
    %630 = vmatpush1.bf16.msra.mxu0 0
    %631 = vmatprep.subr.bf16.mxu0 0
    %632 = vmatpush1.bf16.msra.mxu0 0
    %633 = vmatprep.subr.bf16.mxu0 0
    %634 = vmatpush1.bf16.msra.mxu0 0
    %635 = vmatprep.subr.bf16.mxu0 0
    %636 = vmatpush1.bf16.msra.mxu0 0
    %637 = vmatprep.subr.bf16.mxu0 0
    %638 = vmatpush1.bf16.msra.mxu0 0
    %639 = vmatprep.subr.bf16.mxu0 0
    %640 = vmatpush1.bf16.msra.mxu0 0
    %641 = vmatprep.subr.bf16.mxu0 0
    %642 = vmatpush1.bf16.msra.mxu0 0
    %643 = vmatprep.mubr.bf16.mxu0 0
    %644 = vmatmul.mubr.bf16.gmra.mrb[0].mxu0 %v603
    %v645 = vpop.f32.mrb[0].mxu0
    %v646 = vadd.f32 0.0, %v645
    %v647 = vpop.f32.mrb[0].mxu0
    %v648 = vpop.f32.mrb[0].mxu0
    %v649 = vadd.f32 0.0, %v648
    %v650 = vpop.f32.mrb[0].mxu0
    %651 = vmatprep.mubr.bf16.mxu0 0
    %652 = vmatmul.mubr.bf16.gmra.mrb[0].mxu0 %v606
    %v653 = vpop.f32.mrb[0].mxu0
    %v654 = vadd.f32 0.0, %v653
    %v655 = vpop.f32.mrb[0].mxu0
    %v656 = vpop.f32.mrb[0].mxu0
    %v657 = vpop.f32.mrb[0].mxu0
    %658 = vdwg.mxu0
    %v662 = vunpack.c.l.b16 %v474
    %v663 = vunpack.c.l.b16 %v475
    %v664 = vunpack.c.l.b16 %v476
    %v665 = vpack.c.b16 %v663, %v662
    %v666 = vpack.c.b16 %v664, %v664
    %v667 = vpack.c.b16 %v511, %v510
    %v668 = vpack.c.b16 %v512, %v512
    %v671 = vsel %vm533, %v665, 0
    %v674 = vsel %vm533, %v666, 0
    %v677 = vsel %vm305, %v668, 0
    %679 = vmatprep.subr.bf16.mxu0 0
    %680 = vmatpush1.bf16.msra.mxu0 %v667
    %681 = vmatprep.subr.bf16.mxu0 0
    %682 = vmatpush1.bf16.msra.mxu0 %v677
    %683 = vmatprep.subr.bf16.mxu0 0
    %684 = vmatpush1.bf16.msra.mxu0 0
    %685 = vmatprep.subr.bf16.mxu0 0
    %686 = vmatpush1.bf16.msra.mxu0 0
    %687 = vmatprep.subr.bf16.mxu0 0
    %688 = vmatpush1.bf16.msra.mxu0 0
    %689 = vmatprep.subr.bf16.mxu0 0
    %690 = vmatpush1.bf16.msra.mxu0 0
    %691 = vmatprep.subr.bf16.mxu0 0
    %692 = vmatpush1.bf16.msra.mxu0 0
    %693 = vmatprep.subr.bf16.mxu0 0
    %694 = vmatpush1.bf16.msra.mxu0 0
    %695 = vmatprep.subr.bf16.mxu0 0
    %696 = vmatpush1.bf16.msra.mxu0 0
    %697 = vmatprep.subr.bf16.mxu0 0
    %698 = vmatpush1.bf16.msra.mxu0 0
    %699 = vmatprep.subr.bf16.mxu0 0
    %700 = vmatpush1.bf16.msra.mxu0 0
    %701 = vmatprep.subr.bf16.mxu0 0
    %702 = vmatpush1.bf16.msra.mxu0 0
    %703 = vmatprep.subr.bf16.mxu0 0
    %704 = vmatpush1.bf16.msra.mxu0 0
    %705 = vmatprep.subr.bf16.mxu0 0
    %706 = vmatpush1.bf16.msra.mxu0 0
    %707 = vmatprep.subr.bf16.mxu0 0
    %708 = vmatpush1.bf16.msra.mxu0 0
    %709 = vmatprep.subr.bf16.mxu0 0
    %710 = vmatpush1.bf16.msra.mxu0 0
    %711 = vmatprep.mubr.bf16.mxu0 0
    %712 = vmatmul.mubr.bf16.gmra.mrb[0].mxu0 %v671
    %v713 = vpop.f32.mrb[0].mxu0
    %v714 = vadd.f32 0.0, %v713
    %v715 = vpop.f32.mrb[0].mxu0
    %v716 = vpop.f32.mrb[0].mxu0
    %v717 = vadd.f32 0.0, %v716
    %v718 = vpop.f32.mrb[0].mxu0
    %719 = vmatprep.mubr.bf16.mxu0 0
    %720 = vmatmul.mubr.bf16.gmra.mrb[0].mxu0 %v674
    %v721 = vpop.f32.mrb[0].mxu0
    %v722 = vadd.f32 0.0, %v721
    %v723 = vpop.f32.mrb[0].mxu0
    %v724 = vpop.f32.mrb[0].mxu0
    %v725 = vpop.f32.mrb[0].mxu0
    %726 = vdwg.mxu0
    %v730 = vunpack.c.l.b16 %v477
    %v731 = vunpack.c.l.b16 %v478
    %v732 = vunpack.c.l.b16 %v479
    %v733 = vpack.c.b16 %v731, %v730
    %v734 = vpack.c.b16 %v732, %v732
    %v735 = vpack.c.b16 %v514, %v513
    %v736 = vpack.c.b16 %v515, %v515
    %v739 = vsel %vm533, %v733, 0
    %v742 = vsel %vm533, %v734, 0
    %v745 = vsel %vm305, %v736, 0
    %747 = vmatprep.subr.bf16.mxu0 0
    %748 = vmatpush1.bf16.msra.mxu0 %v735
    %749 = vmatprep.subr.bf16.mxu0 0
    %750 = vmatpush1.bf16.msra.mxu0 %v745
    %751 = vmatprep.subr.bf16.mxu0 0
    %752 = vmatpush1.bf16.msra.mxu0 0
    %753 = vmatprep.subr.bf16.mxu0 0
    %754 = vmatpush1.bf16.msra.mxu0 0
    %755 = vmatprep.subr.bf16.mxu0 0
    %756 = vmatpush1.bf16.msra.mxu0 0
    %757 = vmatprep.subr.bf16.mxu0 0
    %758 = vmatpush1.bf16.msra.mxu0 0
    %759 = vmatprep.subr.bf16.mxu0 0
    %760 = vmatpush1.bf16.msra.mxu0 0
    %761 = vmatprep.subr.bf16.mxu0 0
    %762 = vmatpush1.bf16.msra.mxu0 0
    %763 = vmatprep.subr.bf16.mxu0 0
    %764 = vmatpush1.bf16.msra.mxu0 0
    %765 = vmatprep.subr.bf16.mxu0 0
    %766 = vmatpush1.bf16.msra.mxu0 0
    %767 = vmatprep.subr.bf16.mxu0 0
    %768 = vmatpush1.bf16.msra.mxu0 0
    %769 = vmatprep.subr.bf16.mxu0 0
    %770 = vmatpush1.bf16.msra.mxu0 0
    %771 = vmatprep.subr.bf16.mxu0 0
    %772 = vmatpush1.bf16.msra.mxu0 0
    %773 = vmatprep.subr.bf16.mxu0 0
    %774 = vmatpush1.bf16.msra.mxu0 0
    %775 = vmatprep.subr.bf16.mxu0 0
    %776 = vmatpush1.bf16.msra.mxu0 0
    %777 = vmatprep.subr.bf16.mxu0 0
    %778 = vmatpush1.bf16.msra.mxu0 0
    %779 = vmatprep.mubr.bf16.mxu0 0
    %780 = vmatmul.mubr.bf16.gmra.mrb[0].mxu0 %v739
    %v781 = vpop.f32.mrb[0].mxu0
    %v782 = vadd.f32 0.0, %v781
    %v783 = vpop.f32.mrb[0].mxu0
    %v784 = vpop.f32.mrb[0].mxu0
    %v785 = vadd.f32 0.0, %v784
    %v786 = vpop.f32.mrb[0].mxu0
    %787 = vmatprep.mubr.bf16.mxu0 0
    %788 = vmatmul.mubr.bf16.gmra.mrb[0].mxu0 %v742
    %v789 = vpop.f32.mrb[0].mxu0
    %v790 = vadd.f32 0.0, %v789
    %v791 = vpop.f32.mrb[0].mxu0
    %v792 = vpop.f32.mrb[0].mxu0
    %v793 = vpop.f32.mrb[0].mxu0
    %794 = vdwg.mxu0
    %v798 = vunpack.c.l.b16 %v480
    %v799 = vunpack.c.l.b16 %v481
    %v800 = vunpack.c.l.b16 %v482
    %v801 = vpack.c.b16 %v799, %v798
    %v802 = vpack.c.b16 %v800, %v800
    %v803 = vpack.c.b16 %v517, %v516
    %v804 = vpack.c.b16 %v518, %v518
    %v807 = vsel %vm533, %v801, 0
    %v810 = vsel %vm533, %v802, 0
    %v813 = vsel %vm305, %v804, 0
    %815 = vmatprep.subr.bf16.mxu0 0
    %816 = vmatpush1.bf16.msra.mxu0 %v803
    %817 = vmatprep.subr.bf16.mxu0 0
    %818 = vmatpush1.bf16.msra.mxu0 %v813
    %819 = vmatprep.subr.bf16.mxu0 0
    %820 = vmatpush1.bf16.msra.mxu0 0
    %821 = vmatprep.subr.bf16.mxu0 0
    %822 = vmatpush1.bf16.msra.mxu0 0
    %823 = vmatprep.subr.bf16.mxu0 0
    %824 = vmatpush1.bf16.msra.mxu0 0
    %825 = vmatprep.subr.bf16.mxu0 0
    %826 = vmatpush1.bf16.msra.mxu0 0
    %827 = vmatprep.subr.bf16.mxu0 0
    %828 = vmatpush1.bf16.msra.mxu0 0
    %829 = vmatprep.subr.bf16.mxu0 0
    %830 = vmatpush1.bf16.msra.mxu0 0
    %831 = vmatprep.subr.bf16.mxu0 0
    %832 = vmatpush1.bf16.msra.mxu0 0
    %833 = vmatprep.subr.bf16.mxu0 0
    %834 = vmatpush1.bf16.msra.mxu0 0
    %835 = vmatprep.subr.bf16.mxu0 0
    %836 = vmatpush1.bf16.msra.mxu0 0
    %837 = vmatprep.subr.bf16.mxu0 0
    %838 = vmatpush1.bf16.msra.mxu0 0
    %839 = vmatprep.subr.bf16.mxu0 0
    %840 = vmatpush1.bf16.msra.mxu0 0
    %841 = vmatprep.subr.bf16.mxu0 0
    %842 = vmatpush1.bf16.msra.mxu0 0
    %843 = vmatprep.subr.bf16.mxu0 0
    %844 = vmatpush1.bf16.msra.mxu0 0
    %845 = vmatprep.subr.bf16.mxu0 0
    %846 = vmatpush1.bf16.msra.mxu0 0
    %847 = vmatprep.mubr.bf16.mxu0 0
    %848 = vmatmul.mubr.bf16.gmra.mrb[0].mxu0 %v807
    %v849 = vpop.f32.mrb[0].mxu0
    %v850 = vadd.f32 0.0, %v849
    %v851 = vpop.f32.mrb[0].mxu0
    %v852 = vpop.f32.mrb[0].mxu0
    %v853 = vadd.f32 0.0, %v852
    %v854 = vpop.f32.mrb[0].mxu0
    %855 = vmatprep.mubr.bf16.mxu0 0
    %856 = vmatmul.mubr.bf16.gmra.mrb[0].mxu0 %v810
    %v857 = vpop.f32.mrb[0].mxu0
    %v858 = vadd.f32 0.0, %v857
    %v859 = vpop.f32.mrb[0].mxu0
    %v860 = vpop.f32.mrb[0].mxu0
    %v861 = vpop.f32.mrb[0].mxu0
    %862 = vdwg.mxu0
    %v866 = vunpack.c.l.b16 %v483
    %v867 = vunpack.c.l.b16 %v484
    %v868 = vunpack.c.l.b16 %v485
    %v869 = vpack.c.b16 %v867, %v866
    %v870 = vpack.c.b16 %v868, %v868
    %v871 = vpack.c.b16 %v520, %v519
    %v872 = vpack.c.b16 %v521, %v521
    %v875 = vsel %vm533, %v869, 0
    %v878 = vsel %vm533, %v870, 0
    %v881 = vsel %vm305, %v872, 0
    %883 = vmatprep.subr.bf16.mxu0 0
    %884 = vmatpush1.bf16.msra.mxu0 %v871
    %885 = vmatprep.subr.bf16.mxu0 0
    %886 = vmatpush1.bf16.msra.mxu0 %v881
    %887 = vmatprep.subr.bf16.mxu0 0
    %888 = vmatpush1.bf16.msra.mxu0 0
    %889 = vmatprep.subr.bf16.mxu0 0
    %890 = vmatpush1.bf16.msra.mxu0 0
    %891 = vmatprep.subr.bf16.mxu0 0
    %892 = vmatpush1.bf16.msra.mxu0 0
    %893 = vmatprep.subr.bf16.mxu0 0
    %894 = vmatpush1.bf16.msra.mxu0 0
    %895 = vmatprep.subr.bf16.mxu0 0
    %896 = vmatpush1.bf16.msra.mxu0 0
    %897 = vmatprep.subr.bf16.mxu0 0
    %898 = vmatpush1.bf16.msra.mxu0 0
    %899 = vmatprep.subr.bf16.mxu0 0
    %900 = vmatpush1.bf16.msra.mxu0 0
    %901 = vmatprep.subr.bf16.mxu0 0
    %902 = vmatpush1.bf16.msra.mxu0 0
    %903 = vmatprep.subr.bf16.mxu0 0
    %904 = vmatpush1.bf16.msra.mxu0 0
    %905 = vmatprep.subr.bf16.mxu0 0
    %906 = vmatpush1.bf16.msra.mxu0 0
    %907 = vmatprep.subr.bf16.mxu0 0
    %908 = vmatpush1.bf16.msra.mxu0 0
    %909 = vmatprep.subr.bf16.mxu0 0
    %910 = vmatpush1.bf16.msra.mxu0 0
    %911 = vmatprep.subr.bf16.mxu0 0
    %912 = vmatpush1.bf16.msra.mxu0 0
    %913 = vmatprep.subr.bf16.mxu0 0
    %914 = vmatpush1.bf16.msra.mxu0 0
    %915 = vmatprep.mubr.bf16.mxu0 0
    %916 = vmatmul.mubr.bf16.gmra.mrb[0].mxu0 %v875
    %v917 = vpop.f32.mrb[0].mxu0
    %v918 = vadd.f32 0.0, %v917
    %v919 = vpop.f32.mrb[0].mxu0
    %v920 = vpop.f32.mrb[0].mxu0
    %v921 = vadd.f32 0.0, %v920
    %v922 = vpop.f32.mrb[0].mxu0
    %923 = vmatprep.mubr.bf16.mxu0 0
    %924 = vmatmul.mubr.bf16.gmra.mrb[0].mxu0 %v878
    %v925 = vpop.f32.mrb[0].mxu0
    %v926 = vadd.f32 0.0, %v925
    %v927 = vpop.f32.mrb[0].mxu0
    %v928 = vpop.f32.mrb[0].mxu0
    %v929 = vpop.f32.mrb[0].mxu0
    %930 = vdwg.mxu0
    %v931 = vld [vmem:[%s8] sm:$0xf]
    %v932 = vld [vmem:[%s8 + $0x4] sm:$0xf]
    %v933 = vld [vmem:[%s8 + $0x8] sm:$0xf]
    %v934 = vld [vmem:[%s8 + $0xc] sm:$0xf]
    %v935 = vpack.c.bf16 %v581, %v578
    %v936 = vpack.c.bf16 %v646, %v586
    %v937 = vpack.c.bf16 %v654, %v649
    %v938 = vpack.c.bf16 %v717, %v714
    %v939 = vpack.c.bf16 %v782, %v722
    %v940 = vpack.c.bf16 %v790, %v785
    %v941 = vpack.c.bf16 %v853, %v850
    %v942 = vpack.c.bf16 %v918, %v858
    %v943 = vpack.c.bf16 %v926, %v921
    %v944 = vld [vmem:[#allocation9] sm:$0x1]
    %v946 = vlaneseq
    %v947 = vshrl.u32 %v946, 7
    %v948 = vsub.s32 0, %v947
    %v949 = vrot.slane %v944, %v948
    %v955 = vunpack.c.l.b16 %v931
    %v956 = vunpack.c.l.b16 %v932
    %v957 = vunpack.c.l.b16 %v933
    %v958 = vunpack.c.l.b16 %v934
    %v959 = vpack.c.b16 %v956, %v955
    %v960 = vpack.c.b16 %v958, %v957
    %vm963 = vcmask 261120
    %v965 = vsel %vm963, %v935, 0
    %v968 = vsel %vm963, %v936, 0
    %v971 = vsel %vm963, %v937, 0
    %v974 = vsel %vm963, %v938, 0
    %v977 = vsel %vm963, %v939, 0
    %v980 = vsel %vm963, %v940, 0
    %v983 = vsel %vm963, %v941, 0
    %v986 = vsel %vm963, %v942, 0
    %v989 = vsel %vm963, %v943, 0
    %991 = vmatprep.subr.bf16.mxu0 0
    %992 = vmatpush1.bf16.msra.mxu0 %v959
    %993 = vmatprep.subr.bf16.mxu0 0
    %994 = vmatpush1.bf16.msra.mxu0 %v960
    %995 = vmatprep.subr.bf16.mxu0 0
    %996 = vmatpush1.bf16.msra.mxu0 0
    %997 = vmatprep.subr.bf16.mxu0 0
    %998 = vmatpush1.bf16.msra.mxu0 0
    %999 = vmatprep.subr.bf16.mxu0 0
    %1000 = vmatpush1.bf16.msra.mxu0 0
    %1001 = vmatprep.subr.bf16.mxu0 0
    %1002 = vmatpush1.bf16.msra.mxu0 0
    %1003 = vmatprep.subr.bf16.mxu0 0
    %1004 = vmatpush1.bf16.msra.mxu0 0
    %1005 = vmatprep.subr.bf16.mxu0 0
    %1006 = vmatpush1.bf16.msra.mxu0 0
    %1007 = vmatprep.subr.bf16.mxu0 0
    %1008 = vmatpush1.bf16.msra.mxu0 0
    %1009 = vmatprep.subr.bf16.mxu0 0
    %1010 = vmatpush1.bf16.msra.mxu0 0
    %1011 = vmatprep.subr.bf16.mxu0 0
    %1012 = vmatpush1.bf16.msra.mxu0 0
    %1013 = vmatprep.subr.bf16.mxu0 0
    %1014 = vmatpush1.bf16.msra.mxu0 0
    %1015 = vmatprep.subr.bf16.mxu0 0
    %1016 = vmatpush1.bf16.msra.mxu0 0
    %1017 = vmatprep.subr.bf16.mxu0 0
    %1018 = vmatpush1.bf16.msra.mxu0 0
    %1019 = vmatprep.subr.bf16.mxu0 0
    %1020 = vmatpush1.bf16.msra.mxu0 0
    %1021 = vmatprep.subr.bf16.mxu0 0
    %1022 = vmatpush1.bf16.msra.mxu0 0
    %1023 = vmatprep.mubr.bf16.mxu0 0
    %1024 = vmatmul.mubr.bf16.gmra.mrb[0].mxu0 %v965
    %v1025 = vpop.f32.mrb[0].mxu0
    %v1026 = vadd.f32 %v949, %v1025
    %v1027 = vpop.f32.mrb[0].mxu0
    %v1028 = vpop.f32.mrb[0].mxu0
    %v1029 = vadd.f32 %v949, %v1028
    %v1030 = vpop.f32.mrb[0].mxu0
    %1031 = vmatprep.mubr.bf16.mxu0 0
    %1032 = vmatmul.mubr.bf16.gmra.mrb[0].mxu0 %v968
    %v1033 = vpop.f32.mrb[0].mxu0
    %v1034 = vadd.f32 %v949, %v1033
    %v1035 = vpop.f32.mrb[0].mxu0
    %v1036 = vpop.f32.mrb[0].mxu0
    %v1037 = vadd.f32 %v949, %v1036
    %v1038 = vpop.f32.mrb[0].mxu0
    %1039 = vmatprep.mubr.bf16.mxu0 0
    %1040 = vmatmul.mubr.bf16.gmra.mrb[0].mxu0 %v971
    %v1041 = vpop.f32.mrb[0].mxu0
    %v1042 = vadd.f32 %v949, %v1041
    %v1043 = vpop.f32.mrb[0].mxu0
    %v1044 = vpop.f32.mrb[0].mxu0
    %v1045 = vadd.f32 %v949, %v1044
    %v1046 = vpop.f32.mrb[0].mxu0
    %1047 = vmatprep.mubr.bf16.mxu0 0
    %1048 = vmatmul.mubr.bf16.gmra.mrb[0].mxu0 %v974
    %v1049 = vpop.f32.mrb[0].mxu0
    %v1050 = vadd.f32 %v949, %v1049
    %v1051 = vpop.f32.mrb[0].mxu0
    %v1052 = vpop.f32.mrb[0].mxu0
    %v1053 = vadd.f32 %v949, %v1052
    %v1054 = vpop.f32.mrb[0].mxu0
    %1055 = vmatprep.mubr.bf16.mxu0 0
    %1056 = vmatmul.mubr.bf16.gmra.mrb[0].mxu0 %v977
    %v1057 = vpop.f32.mrb[0].mxu0
    %v1058 = vadd.f32 %v949, %v1057
    %v1059 = vpop.f32.mrb[0].mxu0
    %v1060 = vpop.f32.mrb[0].mxu0
    %v1061 = vadd.f32 %v949, %v1060
    %v1062 = vpop.f32.mrb[0].mxu0
    %1063 = vmatprep.mubr.bf16.mxu0 0
    %1064 = vmatmul.mubr.bf16.gmra.mrb[0].mxu0 %v980
    %v1065 = vpop.f32.mrb[0].mxu0
    %v1066 = vadd.f32 %v949, %v1065
    %v1067 = vpop.f32.mrb[0].mxu0
    %v1068 = vpop.f32.mrb[0].mxu0
    %v1069 = vadd.f32 %v949, %v1068
    %v1070 = vpop.f32.mrb[0].mxu0
    %1071 = vmatprep.mubr.bf16.mxu0 0
    %1072 = vmatmul.mubr.bf16.gmra.mrb[0].mxu0 %v983
    %v1073 = vpop.f32.mrb[0].mxu0
    %v1074 = vadd.f32 %v949, %v1073
    %v1075 = vpop.f32.mrb[0].mxu0
    %v1076 = vpop.f32.mrb[0].mxu0
    %v1077 = vadd.f32 %v949, %v1076
    %v1078 = vpop.f32.mrb[0].mxu0
    %1079 = vmatprep.mubr.bf16.mxu0 0
    %1080 = vmatmul.mubr.bf16.gmra.mrb[0].mxu0 %v986
    %v1081 = vpop.f32.mrb[0].mxu0
    %v1082 = vadd.f32 %v949, %v1081
    %v1083 = vpop.f32.mrb[0].mxu0
    %v1084 = vpop.f32.mrb[0].mxu0
    %v1085 = vadd.f32 %v949, %v1084
    %v1086 = vpop.f32.mrb[0].mxu0
    %1087 = vmatprep.mubr.bf16.mxu0 0
    %1088 = vmatmul.mubr.bf16.gmra.mrb[0].mxu0 %v989
    %v1089 = vpop.f32.mrb[0].mxu0
    %v1090 = vadd.f32 %v949, %v1089
    %v1091 = vpop.f32.mrb[0].mxu0
    %v1092 = vpop.f32.mrb[0].mxu0
    %v1093 = vadd.f32 %v949, %v1092
    %v1094 = vpop.f32.mrb[0].mxu0
    %1095 = vdwg.mxu0
    %v1096 = vmax.f32 %v1026, 0.0
    %v1097 = vmax.f32 %v1029, 0.0
    %v1098 = vmax.f32 %v1034, 0.0
    %v1099 = vmax.f32 %v1037, 0.0
    %v1100 = vmax.f32 %v1042, 0.0
    %v1101 = vmax.f32 %v1045, 0.0
    %v1102 = vmax.f32 %v1050, 0.0
    %v1103 = vmax.f32 %v1053, 0.0
    %v1104 = vmax.f32 %v1058, 0.0
    %v1105 = vmax.f32 %v1061, 0.0
    %v1106 = vmax.f32 %v1066, 0.0
    %v1107 = vmax.f32 %v1069, 0.0
    %v1108 = vmax.f32 %v1074, 0.0
    %v1109 = vmax.f32 %v1077, 0.0
    %v1110 = vmax.f32 %v1082, 0.0
    %v1111 = vmax.f32 %v1085, 0.0
    %v1112 = vmax.f32 %v1090, 0.0
    %v1113 = vmax.f32 %v1093, 0.0
    %v1114 = vld [vmem:[%s10] sm:$0xf]
    %v1115 = vld [vmem:[%s10 + $0x4] sm:$0xf]
    %v1116 = vld [vmem:[%s10 + $0x8] sm:$0xf]
    %v1117 = vld [vmem:[%s10 + $0xc] sm:$0xf]
    %v1118 = vpack.c.bf16 %v1097, %v1096
    %v1119 = vpack.c.bf16 %v1099, %v1098
    %v1120 = vpack.c.bf16 %v1101, %v1100
    %v1121 = vpack.c.bf16 %v1103, %v1102
    %v1122 = vpack.c.bf16 %v1105, %v1104
    %v1123 = vpack.c.bf16 %v1107, %v1106
    %v1124 = vpack.c.bf16 %v1109, %v1108
    %v1125 = vpack.c.bf16 %v1111, %v1110
    %v1126 = vpack.c.bf16 %v1113, %v1112
    %v1127 = vld [vmem:[#allocation11] sm:$0x1]
    %v1129 = vlaneseq
    %v1130 = vshrl.u32 %v1129, 7
    %v1131 = vsub.s32 0, %v1130
    %v1132 = vrot.slane %v1127, %v1131
    %v1138 = vunpack.c.l.b16 %v1114
    %v1139 = vunpack.c.l.b16 %v1115
    %v1140 = vunpack.c.l.b16 %v1116
    %v1141 = vunpack.c.l.b16 %v1117
    %v1142 = vpack.c.b16 %v1139, %v1138
    %v1143 = vpack.c.b16 %v1141, %v1140
    %v1147 = vsel %vm963, %v1118, 0
    %v1150 = vsel %vm963, %v1119, 0
    %v1153 = vsel %vm963, %v1120, 0
    %v1156 = vsel %vm963, %v1121, 0
    %v1159 = vsel %vm963, %v1122, 0
    %v1162 = vsel %vm963, %v1123, 0
    %v1165 = vsel %vm963, %v1124, 0
    %v1168 = vsel %vm963, %v1125, 0
    %v1171 = vsel %vm963, %v1126, 0
    %1173 = vmatprep.subr.bf16.mxu0 0
    %1174 = vmatpush1.bf16.msra.mxu0 %v1142
    %1175 = vmatprep.subr.bf16.mxu0 0
    %1176 = vmatpush1.bf16.msra.mxu0 %v1143
    %1177 = vmatprep.subr.bf16.mxu0 0
    %1178 = vmatpush1.bf16.msra.mxu0 0
    %1179 = vmatprep.subr.bf16.mxu0 0
    %1180 = vmatpush1.bf16.msra.mxu0 0
    %1181 = vmatprep.subr.bf16.mxu0 0
    %1182 = vmatpush1.bf16.msra.mxu0 0
    %1183 = vmatprep.subr.bf16.mxu0 0
    %1184 = vmatpush1.bf16.msra.mxu0 0
    %1185 = vmatprep.subr.bf16.mxu0 0
    %1186 = vmatpush1.bf16.msra.mxu0 0
    %1187 = vmatprep.subr.bf16.mxu0 0
    %1188 = vmatpush1.bf16.msra.mxu0 0
    %1189 = vmatprep.subr.bf16.mxu0 0
    %1190 = vmatpush1.bf16.msra.mxu0 0
    %1191 = vmatprep.subr.bf16.mxu0 0
    %1192 = vmatpush1.bf16.msra.mxu0 0
    %1193 = vmatprep.subr.bf16.mxu0 0
    %1194 = vmatpush1.bf16.msra.mxu0 0
    %1195 = vmatprep.subr.bf16.mxu0 0
    %1196 = vmatpush1.bf16.msra.mxu0 0
    %1197 = vmatprep.subr.bf16.mxu0 0
    %1198 = vmatpush1.bf16.msra.mxu0 0
    %1199 = vmatprep.subr.bf16.mxu0 0
    %1200 = vmatpush1.bf16.msra.mxu0 0
    %1201 = vmatprep.subr.bf16.mxu0 0
    %1202 = vmatpush1.bf16.msra.mxu0 0
    %1203 = vmatprep.subr.bf16.mxu0 0
    %1204 = vmatpush1.bf16.msra.mxu0 0
    %1205 = vmatprep.mubr.bf16.mxu0 0
    %1206 = vmatmul.mubr.bf16.gmra.mrb[0].mxu0 %v1147
    %v1207 = vpop.f32.mrb[0].mxu0
    %v1208 = vadd.f32 %v1132, %v1207
    %v1209 = vpop.f32.mrb[0].mxu0
    %v1210 = vpop.f32.mrb[0].mxu0
    %v1211 = vadd.f32 %v1132, %v1210
    %v1212 = vpop.f32.mrb[0].mxu0
    %1213 = vmatprep.mubr.bf16.mxu0 0
    %1214 = vmatmul.mubr.bf16.gmra.mrb[0].mxu0 %v1150
    %v1215 = vpop.f32.mrb[0].mxu0
    %v1216 = vadd.f32 %v1132, %v1215
    %v1217 = vpop.f32.mrb[0].mxu0
    %v1218 = vpop.f32.mrb[0].mxu0
    %v1219 = vadd.f32 %v1132, %v1218
    %v1220 = vpop.f32.mrb[0].mxu0
    %1221 = vmatprep.mubr.bf16.mxu0 0
    %1222 = vmatmul.mubr.bf16.gmra.mrb[0].mxu0 %v1153
    %v1223 = vpop.f32.mrb[0].mxu0
    %v1224 = vadd.f32 %v1132, %v1223
    %v1225 = vpop.f32.mrb[0].mxu0
    %v1226 = vpop.f32.mrb[0].mxu0
    %v1227 = vadd.f32 %v1132, %v1226
    %v1228 = vpop.f32.mrb[0].mxu0
    %1229 = vmatprep.mubr.bf16.mxu0 0
    %1230 = vmatmul.mubr.bf16.gmra.mrb[0].mxu0 %v1156
    %v1231 = vpop.f32.mrb[0].mxu0
    %v1232 = vadd.f32 %v1132, %v1231
    %v1233 = vpop.f32.mrb[0].mxu0
    %v1234 = vpop.f32.mrb[0].mxu0
    %v1235 = vadd.f32 %v1132, %v1234
    %v1236 = vpop.f32.mrb[0].mxu0
    %1237 = vmatprep.mubr.bf16.mxu0 0
    %1238 = vmatmul.mubr.bf16.gmra.mrb[0].mxu0 %v1159
    %v1239 = vpop.f32.mrb[0].mxu0
    %v1240 = vadd.f32 %v1132, %v1239
    %v1241 = vpop.f32.mrb[0].mxu0
    %v1242 = vpop.f32.mrb[0].mxu0
    %v1243 = vadd.f32 %v1132, %v1242
    %v1244 = vpop.f32.mrb[0].mxu0
    %1245 = vmatprep.mubr.bf16.mxu0 0
    %1246 = vmatmul.mubr.bf16.gmra.mrb[0].mxu0 %v1162
    %v1247 = vpop.f32.mrb[0].mxu0
    %v1248 = vadd.f32 %v1132, %v1247
    %v1249 = vpop.f32.mrb[0].mxu0
    %v1250 = vpop.f32.mrb[0].mxu0
    %v1251 = vadd.f32 %v1132, %v1250
    %v1252 = vpop.f32.mrb[0].mxu0
    %1253 = vmatprep.mubr.bf16.mxu0 0
    %1254 = vmatmul.mubr.bf16.gmra.mrb[0].mxu0 %v1165
    %v1255 = vpop.f32.mrb[0].mxu0
    %v1256 = vadd.f32 %v1132, %v1255
    %v1257 = vpop.f32.mrb[0].mxu0
    %v1258 = vpop.f32.mrb[0].mxu0
    %v1259 = vadd.f32 %v1132, %v1258
    %v1260 = vpop.f32.mrb[0].mxu0
    %1261 = vmatprep.mubr.bf16.mxu0 0
    %1262 = vmatmul.mubr.bf16.gmra.mrb[0].mxu0 %v1168
    %v1263 = vpop.f32.mrb[0].mxu0
    %v1264 = vadd.f32 %v1132, %v1263
    %v1265 = vpop.f32.mrb[0].mxu0
    %v1266 = vpop.f32.mrb[0].mxu0
    %v1267 = vadd.f32 %v1132, %v1266
    %v1268 = vpop.f32.mrb[0].mxu0
    %1269 = vmatprep.mubr.bf16.mxu0 0
    %1270 = vmatmul.mubr.bf16.gmra.mrb[0].mxu0 %v1171
    %v1271 = vpop.f32.mrb[0].mxu0
    %v1272 = vadd.f32 %v1132, %v1271
    %v1273 = vpop.f32.mrb[0].mxu0
    %v1274 = vpop.f32.mrb[0].mxu0
    %v1275 = vadd.f32 %v1132, %v1274
    %v1276 = vpop.f32.mrb[0].mxu0
    %1277 = vdwg.mxu0
    %v1278 = vsel %vm963, %v1208, 0.0
    %1279 = vadd.xlane.f32.xlu0 %v1278
    %v1280 = vpop.xlane.xlu0 %1279
    %v1281 = vsel %vm963, %v1211, 0.0
    %1282 = vadd.xlane.f32.xlu0 %v1281
    %v1283 = vpop.xlane.xlu0 %1282
    %v1284 = vsel %vm963, %v1216, 0.0
    %1285 = vadd.xlane.f32.xlu0 %v1284
    %v1286 = vpop.xlane.xlu0 %1285
    %v1287 = vsel %vm963, %v1219, 0.0
    %1288 = vadd.xlane.f32.xlu0 %v1287
    %v1289 = vpop.xlane.xlu0 %1288
    %v1290 = vsel %vm963, %v1224, 0.0
    %1291 = vadd.xlane.f32.xlu0 %v1290
    %v1292 = vpop.xlane.xlu0 %1291
    %v1293 = vsel %vm963, %v1227, 0.0
    %1294 = vadd.xlane.f32.xlu0 %v1293
    %v1295 = vpop.xlane.xlu0 %1294
    %v1296 = vsel %vm963, %v1232, 0.0
    %1297 = vadd.xlane.f32.xlu0 %v1296
    %v1298 = vpop.xlane.xlu0 %1297
    %v1299 = vsel %vm963, %v1235, 0.0
    %1300 = vadd.xlane.f32.xlu0 %v1299
    %v1301 = vpop.xlane.xlu0 %1300
    %v1302 = vsel %vm963, %v1240, 0.0
    %1303 = vadd.xlane.f32.xlu0 %v1302
    %v1304 = vpop.xlane.xlu0 %1303
    %v1305 = vsel %vm963, %v1243, 0.0
    %1306 = vadd.xlane.f32.xlu0 %v1305
    %v1307 = vpop.xlane.xlu0 %1306
    %v1308 = vsel %vm963, %v1248, 0.0
    %1309 = vadd.xlane.f32.xlu0 %v1308
    %v1310 = vpop.xlane.xlu0 %1309
    %v1311 = vsel %vm963, %v1251, 0.0
    %1312 = vadd.xlane.f32.xlu0 %v1311
    %v1313 = vpop.xlane.xlu0 %1312
    %v1314 = vsel %vm963, %v1256, 0.0
    %1315 = vadd.xlane.f32.xlu0 %v1314
    %v1316 = vpop.xlane.xlu0 %1315
    %v1317 = vsel %vm963, %v1259, 0.0
    %1318 = vadd.xlane.f32.xlu0 %v1317
    %v1319 = vpop.xlane.xlu0 %1318
    %v1320 = vsel %vm963, %v1264, 0.0
    %1321 = vadd.xlane.f32.xlu0 %v1320
    %v1322 = vpop.xlane.xlu0 %1321
    %v1323 = vsel %vm963, %v1267, 0.0
    %1324 = vadd.xlane.f32.xlu0 %v1323
    %v1325 = vpop.xlane.xlu0 %1324
    %v1326 = vsel %vm963, %v1272, 0.0
    %1327 = vadd.xlane.f32.xlu0 %v1326
    %v1328 = vpop.xlane.xlu0 %1327
    %v1329 = vsel %vm963, %v1275, 0.0
    %1330 = vadd.xlane.f32.xlu0 %v1329
    %v1331 = vpop.xlane.xlu0 %1330
    %v1332 = vrcp.pop 32.0
    %v1333 = vmul.f32 %v1280, %v1332
    %v1334 = vmul.f32 %v1283, %v1332
    %v1335 = vmul.f32 %v1286, %v1332
    %v1336 = vmul.f32 %v1289, %v1332
    %v1337 = vmul.f32 %v1292, %v1332
    %v1338 = vmul.f32 %v1295, %v1332
    %v1339 = vmul.f32 %v1298, %v1332
    %v1340 = vmul.f32 %v1301, %v1332
    %v1341 = vmul.f32 %v1304, %v1332
    %v1342 = vmul.f32 %v1307, %v1332
    %v1343 = vmul.f32 %v1310, %v1332
    %v1344 = vmul.f32 %v1313, %v1332
    %v1345 = vmul.f32 %v1316, %v1332
    %v1346 = vmul.f32 %v1319, %v1332
    %v1347 = vmul.f32 %v1322, %v1332
    %v1348 = vmul.f32 %v1325, %v1332
    %v1349 = vmul.f32 %v1328, %v1332
    %v1350 = vmul.f32 %v1331, %v1332
    %v1351 = vmul.f32 %v1208, %v1208
    %v1352 = vmul.f32 %v1211, %v1211
    %v1353 = vmul.f32 %v1216, %v1216
    %v1354 = vmul.f32 %v1219, %v1219
    %v1355 = vmul.f32 %v1224, %v1224
    %v1356 = vmul.f32 %v1227, %v1227
    %v1357 = vmul.f32 %v1232, %v1232
    %v1358 = vmul.f32 %v1235, %v1235
    %v1359 = vmul.f32 %v1240, %v1240
    %v1360 = vmul.f32 %v1243, %v1243
    %v1361 = vmul.f32 %v1248, %v1248
    %v1362 = vmul.f32 %v1251, %v1251
    %v1363 = vmul.f32 %v1256, %v1256
    %v1364 = vmul.f32 %v1259, %v1259
    %v1365 = vmul.f32 %v1264, %v1264
    %v1366 = vmul.f32 %v1267, %v1267
    %v1367 = vmul.f32 %v1272, %v1272
    %v1368 = vmul.f32 %v1275, %v1275
    %v1369 = vsel %vm963, %v1351, 0.0
    %1370 = vadd.xlane.f32.xlu0 %v1369
    %v1371 = vpop.xlane.xlu0 %1370
    %v1372 = vsel %vm963, %v1352, 0.0
    %1373 = vadd.xlane.f32.xlu0 %v1372
    %v1374 = vpop.xlane.xlu0 %1373
    %v1375 = vsel %vm963, %v1353, 0.0
    %1376 = vadd.xlane.f32.xlu0 %v1375
    %v1377 = vpop.xlane.xlu0 %1376
    %v1378 = vsel %vm963, %v1354, 0.0
    %1379 = vadd.xlane.f32.xlu0 %v1378
    %v1380 = vpop.xlane.xlu0 %1379
    %v1381 = vsel %vm963, %v1355, 0.0
    %1382 = vadd.xlane.f32.xlu0 %v1381
    %v1383 = vpop.xlane.xlu0 %1382
    %v1384 = vsel %vm963, %v1356, 0.0
    %1385 = vadd.xlane.f32.xlu0 %v1384
    %v1386 = vpop.xlane.xlu0 %1385
    %v1387 = vsel %vm963, %v1357, 0.0
    %1388 = vadd.xlane.f32.xlu0 %v1387
    %v1389 = vpop.xlane.xlu0 %1388
    %v1390 = vsel %vm963, %v1358, 0.0
    %1391 = vadd.xlane.f32.xlu0 %v1390
    %v1392 = vpop.xlane.xlu0 %1391
    %v1393 = vsel %vm963, %v1359, 0.0
    %1394 = vadd.xlane.f32.xlu0 %v1393
    %v1395 = vpop.xlane.xlu0 %1394
    %v1396 = vsel %vm963, %v1360, 0.0
    %1397 = vadd.xlane.f32.xlu0 %v1396
    %v1398 = vpop.xlane.xlu0 %1397
    %v1399 = vsel %vm963, %v1361, 0.0
    %1400 = vadd.xlane.f32.xlu0 %v1399
    %v1401 = vpop.xlane.xlu0 %1400
    %v1402 = vsel %vm963, %v1362, 0.0
    %1403 = vadd.xlane.f32.xlu0 %v1402
    %v1404 = vpop.xlane.xlu0 %1403
    %v1405 = vsel %vm963, %v1363, 0.0
    %1406 = vadd.xlane.f32.xlu0 %v1405
    %v1407 = vpop.xlane.xlu0 %1406
    %v1408 = vsel %vm963, %v1364, 0.0
    %1409 = vadd.xlane.f32.xlu0 %v1408
    %v1410 = vpop.xlane.xlu0 %1409
    %v1411 = vsel %vm963, %v1365, 0.0
    %1412 = vadd.xlane.f32.xlu0 %v1411
    %v1413 = vpop.xlane.xlu0 %1412
    %v1414 = vsel %vm963, %v1366, 0.0
    %1415 = vadd.xlane.f32.xlu0 %v1414
    %v1416 = vpop.xlane.xlu0 %1415
    %v1417 = vsel %vm963, %v1367, 0.0
    %1418 = vadd.xlane.f32.xlu0 %v1417
    %v1419 = vpop.xlane.xlu0 %1418
    %v1420 = vsel %vm963, %v1368, 0.0
    %1421 = vadd.xlane.f32.xlu0 %v1420
    %v1422 = vpop.xlane.xlu0 %1421
    %v1423 = vmul.f32 %v1371, %v1332
    %v1424 = vmul.f32 %v1374, %v1332
    %v1425 = vmul.f32 %v1377, %v1332
    %v1426 = vmul.f32 %v1380, %v1332
    %v1427 = vmul.f32 %v1383, %v1332
    %v1428 = vmul.f32 %v1386, %v1332
    %v1429 = vmul.f32 %v1389, %v1332
    %v1430 = vmul.f32 %v1392, %v1332
    %v1431 = vmul.f32 %v1395, %v1332
    %v1432 = vmul.f32 %v1398, %v1332
    %v1433 = vmul.f32 %v1401, %v1332
    %v1434 = vmul.f32 %v1404, %v1332
    %v1435 = vmul.f32 %v1407, %v1332
    %v1436 = vmul.f32 %v1410, %v1332
    %v1437 = vmul.f32 %v1413, %v1332
    %v1438 = vmul.f32 %v1416, %v1332
    %v1439 = vmul.f32 %v1419, %v1332
    %v1440 = vmul.f32 %v1422, %v1332
    %v1441 = vmul.f32 %v1333, %v1333
    %v1442 = vmul.f32 %v1334, %v1334
    %v1443 = vmul.f32 %v1335, %v1335
    %v1444 = vmul.f32 %v1336, %v1336
    %v1445 = vmul.f32 %v1337, %v1337
    %v1446 = vmul.f32 %v1338, %v1338
    %v1447 = vmul.f32 %v1339, %v1339
    %v1448 = vmul.f32 %v1340, %v1340
    %v1449 = vmul.f32 %v1341, %v1341
    %v1450 = vmul.f32 %v1342, %v1342
    %v1451 = vmul.f32 %v1343, %v1343
    %v1452 = vmul.f32 %v1344, %v1344
    %v1453 = vmul.f32 %v1345, %v1345
    %v1454 = vmul.f32 %v1346, %v1346
    %v1455 = vmul.f32 %v1347, %v1347
    %v1456 = vmul.f32 %v1348, %v1348
    %v1457 = vmul.f32 %v1349, %v1349
    %v1458 = vmul.f32 %v1350, %v1350
    %v1459 = vsub.f32 %v1423, %v1441
    %v1460 = vsub.f32 %v1424, %v1442
    %v1461 = vsub.f32 %v1425, %v1443
    %v1462 = vsub.f32 %v1426, %v1444
    %v1463 = vsub.f32 %v1427, %v1445
    %v1464 = vsub.f32 %v1428, %v1446
    %v1465 = vsub.f32 %v1429, %v1447
    %v1466 = vsub.f32 %v1430, %v1448
    %v1467 = vsub.f32 %v1431, %v1449
    %v1468 = vsub.f32 %v1432, %v1450
    %v1469 = vsub.f32 %v1433, %v1451
    %v1470 = vsub.f32 %v1434, %v1452
    %v1471 = vsub.f32 %v1435, %v1453
    %v1472 = vsub.f32 %v1436, %v1454
    %v1473 = vsub.f32 %v1437, %v1455
    %v1474 = vsub.f32 %v1438, %v1456
    %v1475 = vsub.f32 %v1439, %v1457
    %v1476 = vsub.f32 %v1440, %v1458
    %v1477 = vsub.f32 %v1208, %v1333
    %v1478 = vsub.f32 %v1211, %v1334
    %v1479 = vsub.f32 %v1216, %v1335
    %v1480 = vsub.f32 %v1219, %v1336
    %v1481 = vsub.f32 %v1224, %v1337
    %v1482 = vsub.f32 %v1227, %v1338
    %v1483 = vsub.f32 %v1232, %v1339
    %v1484 = vsub.f32 %v1235, %v1340
    %v1485 = vsub.f32 %v1240, %v1341
    %v1486 = vsub.f32 %v1243, %v1342
    %v1487 = vsub.f32 %v1248, %v1343
    %v1488 = vsub.f32 %v1251, %v1344
    %v1489 = vsub.f32 %v1256, %v1345
    %v1490 = vsub.f32 %v1259, %v1346
    %v1491 = vsub.f32 %v1264, %v1347
    %v1492 = vsub.f32 %v1267, %v1348
    %v1493 = vsub.f32 %v1272, %v1349
    %v1494 = vsub.f32 %v1275, %v1350
    %v1495 = vadd.f32 %v1459, 1e-05
    %v1496 = vadd.f32 %v1460, 1e-05
    %v1497 = vadd.f32 %v1461, 1e-05
    %v1498 = vadd.f32 %v1462, 1e-05
    %v1499 = vadd.f32 %v1463, 1e-05
    %v1500 = vadd.f32 %v1464, 1e-05
    %v1501 = vadd.f32 %v1465, 1e-05
    %v1502 = vadd.f32 %v1466, 1e-05
    %v1503 = vadd.f32 %v1467, 1e-05
    %v1504 = vadd.f32 %v1468, 1e-05
    %v1505 = vadd.f32 %v1469, 1e-05
    %v1506 = vadd.f32 %v1470, 1e-05
    %v1507 = vadd.f32 %v1471, 1e-05
    %v1508 = vadd.f32 %v1472, 1e-05
    %v1509 = vadd.f32 %v1473, 1e-05
    %v1510 = vadd.f32 %v1474, 1e-05
    %v1511 = vadd.f32 %v1475, 1e-05
    %v1512 = vadd.f32 %v1476, 1e-05
    %v1513 = vrsqrt.pop %v1495
    %v1514 = vrsqrt.pop %v1496
    %v1515 = vrsqrt.pop %v1497
    %v1516 = vrsqrt.pop %v1498
    %v1517 = vrsqrt.pop %v1499
    %v1518 = vrsqrt.pop %v1500
    %v1519 = vrsqrt.pop %v1501
    %v1520 = vrsqrt.pop %v1502
    %v1521 = vrsqrt.pop %v1503
    %v1522 = vrsqrt.pop %v1504
    %v1523 = vrsqrt.pop %v1505
    %v1524 = vrsqrt.pop %v1506
    %v1525 = vrsqrt.pop %v1507
    %v1526 = vrsqrt.pop %v1508
    %v1527 = vrsqrt.pop %v1509
    %v1528 = vrsqrt.pop %v1510
    %v1529 = vrsqrt.pop %v1511
    %v1530 = vrsqrt.pop %v1512
    %v1531 = vmul.f32 %v1477, %v1513
    %v1532 = vmul.f32 %v1478, %v1514
    %v1533 = vmul.f32 %v1479, %v1515
    %v1534 = vmul.f32 %v1480, %v1516
    %v1535 = vmul.f32 %v1481, %v1517
    %v1536 = vmul.f32 %v1482, %v1518
    %v1537 = vmul.f32 %v1483, %v1519
    %v1538 = vmul.f32 %v1484, %v1520
    %v1539 = vmul.f32 %v1485, %v1521
    %v1540 = vmul.f32 %v1486, %v1522
    %v1541 = vmul.f32 %v1487, %v1523
    %v1542 = vmul.f32 %v1488, %v1524
    %v1543 = vmul.f32 %v1489, %v1525
    %v1544 = vmul.f32 %v1490, %v1526
    %v1545 = vmul.f32 %v1491, %v1527
    %v1546 = vmul.f32 %v1492, %v1528
    %v1547 = vmul.f32 %v1493, %v1529
    %v1548 = vmul.f32 %v1494, %v1530
    %v1549 = vld [vmem:[%s12] sm:$0x1]
    %v1551 = vlaneseq
    %v1552 = vshrl.u32 %v1551, 7
    %v1553 = vsub.s32 0, %v1552
    %v1554 = vrot.slane %v1549, %v1553
    %v1556 = vmul.f32 %v1531, %v1554
    %v1557 = vmul.f32 %v1532, %v1554
    %v1558 = vmul.f32 %v1533, %v1554
    %v1559 = vmul.f32 %v1534, %v1554
    %v1560 = vmul.f32 %v1535, %v1554
    %v1561 = vmul.f32 %v1536, %v1554
    %v1562 = vmul.f32 %v1537, %v1554
    %v1563 = vmul.f32 %v1538, %v1554
    %v1564 = vmul.f32 %v1539, %v1554
    %v1565 = vmul.f32 %v1540, %v1554
    %v1566 = vmul.f32 %v1541, %v1554
    %v1567 = vmul.f32 %v1542, %v1554
    %v1568 = vmul.f32 %v1543, %v1554
    %v1569 = vmul.f32 %v1544, %v1554
    %v1570 = vmul.f32 %v1545, %v1554
    %v1571 = vmul.f32 %v1546, %v1554
    %v1572 = vmul.f32 %v1547, %v1554
    %v1573 = vmul.f32 %v1548, %v1554
    %v1574 = vld [vmem:[%s13] sm:$0x1]
    %v1576 = vlaneseq
    %v1577 = vshrl.u32 %v1576, 7
    %v1578 = vsub.s32 0, %v1577
    %v1579 = vrot.slane %v1574, %v1578
    %v1581 = vadd.f32 %v1556, %v1579
    %v1582 = vadd.f32 %v1557, %v1579
    %v1583 = vadd.f32 %v1558, %v1579
    %v1584 = vadd.f32 %v1559, %v1579
    %v1585 = vadd.f32 %v1560, %v1579
    %v1586 = vadd.f32 %v1561, %v1579
    %v1587 = vadd.f32 %v1562, %v1579
    %v1588 = vadd.f32 %v1563, %v1579
    %v1589 = vadd.f32 %v1564, %v1579
    %v1590 = vadd.f32 %v1565, %v1579
    %v1591 = vadd.f32 %v1566, %v1579
    %v1592 = vadd.f32 %v1567, %v1579
    %v1593 = vadd.f32 %v1568, %v1579
    %v1594 = vadd.f32 %v1569, %v1579
    %v1595 = vadd.f32 %v1570, %v1579
    %v1596 = vadd.f32 %v1571, %v1579
    %v1597 = vadd.f32 %v1572, %v1579
    %v1598 = vadd.f32 %v1573, %v1579
    %v1599 = vmax.f32 %v1581, 0.0
    %v1600 = vmax.f32 %v1582, 0.0
    %v1601 = vmax.f32 %v1583, 0.0
    %v1602 = vmax.f32 %v1584, 0.0
    %v1603 = vmax.f32 %v1585, 0.0
    %v1604 = vmax.f32 %v1586, 0.0
    %v1605 = vmax.f32 %v1587, 0.0
    %v1606 = vmax.f32 %v1588, 0.0
    %v1607 = vmax.f32 %v1589, 0.0
    %v1608 = vmax.f32 %v1590, 0.0
    %v1609 = vmax.f32 %v1591, 0.0
    %v1610 = vmax.f32 %v1592, 0.0
    %v1611 = vmax.f32 %v1593, 0.0
    %v1612 = vmax.f32 %v1594, 0.0
    %v1613 = vmax.f32 %v1595, 0.0
    %v1614 = vmax.f32 %v1596, 0.0
    %v1615 = vmax.f32 %v1597, 0.0
    %v1616 = vmax.f32 %v1598, 0.0
    %v1617 = vadd.f32 %v450, %v1599
    %v1618 = vadd.f32 %v451, %v1600
    %v1619 = vadd.f32 %v452, %v1601
    %v1620 = vadd.f32 %v453, %v1602
    %v1621 = vadd.f32 %v454, %v1603
    %v1622 = vadd.f32 %v455, %v1604
    %v1623 = vadd.f32 %v456, %v1605
    %v1624 = vadd.f32 %v457, %v1606
    %v1625 = vadd.f32 %v458, %v1607
    %v1626 = vadd.f32 %v459, %v1608
    %v1627 = vadd.f32 %v460, %v1609
    %v1628 = vadd.f32 %v461, %v1610
    %v1629 = vadd.f32 %v462, %v1611
    %v1630 = vadd.f32 %v463, %v1612
    %v1631 = vadd.f32 %v464, %v1613
    %v1632 = vadd.f32 %v465, %v1614
    %v1633 = vadd.f32 %v466, %v1615
    %v1634 = vadd.f32 %v467, %v1616
    %v1635 = vpack.c.bf16 %v1618, %v1617
    %v1636 = vpack.c.bf16 %v1620, %v1619
    %v1637 = vpack.c.bf16 %v1622, %v1621
    %v1638 = vpack.c.bf16 %v1624, %v1623
    %v1639 = vpack.c.bf16 %v1626, %v1625
    %v1640 = vpack.c.bf16 %v1628, %v1627
    %v1641 = vpack.c.bf16 %v1630, %v1629
    %v1642 = vpack.c.bf16 %v1632, %v1631
    %v1643 = vpack.c.bf16 %v1634, %v1633
    %v1653 = vunpack.c.l.b16 %v1635
    %v1654 = vunpack.c.h.b16 %v1635
    %v1655 = vunpack.c.l.b16 %v1636
    %v1656 = vunpack.c.h.b16 %v1636
    %v1657 = vunpack.c.l.b16 %v1637
    %v1658 = vunpack.c.h.b16 %v1637
    %v1659 = vunpack.c.l.b16 %v1638
    %v1660 = vunpack.c.h.b16 %v1638
    %v1661 = vunpack.c.l.b16 %v1639
    %v1662 = vunpack.c.h.b16 %v1639
    %v1663 = vunpack.c.l.b16 %v1640
    %v1664 = vunpack.c.h.b16 %v1640
    %v1665 = vunpack.c.l.b16 %v1641
    %v1666 = vunpack.c.h.b16 %v1641
    %v1667 = vunpack.c.l.b16 %v1642
    %v1668 = vunpack.c.h.b16 %v1642
    %v1669 = vunpack.c.l.b16 %v1643
    %v1670 = vunpack.c.h.b16 %v1643
    %v1671 = vpack.c.b16 %v1654, %v1653
    %v1672 = vpack.c.b16 %v1655, %v1655
    %v1675 = vsel %vm305, %v1672, 0
    %1677 = vmatprep.subr.bf16.mxu0 0
    %1678 = vmatpush1.bf16.msra.mxu0 %v1671
    %1679 = vmatprep.subr.bf16.mxu0 0
    %1680 = vmatpush1.bf16.msra.mxu0 %v1675
    %1681 = vmatprep.subr.bf16.mxu0 0
    %1682 = vmatpush1.bf16.msra.mxu0 0
    %1683 = vmatprep.subr.bf16.mxu0 0
    %1684 = vmatpush1.bf16.msra.mxu0 0
    %1685 = vmatprep.subr.bf16.mxu0 0
    %1686 = vmatpush1.bf16.msra.mxu0 0
    %1687 = vmatprep.subr.bf16.mxu0 0
    %1688 = vmatpush1.bf16.msra.mxu0 0
    %1689 = vmatprep.subr.bf16.mxu0 0
    %1690 = vmatpush1.bf16.msra.mxu0 0
    %1691 = vmatprep.subr.bf16.mxu0 0
    %1692 = vmatpush1.bf16.msra.mxu0 0
    %1693 = vmatprep.subr.bf16.mxu0 0
    %1694 = vmatpush1.bf16.msra.mxu0 0
    %1695 = vmatprep.subr.bf16.mxu0 0
    %1696 = vmatpush1.bf16.msra.mxu0 0
    %1697 = vmatprep.subr.bf16.mxu0 0
    %1698 = vmatpush1.bf16.msra.mxu0 0
    %1699 = vmatprep.subr.bf16.mxu0 0
    %1700 = vmatpush1.bf16.msra.mxu0 0
    %1701 = vmatprep.subr.bf16.mxu0 0
    %1702 = vmatpush1.bf16.msra.mxu0 0
    %1703 = vmatprep.subr.bf16.mxu0 0
    %1704 = vmatpush1.bf16.msra.mxu0 0
    %1705 = vmatprep.subr.bf16.mxu0 0
    %1706 = vmatpush1.bf16.msra.mxu0 0
    %1707 = vmatprep.subr.bf16.mxu0 0
    %1708 = vmatpush1.bf16.msra.mxu0 0
    %1709 = vmatprep.mubr.bf16.mxu0 0
    %1710 = vmatmul.mubr.bf16.gmra.mrb[0].mxu0 %v535
    %v1711 = vpop.f32.mrb[0].mxu0
    %v1712 = vadd.f32 0.0, %v1711
    %v1713 = vpop.f32.mrb[0].mxu0
    %v1714 = vpop.f32.mrb[0].mxu0
    %v1715 = vadd.f32 0.0, %v1714
    %v1716 = vpop.f32.mrb[0].mxu0
    %1717 = vmatprep.mubr.bf16.mxu0 0
    %1718 = vmatmul.mubr.bf16.gmra.mrb[0].mxu0 %v538
    %v1719 = vpop.f32.mrb[0].mxu0
    %v1720 = vadd.f32 0.0, %v1719
    %v1721 = vpop.f32.mrb[0].mxu0
    %v1722 = vpop.f32.mrb[0].mxu0
    %v1723 = vpop.f32.mrb[0].mxu0
    %1724 = vdwg.mxu0
    %v1725 = vpack.c.b16 %v1657, %v1656
    %v1726 = vpack.c.b16 %v1658, %v1658
    %v1729 = vsel %vm305, %v1726, 0
    %1731 = vmatprep.subr.bf16.mxu0 0
    %1732 = vmatpush1.bf16.msra.mxu0 %v1725
    %1733 = vmatprep.subr.bf16.mxu0 0
    %1734 = vmatpush1.bf16.msra.mxu0 %v1729
    %1735 = vmatprep.subr.bf16.mxu0 0
    %1736 = vmatpush1.bf16.msra.mxu0 0
    %1737 = vmatprep.subr.bf16.mxu0 0
    %1738 = vmatpush1.bf16.msra.mxu0 0
    %1739 = vmatprep.subr.bf16.mxu0 0
    %1740 = vmatpush1.bf16.msra.mxu0 0
    %1741 = vmatprep.subr.bf16.mxu0 0
    %1742 = vmatpush1.bf16.msra.mxu0 0
    %1743 = vmatprep.subr.bf16.mxu0 0
    %1744 = vmatpush1.bf16.msra.mxu0 0
    %1745 = vmatprep.subr.bf16.mxu0 0
    %1746 = vmatpush1.bf16.msra.mxu0 0
    %1747 = vmatprep.subr.bf16.mxu0 0
    %1748 = vmatpush1.bf16.msra.mxu0 0
    %1749 = vmatprep.subr.bf16.mxu0 0
    %1750 = vmatpush1.bf16.msra.mxu0 0
    %1751 = vmatprep.subr.bf16.mxu0 0
    %1752 = vmatpush1.bf16.msra.mxu0 0
    %1753 = vmatprep.subr.bf16.mxu0 0
    %1754 = vmatpush1.bf16.msra.mxu0 0
    %1755 = vmatprep.subr.bf16.mxu0 0
    %1756 = vmatpush1.bf16.msra.mxu0 0
    %1757 = vmatprep.subr.bf16.mxu0 0
    %1758 = vmatpush1.bf16.msra.mxu0 0
    %1759 = vmatprep.subr.bf16.mxu0 0
    %1760 = vmatpush1.bf16.msra.mxu0 0
    %1761 = vmatprep.subr.bf16.mxu0 0
    %1762 = vmatpush1.bf16.msra.mxu0 0
    %1763 = vmatprep.mubr.bf16.mxu0 0
    %1764 = vmatmul.mubr.bf16.gmra.mrb[0].mxu0 %v603
    %v1765 = vpop.f32.mrb[0].mxu0
    %v1766 = vadd.f32 0.0, %v1765
    %v1767 = vpop.f32.mrb[0].mxu0
    %v1768 = vpop.f32.mrb[0].mxu0
    %v1769 = vadd.f32 0.0, %v1768
    %v1770 = vpop.f32.mrb[0].mxu0
    %1771 = vmatprep.mubr.bf16.mxu0 0
    %1772 = vmatmul.mubr.bf16.gmra.mrb[0].mxu0 %v606
    %v1773 = vpop.f32.mrb[0].mxu0
    %v1774 = vadd.f32 0.0, %v1773
    %v1775 = vpop.f32.mrb[0].mxu0
    %v1776 = vpop.f32.mrb[0].mxu0
    %v1777 = vpop.f32.mrb[0].mxu0
    %1778 = vdwg.mxu0
    %v1779 = vpack.c.b16 %v1660, %v1659
    %v1780 = vpack.c.b16 %v1661, %v1661
    %v1783 = vsel %vm305, %v1780, 0
    %1785 = vmatprep.subr.bf16.mxu0 0
    %1786 = vmatpush1.bf16.msra.mxu0 %v1779
    %1787 = vmatprep.subr.bf16.mxu0 0
    %1788 = vmatpush1.bf16.msra.mxu0 %v1783
    %1789 = vmatprep.subr.bf16.mxu0 0
    %1790 = vmatpush1.bf16.msra.mxu0 0
    %1791 = vmatprep.subr.bf16.mxu0 0
    %1792 = vmatpush1.bf16.msra.mxu0 0
    %1793 = vmatprep.subr.bf16.mxu0 0
    %1794 = vmatpush1.bf16.msra.mxu0 0
    %1795 = vmatprep.subr.bf16.mxu0 0
    %1796 = vmatpush1.bf16.msra.mxu0 0
    %1797 = vmatprep.subr.bf16.mxu0 0
    %1798 = vmatpush1.bf16.msra.mxu0 0
    %1799 = vmatprep.subr.bf16.mxu0 0
    %1800 = vmatpush1.bf16.msra.mxu0 0
    %1801 = vmatprep.subr.bf16.mxu0 0
    %1802 = vmatpush1.bf16.msra.mxu0 0
    %1803 = vmatprep.subr.bf16.mxu0 0
    %1804 = vmatpush1.bf16.msra.mxu0 0
    %1805 = vmatprep.subr.bf16.mxu0 0
    %1806 = vmatpush1.bf16.msra.mxu0 0
    %1807 = vmatprep.subr.bf16.mxu0 0
    %1808 = vmatpush1.bf16.msra.mxu0 0
    %1809 = vmatprep.subr.bf16.mxu0 0
    %1810 = vmatpush1.bf16.msra.mxu0 0
    %1811 = vmatprep.subr.bf16.mxu0 0
    %1812 = vmatpush1.bf16.msra.mxu0 0
    %1813 = vmatprep.subr.bf16.mxu0 0
    %1814 = vmatpush1.bf16.msra.mxu0 0
    %1815 = vmatprep.subr.bf16.mxu0 0
    %1816 = vmatpush1.bf16.msra.mxu0 0
    %1817 = vmatprep.mubr.bf16.mxu0 0
    %1818 = vmatmul.mubr.bf16.gmra.mrb[0].mxu0 %v671
    %v1819 = vpop.f32.mrb[0].mxu0
    %v1820 = vadd.f32 0.0, %v1819
    %v1821 = vpop.f32.mrb[0].mxu0
    %v1822 = vpop.f32.mrb[0].mxu0
    %v1823 = vadd.f32 0.0, %v1822
    %v1824 = vpop.f32.mrb[0].mxu0
    %1825 = vmatprep.mubr.bf16.mxu0 0
    %1826 = vmatmul.mubr.bf16.gmra.mrb[0].mxu0 %v674
    %v1827 = vpop.f32.mrb[0].mxu0
    %v1828 = vadd.f32 0.0, %v1827
    %v1829 = vpop.f32.mrb[0].mxu0
    %v1830 = vpop.f32.mrb[0].mxu0
    %v1831 = vpop.f32.mrb[0].mxu0
    %1832 = vdwg.mxu0
    %v1833 = vpack.c.b16 %v1663, %v1662
    %v1834 = vpack.c.b16 %v1664, %v1664
    %v1837 = vsel %vm305, %v1834, 0
    %1839 = vmatprep.subr.bf16.mxu0 0
    %1840 = vmatpush1.bf16.msra.mxu0 %v1833
    %1841 = vmatprep.subr.bf16.mxu0 0
    %1842 = vmatpush1.bf16.msra.mxu0 %v1837
    %1843 = vmatprep.subr.bf16.mxu0 0
    %1844 = vmatpush1.bf16.msra.mxu0 0
    %1845 = vmatprep.subr.bf16.mxu0 0
    %1846 = vmatpush1.bf16.msra.mxu0 0
    %1847 = vmatprep.subr.bf16.mxu0 0
    %1848 = vmatpush1.bf16.msra.mxu0 0
    %1849 = vmatprep.subr.bf16.mxu0 0
    %1850 = vmatpush1.bf16.msra.mxu0 0
    %1851 = vmatprep.subr.bf16.mxu0 0
    %1852 = vmatpush1.bf16.msra.mxu0 0
    %1853 = vmatprep.subr.bf16.mxu0 0
    %1854 = vmatpush1.bf16.msra.mxu0 0
    %1855 = vmatprep.subr.bf16.mxu0 0
    %1856 = vmatpush1.bf16.msra.mxu0 0
    %1857 = vmatprep.subr.bf16.mxu0 0
    %1858 = vmatpush1.bf16.msra.mxu0 0
    %1859 = vmatprep.subr.bf16.mxu0 0
    %1860 = vmatpush1.bf16.msra.mxu0 0
    %1861 = vmatprep.subr.bf16.mxu0 0
    %1862 = vmatpush1.bf16.msra.mxu0 0
    %1863 = vmatprep.subr.bf16.mxu0 0
    %1864 = vmatpush1.bf16.msra.mxu0 0
    %1865 = vmatprep.subr.bf16.mxu0 0
    %1866 = vmatpush1.bf16.msra.mxu0 0
    %1867 = vmatprep.subr.bf16.mxu0 0
    %1868 = vmatpush1.bf16.msra.mxu0 0
    %1869 = vmatprep.subr.bf16.mxu0 0
    %1870 = vmatpush1.bf16.msra.mxu0 0
    %1871 = vmatprep.mubr.bf16.mxu0 0
    %1872 = vmatmul.mubr.bf16.gmra.mrb[0].mxu0 %v739
    %v1873 = vpop.f32.mrb[0].mxu0
    %v1874 = vadd.f32 0.0, %v1873
    %v1875 = vpop.f32.mrb[0].mxu0
    %v1876 = vpop.f32.mrb[0].mxu0
    %v1877 = vadd.f32 0.0, %v1876
    %v1878 = vpop.f32.mrb[0].mxu0
    %1879 = vmatprep.mubr.bf16.mxu0 0
    %1880 = vmatmul.mubr.bf16.gmra.mrb[0].mxu0 %v742
    %v1881 = vpop.f32.mrb[0].mxu0
    %v1882 = vadd.f32 0.0, %v1881
    %v1883 = vpop.f32.mrb[0].mxu0
    %v1884 = vpop.f32.mrb[0].mxu0
    %v1885 = vpop.f32.mrb[0].mxu0
    %1886 = vdwg.mxu0
    %v1887 = vpack.c.b16 %v1666, %v1665
    %v1888 = vpack.c.b16 %v1667, %v1667
    %v1891 = vsel %vm305, %v1888, 0
    %1893 = vmatprep.subr.bf16.mxu0 0
    %1894 = vmatpush1.bf16.msra.mxu0 %v1887
    %1895 = vmatprep.subr.bf16.mxu0 0
    %1896 = vmatpush1.bf16.msra.mxu0 %v1891
    %1897 = vmatprep.subr.bf16.mxu0 0
    %1898 = vmatpush1.bf16.msra.mxu0 0
    %1899 = vmatprep.subr.bf16.mxu0 0
    %1900 = vmatpush1.bf16.msra.mxu0 0
    %1901 = vmatprep.subr.bf16.mxu0 0
    %1902 = vmatpush1.bf16.msra.mxu0 0
    %1903 = vmatprep.subr.bf16.mxu0 0
    %1904 = vmatpush1.bf16.msra.mxu0 0
    %1905 = vmatprep.subr.bf16.mxu0 0
    %1906 = vmatpush1.bf16.msra.mxu0 0
    %1907 = vmatprep.subr.bf16.mxu0 0
    %1908 = vmatpush1.bf16.msra.mxu0 0
    %1909 = vmatprep.subr.bf16.mxu0 0
    %1910 = vmatpush1.bf16.msra.mxu0 0
    %1911 = vmatprep.subr.bf16.mxu0 0
    %1912 = vmatpush1.bf16.msra.mxu0 0
    %1913 = vmatprep.subr.bf16.mxu0 0
    %1914 = vmatpush1.bf16.msra.mxu0 0
    %1915 = vmatprep.subr.bf16.mxu0 0
    %1916 = vmatpush1.bf16.msra.mxu0 0
    %1917 = vmatprep.subr.bf16.mxu0 0
    %1918 = vmatpush1.bf16.msra.mxu0 0
    %1919 = vmatprep.subr.bf16.mxu0 0
    %1920 = vmatpush1.bf16.msra.mxu0 0
    %1921 = vmatprep.subr.bf16.mxu0 0
    %1922 = vmatpush1.bf16.msra.mxu0 0
    %1923 = vmatprep.subr.bf16.mxu0 0
    %1924 = vmatpush1.bf16.msra.mxu0 0
    %1925 = vmatprep.mubr.bf16.mxu0 0
    %1926 = vmatmul.mubr.bf16.gmra.mrb[0].mxu0 %v807
    %v1927 = vpop.f32.mrb[0].mxu0
    %v1928 = vadd.f32 0.0, %v1927
    %v1929 = vpop.f32.mrb[0].mxu0
    %v1930 = vpop.f32.mrb[0].mxu0
    %v1931 = vadd.f32 0.0, %v1930
    %v1932 = vpop.f32.mrb[0].mxu0
    %1933 = vmatprep.mubr.bf16.mxu0 0
    %1934 = vmatmul.mubr.bf16.gmra.mrb[0].mxu0 %v810
    %v1935 = vpop.f32.mrb[0].mxu0
    %v1936 = vadd.f32 0.0, %v1935
    %v1937 = vpop.f32.mrb[0].mxu0
    %v1938 = vpop.f32.mrb[0].mxu0
    %v1939 = vpop.f32.mrb[0].mxu0
    %1940 = vdwg.mxu0
    %v1941 = vpack.c.b16 %v1669, %v1668
    %v1942 = vpack.c.b16 %v1670, %v1670
    %v1945 = vsel %vm305, %v1942, 0
    %1947 = vmatprep.subr.bf16.mxu0 0
    %1948 = vmatpush1.bf16.msra.mxu0 %v1941
    %1949 = vmatprep.subr.bf16.mxu0 0
    %1950 = vmatpush1.bf16.msra.mxu0 %v1945
    %1951 = vmatprep.subr.bf16.mxu0 0
    %1952 = vmatpush1.bf16.msra.mxu0 0
    %1953 = vmatprep.subr.bf16.mxu0 0
    %1954 = vmatpush1.bf16.msra.mxu0 0
    %1955 = vmatprep.subr.bf16.mxu0 0
    %1956 = vmatpush1.bf16.msra.mxu0 0
    %1957 = vmatprep.subr.bf16.mxu0 0
    %1958 = vmatpush1.bf16.msra.mxu0 0
    %1959 = vmatprep.subr.bf16.mxu0 0
    %1960 = vmatpush1.bf16.msra.mxu0 0
    %1961 = vmatprep.subr.bf16.mxu0 0
    %1962 = vmatpush1.bf16.msra.mxu0 0
    %1963 = vmatprep.subr.bf16.mxu0 0
    %1964 = vmatpush1.bf16.msra.mxu0 0
    %1965 = vmatprep.subr.bf16.mxu0 0
    %1966 = vmatpush1.bf16.msra.mxu0 0
    %1967 = vmatprep.subr.bf16.mxu0 0
    %1968 = vmatpush1.bf16.msra.mxu0 0
    %1969 = vmatprep.subr.bf16.mxu0 0
    %1970 = vmatpush1.bf16.msra.mxu0 0
    %1971 = vmatprep.subr.bf16.mxu0 0
    %1972 = vmatpush1.bf16.msra.mxu0 0
    %1973 = vmatprep.subr.bf16.mxu0 0
    %1974 = vmatpush1.bf16.msra.mxu0 0
    %1975 = vmatprep.subr.bf16.mxu0 0
    %1976 = vmatpush1.bf16.msra.mxu0 0
    %1977 = vmatprep.subr.bf16.mxu0 0
    %1978 = vmatpush1.bf16.msra.mxu0 0
    %1979 = vmatprep.mubr.bf16.mxu0 0
    %1980 = vmatmul.mubr.bf16.gmra.mrb[0].mxu0 %v875
    %v1981 = vpop.f32.mrb[0].mxu0
    %v1982 = vadd.f32 0.0, %v1981
    %v1983 = vpop.f32.mrb[0].mxu0
    %v1984 = vpop.f32.mrb[0].mxu0
    %v1985 = vadd.f32 0.0, %v1984
    %v1986 = vpop.f32.mrb[0].mxu0
    %1987 = vmatprep.mubr.bf16.mxu0 0
    %1988 = vmatmul.mubr.bf16.gmra.mrb[0].mxu0 %v878
    %v1989 = vpop.f32.mrb[0].mxu0
    %v1990 = vadd.f32 0.0, %v1989
    %v1991 = vpop.f32.mrb[0].mxu0
    %v1992 = vpop.f32.mrb[0].mxu0
    %v1993 = vpop.f32.mrb[0].mxu0
    %1994 = vdwg.mxu0
    %s1995 = scalar_lea.vmem %s8, 16
    %v1996 = vld [vmem:[%s1995] sm:$0xf]
    %v1997 = vld [vmem:[%s1995 + $0x4] sm:$0xf]
    %v1998 = vld [vmem:[%s1995 + $0x8] sm:$0xf]
    %v1999 = vld [vmem:[%s1995 + $0xc] sm:$0xf]
    %v2000 = vpack.c.bf16 %v1715, %v1712
    %v2001 = vpack.c.bf16 %v1766, %v1720
    %v2002 = vpack.c.bf16 %v1774, %v1769
    %v2003 = vpack.c.bf16 %v1823, %v1820
    %v2004 = vpack.c.bf16 %v1874, %v1828
    %v2005 = vpack.c.bf16 %v1882, %v1877
    %v2006 = vpack.c.bf16 %v1931, %v1928
    %v2007 = vpack.c.bf16 %v1982, %v1936
    %v2008 = vpack.c.bf16 %v1990, %v1985
    %s2009 = scalar_lea.vmem [#allocation9], 1
    %v2010 = vld [vmem:[%s2009] sm:$0x1]
    %v2012 = vlaneseq
    %v2013 = vshrl.u32 %v2012, 7
    %v2014 = vsub.s32 0, %v2013
    %v2015 = vrot.slane %v2010, %v2014
    %v2021 = vunpack.c.l.b16 %v1996
    %v2022 = vunpack.c.l.b16 %v1997
    %v2023 = vunpack.c.l.b16 %v1998
    %v2024 = vunpack.c.l.b16 %v1999
    %v2025 = vpack.c.b16 %v2022, %v2021
    %v2026 = vpack.c.b16 %v2024, %v2023
    %v2030 = vsel %vm963, %v2000, 0
    %v2033 = vsel %vm963, %v2001, 0
    %v2036 = vsel %vm963, %v2002, 0
    %v2039 = vsel %vm963, %v2003, 0
    %v2042 = vsel %vm963, %v2004, 0
    %v2045 = vsel %vm963, %v2005, 0
    %v2048 = vsel %vm963, %v2006, 0
    %v2051 = vsel %vm963, %v2007, 0
    %v2054 = vsel %vm963, %v2008, 0
    %2056 = vmatprep.subr.bf16.mxu0 0
    %2057 = vmatpush1.bf16.msra.mxu0 %v2025
    %2058 = vmatprep.subr.bf16.mxu0 0
    %2059 = vmatpush1.bf16.msra.mxu0 %v2026
    %2060 = vmatprep.subr.bf16.mxu0 0
    %2061 = vmatpush1.bf16.msra.mxu0 0
    %2062 = vmatprep.subr.bf16.mxu0 0
    %2063 = vmatpush1.bf16.msra.mxu0 0
    %2064 = vmatprep.subr.bf16.mxu0 0
    %2065 = vmatpush1.bf16.msra.mxu0 0
    %2066 = vmatprep.subr.bf16.mxu0 0
    %2067 = vmatpush1.bf16.msra.mxu0 0
    %2068 = vmatprep.subr.bf16.mxu0 0
    %2069 = vmatpush1.bf16.msra.mxu0 0
    %2070 = vmatprep.subr.bf16.mxu0 0
    %2071 = vmatpush1.bf16.msra.mxu0 0
    %2072 = vmatprep.subr.bf16.mxu0 0
    %2073 = vmatpush1.bf16.msra.mxu0 0
    %2074 = vmatprep.subr.bf16.mxu0 0
    %2075 = vmatpush1.bf16.msra.mxu0 0
    %2076 = vmatprep.subr.bf16.mxu0 0
    %2077 = vmatpush1.bf16.msra.mxu0 0
    %2078 = vmatprep.subr.bf16.mxu0 0
    %2079 = vmatpush1.bf16.msra.mxu0 0
    %2080 = vmatprep.subr.bf16.mxu0 0
    %2081 = vmatpush1.bf16.msra.mxu0 0
    %2082 = vmatprep.subr.bf16.mxu0 0
    %2083 = vmatpush1.bf16.msra.mxu0 0
    %2084 = vmatprep.subr.bf16.mxu0 0
    %2085 = vmatpush1.bf16.msra.mxu0 0
    %2086 = vmatprep.subr.bf16.mxu0 0
    %2087 = vmatpush1.bf16.msra.mxu0 0
    %2088 = vmatprep.mubr.bf16.mxu0 0
    %2089 = vmatmul.mubr.bf16.gmra.mrb[0].mxu0 %v2030
    %v2090 = vpop.f32.mrb[0].mxu0
    %v2091 = vadd.f32 %v2015, %v2090
    %v2092 = vpop.f32.mrb[0].mxu0
    %v2093 = vpop.f32.mrb[0].mxu0
    %v2094 = vadd.f32 %v2015, %v2093
    %v2095 = vpop.f32.mrb[0].mxu0
    %2096 = vmatprep.mubr.bf16.mxu0 0
    %2097 = vmatmul.mubr.bf16.gmra.mrb[0].mxu0 %v2033
    %v2098 = vpop.f32.mrb[0].mxu0
    %v2099 = vadd.f32 %v2015, %v2098
    %v2100 = vpop.f32.mrb[0].mxu0
    %v2101 = vpop.f32.mrb[0].mxu0
    %v2102 = vadd.f32 %v2015, %v2101
    %v2103 = vpop.f32.mrb[0].mxu0
    %2104 = vmatprep.mubr.bf16.mxu0 0
    %2105 = vmatmul.mubr.bf16.gmra.mrb[0].mxu0 %v2036
    %v2106 = vpop.f32.mrb[0].mxu0
    %v2107 = vadd.f32 %v2015, %v2106
    %v2108 = vpop.f32.mrb[0].mxu0
    %v2109 = vpop.f32.mrb[0].mxu0
    %v2110 = vadd.f32 %v2015, %v2109
    %v2111 = vpop.f32.mrb[0].mxu0
    %2112 = vmatprep.mubr.bf16.mxu0 0
    %2113 = vmatmul.mubr.bf16.gmra.mrb[0].mxu0 %v2039
    %v2114 = vpop.f32.mrb[0].mxu0
    %v2115 = vadd.f32 %v2015, %v2114
    %v2116 = vpop.f32.mrb[0].mxu0
    %v2117 = vpop.f32.mrb[0].mxu0
    %v2118 = vadd.f32 %v2015, %v2117
    %v2119 = vpop.f32.mrb[0].mxu0
    %2120 = vmatprep.mubr.bf16.mxu0 0
    %2121 = vmatmul.mubr.bf16.gmra.mrb[0].mxu0 %v2042
    %v2122 = vpop.f32.mrb[0].mxu0
    %v2123 = vadd.f32 %v2015, %v2122
    %v2124 = vpop.f32.mrb[0].mxu0
    %v2125 = vpop.f32.mrb[0].mxu0
    %v2126 = vadd.f32 %v2015, %v2125
    %v2127 = vpop.f32.mrb[0].mxu0
    %2128 = vmatprep.mubr.bf16.mxu0 0
    %2129 = vmatmul.mubr.bf16.gmra.mrb[0].mxu0 %v2045
    %v2130 = vpop.f32.mrb[0].mxu0
    %v2131 = vadd.f32 %v2015, %v2130
    %v2132 = vpop.f32.mrb[0].mxu0
    %v2133 = vpop.f32.mrb[0].mxu0
    %v2134 = vadd.f32 %v2015, %v2133
    %v2135 = vpop.f32.mrb[0].mxu0
    %2136 = vmatprep.mubr.bf16.mxu0 0
    %2137 = vmatmul.mubr.bf16.gmra.mrb[0].mxu0 %v2048
    %v2138 = vpop.f32.mrb[0].mxu0
    %v2139 = vadd.f32 %v2015, %v2138
    %v2140 = vpop.f32.mrb[0].mxu0
    %v2141 = vpop.f32.mrb[0].mxu0
    %v2142 = vadd.f32 %v2015, %v2141
    %v2143 = vpop.f32.mrb[0].mxu0
    %2144 = vmatprep.mubr.bf16.mxu0 0
    %2145 = vmatmul.mubr.bf16.gmra.mrb[0].mxu0 %v2051
    %v2146 = vpop.f32.mrb[0].mxu0
    %v2147 = vadd.f32 %v2015, %v2146
    %v2148 = vpop.f32.mrb[0].mxu0
    %v2149 = vpop.f32.mrb[0].mxu0
    %v2150 = vadd.f32 %v2015, %v2149
    %v2151 = vpop.f32.mrb[0].mxu0
    %2152 = vmatprep.mubr.bf16.mxu0 0
    %2153 = vmatmul.mubr.bf16.gmra.mrb[0].mxu0 %v2054
    %v2154 = vpop.f32.mrb[0].mxu0
    %v2155 = vadd.f32 %v2015, %v2154
    %v2156 = vpop.f32.mrb[0].mxu0
    %v2157 = vpop.f32.mrb[0].mxu0
    %v2158 = vadd.f32 %v2015, %v2157
    %v2159 = vpop.f32.mrb[0].mxu0
    %2160 = vdwg.mxu0
    %v2161 = vmax.f32 %v2091, 0.0
    %v2162 = vmax.f32 %v2094, 0.0
    %v2163 = vmax.f32 %v2099, 0.0
    %v2164 = vmax.f32 %v2102, 0.0
    %v2165 = vmax.f32 %v2107, 0.0
    %v2166 = vmax.f32 %v2110, 0.0
    %v2167 = vmax.f32 %v2115, 0.0
    %v2168 = vmax.f32 %v2118, 0.0
    %v2169 = vmax.f32 %v2123, 0.0
    %v2170 = vmax.f32 %v2126, 0.0
    %v2171 = vmax.f32 %v2131, 0.0
    %v2172 = vmax.f32 %v2134, 0.0
    %v2173 = vmax.f32 %v2139, 0.0
    %v2174 = vmax.f32 %v2142, 0.0
    %v2175 = vmax.f32 %v2147, 0.0
    %v2176 = vmax.f32 %v2150, 0.0
    %v2177 = vmax.f32 %v2155, 0.0
    %v2178 = vmax.f32 %v2158, 0.0
    %s2179 = scalar_lea.vmem %s10, 16
    %v2180 = vld [vmem:[%s2179] sm:$0xf]
    %v2181 = vld [vmem:[%s2179 + $0x4] sm:$0xf]
    %v2182 = vld [vmem:[%s2179 + $0x8] sm:$0xf]
    %v2183 = vld [vmem:[%s2179 + $0xc] sm:$0xf]
    %v2184 = vpack.c.bf16 %v2162, %v2161
    %v2185 = vpack.c.bf16 %v2164, %v2163
    %v2186 = vpack.c.bf16 %v2166, %v2165
    %v2187 = vpack.c.bf16 %v2168, %v2167
    %v2188 = vpack.c.bf16 %v2170, %v2169
    %v2189 = vpack.c.bf16 %v2172, %v2171
    %v2190 = vpack.c.bf16 %v2174, %v2173
    %v2191 = vpack.c.bf16 %v2176, %v2175
    %v2192 = vpack.c.bf16 %v2178, %v2177
    %s2193 = scalar_lea.vmem [#allocation11], 1
    %v2194 = vld [vmem:[%s2193] sm:$0x1]
    %v2196 = vlaneseq
    %v2197 = vshrl.u32 %v2196, 7
    %v2198 = vsub.s32 0, %v2197
    %v2199 = vrot.slane %v2194, %v2198
    %v2205 = vunpack.c.l.b16 %v2180
    %v2206 = vunpack.c.l.b16 %v2181
    %v2207 = vunpack.c.l.b16 %v2182
    %v2208 = vunpack.c.l.b16 %v2183
    %v2209 = vpack.c.b16 %v2206, %v2205
    %v2210 = vpack.c.b16 %v2208, %v2207
    %v2214 = vsel %vm963, %v2184, 0
    %v2217 = vsel %vm963, %v2185, 0
    %v2220 = vsel %vm963, %v2186, 0
    %v2223 = vsel %vm963, %v2187, 0
    %v2226 = vsel %vm963, %v2188, 0
    %v2229 = vsel %vm963, %v2189, 0
    %v2232 = vsel %vm963, %v2190, 0
    %v2235 = vsel %vm963, %v2191, 0
    %v2238 = vsel %vm963, %v2192, 0
    %2240 = vmatprep.subr.bf16.mxu0 0
    %2241 = vmatpush1.bf16.msra.mxu0 %v2209
    %2242 = vmatprep.subr.bf16.mxu0 0
    %2243 = vmatpush1.bf16.msra.mxu0 %v2210
    %2244 = vmatprep.subr.bf16.mxu0 0
    %2245 = vmatpush1.bf16.msra.mxu0 0
    %2246 = vmatprep.subr.bf16.mxu0 0
    %2247 = vmatpush1.bf16.msra.mxu0 0
    %2248 = vmatprep.subr.bf16.mxu0 0
    %2249 = vmatpush1.bf16.msra.mxu0 0
    %2250 = vmatprep.subr.bf16.mxu0 0
    %2251 = vmatpush1.bf16.msra.mxu0 0
    %2252 = vmatprep.subr.bf16.mxu0 0
    %2253 = vmatpush1.bf16.msra.mxu0 0
    %2254 = vmatprep.subr.bf16.mxu0 0
    %2255 = vmatpush1.bf16.msra.mxu0 0
    %2256 = vmatprep.subr.bf16.mxu0 0
    %2257 = vmatpush1.bf16.msra.mxu0 0
    %2258 = vmatprep.subr.bf16.mxu0 0
    %2259 = vmatpush1.bf16.msra.mxu0 0
    %2260 = vmatprep.subr.bf16.mxu0 0
    %2261 = vmatpush1.bf16.msra.mxu0 0
    %2262 = vmatprep.subr.bf16.mxu0 0
    %2263 = vmatpush1.bf16.msra.mxu0 0
    %2264 = vmatprep.subr.bf16.mxu0 0
    %2265 = vmatpush1.bf16.msra.mxu0 0
    %2266 = vmatprep.subr.bf16.mxu0 0
    %2267 = vmatpush1.bf16.msra.mxu0 0
    %2268 = vmatprep.subr.bf16.mxu0 0
    %2269 = vmatpush1.bf16.msra.mxu0 0
    %2270 = vmatprep.subr.bf16.mxu0 0
    %2271 = vmatpush1.bf16.msra.mxu0 0
    %2272 = vmatprep.mubr.bf16.mxu0 0
    %2273 = vmatmul.mubr.bf16.gmra.mrb[0].mxu0 %v2214
    %v2274 = vpop.f32.mrb[0].mxu0
    %v2275 = vadd.f32 %v2199, %v2274
    %v2276 = vpop.f32.mrb[0].mxu0
    %v2277 = vpop.f32.mrb[0].mxu0
    %v2278 = vadd.f32 %v2199, %v2277
    %v2279 = vpop.f32.mrb[0].mxu0
    %2280 = vmatprep.mubr.bf16.mxu0 0
    %2281 = vmatmul.mubr.bf16.gmra.mrb[0].mxu0 %v2217
    %v2282 = vpop.f32.mrb[0].mxu0
    %v2283 = vadd.f32 %v2199, %v2282
    %v2284 = vpop.f32.mrb[0].mxu0
    %v2285 = vpop.f32.mrb[0].mxu0
    %v2286 = vadd.f32 %v2199, %v2285
    %v2287 = vpop.f32.mrb[0].mxu0
    %2288 = vmatprep.mubr.bf16.mxu0 0
    %2289 = vmatmul.mubr.bf16.gmra.mrb[0].mxu0 %v2220
    %v2290 = vpop.f32.mrb[0].mxu0
    %v2291 = vadd.f32 %v2199, %v2290
    %v2292 = vpop.f32.mrb[0].mxu0
    %v2293 = vpop.f32.mrb[0].mxu0
    %v2294 = vadd.f32 %v2199, %v2293
    %v2295 = vpop.f32.mrb[0].mxu0
    %2296 = vmatprep.mubr.bf16.mxu0 0
    %2297 = vmatmul.mubr.bf16.gmra.mrb[0].mxu0 %v2223
    %v2298 = vpop.f32.mrb[0].mxu0
    %v2299 = vadd.f32 %v2199, %v2298
    %v2300 = vpop.f32.mrb[0].mxu0
    %v2301 = vpop.f32.mrb[0].mxu0
    %v2302 = vadd.f32 %v2199, %v2301
    %v2303 = vpop.f32.mrb[0].mxu0
    %2304 = vmatprep.mubr.bf16.mxu0 0
    %2305 = vmatmul.mubr.bf16.gmra.mrb[0].mxu0 %v2226
    %v2306 = vpop.f32.mrb[0].mxu0
    %v2307 = vadd.f32 %v2199, %v2306
    %v2308 = vpop.f32.mrb[0].mxu0
    %v2309 = vpop.f32.mrb[0].mxu0
    %v2310 = vadd.f32 %v2199, %v2309
    %v2311 = vpop.f32.mrb[0].mxu0
    %2312 = vmatprep.mubr.bf16.mxu0 0
    %2313 = vmatmul.mubr.bf16.gmra.mrb[0].mxu0 %v2229
    %v2314 = vpop.f32.mrb[0].mxu0
    %v2315 = vadd.f32 %v2199, %v2314
    %v2316 = vpop.f32.mrb[0].mxu0
    %v2317 = vpop.f32.mrb[0].mxu0
    %v2318 = vadd.f32 %v2199, %v2317
    %v2319 = vpop.f32.mrb[0].mxu0
    %2320 = vmatprep.mubr.bf16.mxu0 0
    %2321 = vmatmul.mubr.bf16.gmra.mrb[0].mxu0 %v2232
    %v2322 = vpop.f32.mrb[0].mxu0
    %v2323 = vadd.f32 %v2199, %v2322
    %v2324 = vpop.f32.mrb[0].mxu0
    %v2325 = vpop.f32.mrb[0].mxu0
    %v2326 = vadd.f32 %v2199, %v2325
    %v2327 = vpop.f32.mrb[0].mxu0
    %2328 = vmatprep.mubr.bf16.mxu0 0
    %2329 = vmatmul.mubr.bf16.gmra.mrb[0].mxu0 %v2235
    %v2330 = vpop.f32.mrb[0].mxu0
    %v2331 = vadd.f32 %v2199, %v2330
    %v2332 = vpop.f32.mrb[0].mxu0
    %v2333 = vpop.f32.mrb[0].mxu0
    %v2334 = vadd.f32 %v2199, %v2333
    %v2335 = vpop.f32.mrb[0].mxu0
    %2336 = vmatprep.mubr.bf16.mxu0 0
    %2337 = vmatmul.mubr.bf16.gmra.mrb[0].mxu0 %v2238
    %v2338 = vpop.f32.mrb[0].mxu0
    %v2339 = vadd.f32 %v2199, %v2338
    %v2340 = vpop.f32.mrb[0].mxu0
    %v2341 = vpop.f32.mrb[0].mxu0
    %v2342 = vadd.f32 %v2199, %v2341
    %v2343 = vpop.f32.mrb[0].mxu0
    %2344 = vdwg.mxu0
    %v2345 = vsel %vm963, %v2275, 0.0
    %2346 = vadd.xlane.f32.xlu0 %v2345
    %v2347 = vpop.xlane.xlu0 %2346
    %v2348 = vsel %vm963, %v2278, 0.0
    %2349 = vadd.xlane.f32.xlu0 %v2348
    %v2350 = vpop.xlane.xlu0 %2349
    %v2351 = vsel %vm963, %v2283, 0.0
    %2352 = vadd.xlane.f32.xlu0 %v2351
    %v2353 = vpop.xlane.xlu0 %2352
    %v2354 = vsel %vm963, %v2286, 0.0
    %2355 = vadd.xlane.f32.xlu0 %v2354
    %v2356 = vpop.xlane.xlu0 %2355
    %v2357 = vsel %vm963, %v2291, 0.0
    %2358 = vadd.xlane.f32.xlu0 %v2357
    %v2359 = vpop.xlane.xlu0 %2358
    %v2360 = vsel %vm963, %v2294, 0.0
    %2361 = vadd.xlane.f32.xlu0 %v2360
    %v2362 = vpop.xlane.xlu0 %2361
    %v2363 = vsel %vm963, %v2299, 0.0
    %2364 = vadd.xlane.f32.xlu0 %v2363
    %v2365 = vpop.xlane.xlu0 %2364
    %v2366 = vsel %vm963, %v2302, 0.0
    %2367 = vadd.xlane.f32.xlu0 %v2366
    %v2368 = vpop.xlane.xlu0 %2367
    %v2369 = vsel %vm963, %v2307, 0.0
    %2370 = vadd.xlane.f32.xlu0 %v2369
    %v2371 = vpop.xlane.xlu0 %2370
    %v2372 = vsel %vm963, %v2310, 0.0
    %2373 = vadd.xlane.f32.xlu0 %v2372
    %v2374 = vpop.xlane.xlu0 %2373
    %v2375 = vsel %vm963, %v2315, 0.0
    %2376 = vadd.xlane.f32.xlu0 %v2375
    %v2377 = vpop.xlane.xlu0 %2376
    %v2378 = vsel %vm963, %v2318, 0.0
    %2379 = vadd.xlane.f32.xlu0 %v2378
    %v2380 = vpop.xlane.xlu0 %2379
    %v2381 = vsel %vm963, %v2323, 0.0
    %2382 = vadd.xlane.f32.xlu0 %v2381
    %v2383 = vpop.xlane.xlu0 %2382
    %v2384 = vsel %vm963, %v2326, 0.0
    %2385 = vadd.xlane.f32.xlu0 %v2384
    %v2386 = vpop.xlane.xlu0 %2385
    %v2387 = vsel %vm963, %v2331, 0.0
    %2388 = vadd.xlane.f32.xlu0 %v2387
    %v2389 = vpop.xlane.xlu0 %2388
    %v2390 = vsel %vm963, %v2334, 0.0
    %2391 = vadd.xlane.f32.xlu0 %v2390
    %v2392 = vpop.xlane.xlu0 %2391
    %v2393 = vsel %vm963, %v2339, 0.0
    %2394 = vadd.xlane.f32.xlu0 %v2393
    %v2395 = vpop.xlane.xlu0 %2394
    %v2396 = vsel %vm963, %v2342, 0.0
    %2397 = vadd.xlane.f32.xlu0 %v2396
    %v2398 = vpop.xlane.xlu0 %2397
    %v2399 = vmul.f32 %v2347, %v1332
    %v2400 = vmul.f32 %v2350, %v1332
    %v2401 = vmul.f32 %v2353, %v1332
    %v2402 = vmul.f32 %v2356, %v1332
    %v2403 = vmul.f32 %v2359, %v1332
    %v2404 = vmul.f32 %v2362, %v1332
    %v2405 = vmul.f32 %v2365, %v1332
    %v2406 = vmul.f32 %v2368, %v1332
    %v2407 = vmul.f32 %v2371, %v1332
    %v2408 = vmul.f32 %v2374, %v1332
    %v2409 = vmul.f32 %v2377, %v1332
    %v2410 = vmul.f32 %v2380, %v1332
    %v2411 = vmul.f32 %v2383, %v1332
    %v2412 = vmul.f32 %v2386, %v1332
    %v2413 = vmul.f32 %v2389, %v1332
    %v2414 = vmul.f32 %v2392, %v1332
    %v2415 = vmul.f32 %v2395, %v1332
    %v2416 = vmul.f32 %v2398, %v1332
    %v2417 = vmul.f32 %v2275, %v2275
    %v2418 = vmul.f32 %v2278, %v2278
    %v2419 = vmul.f32 %v2283, %v2283
    %v2420 = vmul.f32 %v2286, %v2286
    %v2421 = vmul.f32 %v2291, %v2291
    %v2422 = vmul.f32 %v2294, %v2294
    %v2423 = vmul.f32 %v2299, %v2299
    %v2424 = vmul.f32 %v2302, %v2302
    %v2425 = vmul.f32 %v2307, %v2307
    %v2426 = vmul.f32 %v2310, %v2310
    %v2427 = vmul.f32 %v2315, %v2315
    %v2428 = vmul.f32 %v2318, %v2318
    %v2429 = vmul.f32 %v2323, %v2323
    %v2430 = vmul.f32 %v2326, %v2326
    %v2431 = vmul.f32 %v2331, %v2331
    %v2432 = vmul.f32 %v2334, %v2334
    %v2433 = vmul.f32 %v2339, %v2339
    %v2434 = vmul.f32 %v2342, %v2342
    %v2435 = vsel %vm963, %v2417, 0.0
    %2436 = vadd.xlane.f32.xlu0 %v2435
    %v2437 = vpop.xlane.xlu0 %2436
    %v2438 = vsel %vm963, %v2418, 0.0
    %2439 = vadd.xlane.f32.xlu0 %v2438
    %v2440 = vpop.xlane.xlu0 %2439
    %v2441 = vsel %vm963, %v2419, 0.0
    %2442 = vadd.xlane.f32.xlu0 %v2441
    %v2443 = vpop.xlane.xlu0 %2442
    %v2444 = vsel %vm963, %v2420, 0.0
    %2445 = vadd.xlane.f32.xlu0 %v2444
    %v2446 = vpop.xlane.xlu0 %2445
    %v2447 = vsel %vm963, %v2421, 0.0
    %2448 = vadd.xlane.f32.xlu0 %v2447
    %v2449 = vpop.xlane.xlu0 %2448
    %v2450 = vsel %vm963, %v2422, 0.0
    %2451 = vadd.xlane.f32.xlu0 %v2450
    %v2452 = vpop.xlane.xlu0 %2451
    %v2453 = vsel %vm963, %v2423, 0.0
    %2454 = vadd.xlane.f32.xlu0 %v2453
    %v2455 = vpop.xlane.xlu0 %2454
    %v2456 = vsel %vm963, %v2424, 0.0
    %2457 = vadd.xlane.f32.xlu0 %v2456
    %v2458 = vpop.xlane.xlu0 %2457
    %v2459 = vsel %vm963, %v2425, 0.0
    %2460 = vadd.xlane.f32.xlu0 %v2459
    %v2461 = vpop.xlane.xlu0 %2460
    %v2462 = vsel %vm963, %v2426, 0.0
    %2463 = vadd.xlane.f32.xlu0 %v2462
    %v2464 = vpop.xlane.xlu0 %2463
    %v2465 = vsel %vm963, %v2427, 0.0
    %2466 = vadd.xlane.f32.xlu0 %v2465
    %v2467 = vpop.xlane.xlu0 %2466
    %v2468 = vsel %vm963, %v2428, 0.0
    %2469 = vadd.xlane.f32.xlu0 %v2468
    %v2470 = vpop.xlane.xlu0 %2469
    %v2471 = vsel %vm963, %v2429, 0.0
    %2472 = vadd.xlane.f32.xlu0 %v2471
    %v2473 = vpop.xlane.xlu0 %2472
    %v2474 = vsel %vm963, %v2430, 0.0
    %2475 = vadd.xlane.f32.xlu0 %v2474
    %v2476 = vpop.xlane.xlu0 %2475
    %v2477 = vsel %vm963, %v2431, 0.0
    %2478 = vadd.xlane.f32.xlu0 %v2477
    %v2479 = vpop.xlane.xlu0 %2478
    %v2480 = vsel %vm963, %v2432, 0.0
    %2481 = vadd.xlane.f32.xlu0 %v2480
    %v2482 = vpop.xlane.xlu0 %2481
    %v2483 = vsel %vm963, %v2433, 0.0
    %2484 = vadd.xlane.f32.xlu0 %v2483
    %v2485 = vpop.xlane.xlu0 %2484
    %v2486 = vsel %vm963, %v2434, 0.0
    %2487 = vadd.xlane.f32.xlu0 %v2486
    %v2488 = vpop.xlane.xlu0 %2487
    %v2489 = vmul.f32 %v2437, %v1332
    %v2490 = vmul.f32 %v2440, %v1332
    %v2491 = vmul.f32 %v2443, %v1332
    %v2492 = vmul.f32 %v2446, %v1332
    %v2493 = vmul.f32 %v2449, %v1332
    %v2494 = vmul.f32 %v2452, %v1332
    %v2495 = vmul.f32 %v2455, %v1332
    %v2496 = vmul.f32 %v2458, %v1332
    %v2497 = vmul.f32 %v2461, %v1332
    %v2498 = vmul.f32 %v2464, %v1332
    %v2499 = vmul.f32 %v2467, %v1332
    %v2500 = vmul.f32 %v2470, %v1332
    %v2501 = vmul.f32 %v2473, %v1332
    %v2502 = vmul.f32 %v2476, %v1332
    %v2503 = vmul.f32 %v2479, %v1332
    %v2504 = vmul.f32 %v2482, %v1332
    %v2505 = vmul.f32 %v2485, %v1332
    %v2506 = vmul.f32 %v2488, %v1332
    %v2507 = vmul.f32 %v2399, %v2399
    %v2508 = vmul.f32 %v2400, %v2400
    %v2509 = vmul.f32 %v2401, %v2401
    %v2510 = vmul.f32 %v2402, %v2402
    %v2511 = vmul.f32 %v2403, %v2403
    %v2512 = vmul.f32 %v2404, %v2404
    %v2513 = vmul.f32 %v2405, %v2405
    %v2514 = vmul.f32 %v2406, %v2406
    %v2515 = vmul.f32 %v2407, %v2407
    %v2516 = vmul.f32 %v2408, %v2408
    %v2517 = vmul.f32 %v2409, %v2409
    %v2518 = vmul.f32 %v2410, %v2410
    %v2519 = vmul.f32 %v2411, %v2411
    %v2520 = vmul.f32 %v2412, %v2412
    %v2521 = vmul.f32 %v2413, %v2413
    %v2522 = vmul.f32 %v2414, %v2414
    %v2523 = vmul.f32 %v2415, %v2415
    %v2524 = vmul.f32 %v2416, %v2416
    %v2525 = vsub.f32 %v2489, %v2507
    %v2526 = vsub.f32 %v2490, %v2508
    %v2527 = vsub.f32 %v2491, %v2509
    %v2528 = vsub.f32 %v2492, %v2510
    %v2529 = vsub.f32 %v2493, %v2511
    %v2530 = vsub.f32 %v2494, %v2512
    %v2531 = vsub.f32 %v2495, %v2513
    %v2532 = vsub.f32 %v2496, %v2514
    %v2533 = vsub.f32 %v2497, %v2515
    %v2534 = vsub.f32 %v2498, %v2516
    %v2535 = vsub.f32 %v2499, %v2517
    %v2536 = vsub.f32 %v2500, %v2518
    %v2537 = vsub.f32 %v2501, %v2519
    %v2538 = vsub.f32 %v2502, %v2520
    %v2539 = vsub.f32 %v2503, %v2521
    %v2540 = vsub.f32 %v2504, %v2522
    %v2541 = vsub.f32 %v2505, %v2523
    %v2542 = vsub.f32 %v2506, %v2524
    %v2543 = vsub.f32 %v2275, %v2399
    %v2544 = vsub.f32 %v2278, %v2400
    %v2545 = vsub.f32 %v2283, %v2401
    %v2546 = vsub.f32 %v2286, %v2402
    %v2547 = vsub.f32 %v2291, %v2403
    %v2548 = vsub.f32 %v2294, %v2404
    %v2549 = vsub.f32 %v2299, %v2405
    %v2550 = vsub.f32 %v2302, %v2406
    %v2551 = vsub.f32 %v2307, %v2407
    %v2552 = vsub.f32 %v2310, %v2408
    %v2553 = vsub.f32 %v2315, %v2409
    %v2554 = vsub.f32 %v2318, %v2410
    %v2555 = vsub.f32 %v2323, %v2411
    %v2556 = vsub.f32 %v2326, %v2412
    %v2557 = vsub.f32 %v2331, %v2413
    %v2558 = vsub.f32 %v2334, %v2414
    %v2559 = vsub.f32 %v2339, %v2415
    %v2560 = vsub.f32 %v2342, %v2416
    %v2561 = vadd.f32 %v2525, 1e-05
    %v2562 = vadd.f32 %v2526, 1e-05
    %v2563 = vadd.f32 %v2527, 1e-05
    %v2564 = vadd.f32 %v2528, 1e-05
    %v2565 = vadd.f32 %v2529, 1e-05
    %v2566 = vadd.f32 %v2530, 1e-05
    %v2567 = vadd.f32 %v2531, 1e-05
    %v2568 = vadd.f32 %v2532, 1e-05
    %v2569 = vadd.f32 %v2533, 1e-05
    %v2570 = vadd.f32 %v2534, 1e-05
    %v2571 = vadd.f32 %v2535, 1e-05
    %v2572 = vadd.f32 %v2536, 1e-05
    %v2573 = vadd.f32 %v2537, 1e-05
    %v2574 = vadd.f32 %v2538, 1e-05
    %v2575 = vadd.f32 %v2539, 1e-05
    %v2576 = vadd.f32 %v2540, 1e-05
    %v2577 = vadd.f32 %v2541, 1e-05
    %v2578 = vadd.f32 %v2542, 1e-05
    %v2579 = vrsqrt.pop %v2561
    %v2580 = vrsqrt.pop %v2562
    %v2581 = vrsqrt.pop %v2563
    %v2582 = vrsqrt.pop %v2564
    %v2583 = vrsqrt.pop %v2565
    %v2584 = vrsqrt.pop %v2566
    %v2585 = vrsqrt.pop %v2567
    %v2586 = vrsqrt.pop %v2568
    %v2587 = vrsqrt.pop %v2569
    %v2588 = vrsqrt.pop %v2570
    %v2589 = vrsqrt.pop %v2571
    %v2590 = vrsqrt.pop %v2572
    %v2591 = vrsqrt.pop %v2573
    %v2592 = vrsqrt.pop %v2574
    %v2593 = vrsqrt.pop %v2575
    %v2594 = vrsqrt.pop %v2576
    %v2595 = vrsqrt.pop %v2577
    %v2596 = vrsqrt.pop %v2578
    %v2597 = vmul.f32 %v2543, %v2579
    %v2598 = vmul.f32 %v2544, %v2580
    %v2599 = vmul.f32 %v2545, %v2581
    %v2600 = vmul.f32 %v2546, %v2582
    %v2601 = vmul.f32 %v2547, %v2583
    %v2602 = vmul.f32 %v2548, %v2584
    %v2603 = vmul.f32 %v2549, %v2585
    %v2604 = vmul.f32 %v2550, %v2586
    %v2605 = vmul.f32 %v2551, %v2587
    %v2606 = vmul.f32 %v2552, %v2588
    %v2607 = vmul.f32 %v2553, %v2589
    %v2608 = vmul.f32 %v2554, %v2590
    %v2609 = vmul.f32 %v2555, %v2591
    %v2610 = vmul.f32 %v2556, %v2592
    %v2611 = vmul.f32 %v2557, %v2593
    %v2612 = vmul.f32 %v2558, %v2594
    %v2613 = vmul.f32 %v2559, %v2595
    %v2614 = vmul.f32 %v2560, %v2596
    %s2615 = scalar_lea.vmem %s12, 1
    %v2616 = vld [vmem:[%s2615] sm:$0x1]
    %v2618 = vlaneseq
    %v2619 = vshrl.u32 %v2618, 7
    %v2620 = vsub.s32 0, %v2619
    %v2621 = vrot.slane %v2616, %v2620
    %v2623 = vmul.f32 %v2597, %v2621
    %v2624 = vmul.f32 %v2598, %v2621
    %v2625 = vmul.f32 %v2599, %v2621
    %v2626 = vmul.f32 %v2600, %v2621
    %v2627 = vmul.f32 %v2601, %v2621
    %v2628 = vmul.f32 %v2602, %v2621
    %v2629 = vmul.f32 %v2603, %v2621
    %v2630 = vmul.f32 %v2604, %v2621
    %v2631 = vmul.f32 %v2605, %v2621
    %v2632 = vmul.f32 %v2606, %v2621
    %v2633 = vmul.f32 %v2607, %v2621
    %v2634 = vmul.f32 %v2608, %v2621
    %v2635 = vmul.f32 %v2609, %v2621
    %v2636 = vmul.f32 %v2610, %v2621
    %v2637 = vmul.f32 %v2611, %v2621
    %v2638 = vmul.f32 %v2612, %v2621
    %v2639 = vmul.f32 %v2613, %v2621
    %v2640 = vmul.f32 %v2614, %v2621
    %s2641 = scalar_lea.vmem %s13, 1
    %v2642 = vld [vmem:[%s2641] sm:$0x1]
    %v2644 = vlaneseq
    %v2645 = vshrl.u32 %v2644, 7
    %v2646 = vsub.s32 0, %v2645
    %v2647 = vrot.slane %v2642, %v2646
    %v2649 = vadd.f32 %v2623, %v2647
    %v2650 = vadd.f32 %v2624, %v2647
    %v2651 = vadd.f32 %v2625, %v2647
    %v2652 = vadd.f32 %v2626, %v2647
    %v2653 = vadd.f32 %v2627, %v2647
    %v2654 = vadd.f32 %v2628, %v2647
    %v2655 = vadd.f32 %v2629, %v2647
    %v2656 = vadd.f32 %v2630, %v2647
    %v2657 = vadd.f32 %v2631, %v2647
    %v2658 = vadd.f32 %v2632, %v2647
    %v2659 = vadd.f32 %v2633, %v2647
    %v2660 = vadd.f32 %v2634, %v2647
    %v2661 = vadd.f32 %v2635, %v2647
    %v2662 = vadd.f32 %v2636, %v2647
    %v2663 = vadd.f32 %v2637, %v2647
    %v2664 = vadd.f32 %v2638, %v2647
    %v2665 = vadd.f32 %v2639, %v2647
    %v2666 = vadd.f32 %v2640, %v2647
    %v2667 = vmax.f32 %v2649, 0.0
    %v2668 = vmax.f32 %v2650, 0.0
    %v2669 = vmax.f32 %v2651, 0.0
    %v2670 = vmax.f32 %v2652, 0.0
    %v2671 = vmax.f32 %v2653, 0.0
    %v2672 = vmax.f32 %v2654, 0.0
    %v2673 = vmax.f32 %v2655, 0.0
    %v2674 = vmax.f32 %v2656, 0.0
    %v2675 = vmax.f32 %v2657, 0.0
    %v2676 = vmax.f32 %v2658, 0.0
    %v2677 = vmax.f32 %v2659, 0.0
    %v2678 = vmax.f32 %v2660, 0.0
    %v2679 = vmax.f32 %v2661, 0.0
    %v2680 = vmax.f32 %v2662, 0.0
    %v2681 = vmax.f32 %v2663, 0.0
    %v2682 = vmax.f32 %v2664, 0.0
    %v2683 = vmax.f32 %v2665, 0.0
    %v2684 = vmax.f32 %v2666, 0.0
    %v2685 = vadd.f32 %v1617, %v2667
    %v2686 = vadd.f32 %v1618, %v2668
    %v2687 = vadd.f32 %v1619, %v2669
    %v2688 = vadd.f32 %v1620, %v2670
    %v2689 = vadd.f32 %v1621, %v2671
    %v2690 = vadd.f32 %v1622, %v2672
    %v2691 = vadd.f32 %v1623, %v2673
    %v2692 = vadd.f32 %v1624, %v2674
    %v2693 = vadd.f32 %v1625, %v2675
    %v2694 = vadd.f32 %v1626, %v2676
    %v2695 = vadd.f32 %v1627, %v2677
    %v2696 = vadd.f32 %v1628, %v2678
    %v2697 = vadd.f32 %v1629, %v2679
    %v2698 = vadd.f32 %v1630, %v2680
    %v2699 = vadd.f32 %v1631, %v2681
    %v2700 = vadd.f32 %v1632, %v2682
    %v2701 = vadd.f32 %v1633, %v2683
    %v2702 = vadd.f32 %v1634, %v2684
    %v2703 = vld [vmem:[%s192] sm:$0xff]
    %v2704 = vld [vmem:[%s192 + $0x8] sm:$0xff]
    %v2705 = vld [vmem:[%s192 + $0x10] sm:$0xff]
    %v2706 = vld [vmem:[%s192 + $0x18] sm:$0xff]
    %v2707 = vld [vmem:[%s192 + $0x20] sm:$0x33]
    %v2708 = vpack.c.bf16 %v2686, %v2685
    %v2709 = vpack.c.bf16 %v2688, %v2687
    %v2710 = vpack.c.bf16 %v2690, %v2689
    %v2711 = vpack.c.bf16 %v2692, %v2691
    %v2712 = vpack.c.bf16 %v2694, %v2693
    %v2713 = vpack.c.bf16 %v2696, %v2695
    %v2714 = vpack.c.bf16 %v2698, %v2697
    %v2715 = vpack.c.bf16 %v2700, %v2699
    %v2716 = vpack.c.bf16 %v2702, %v2701
    %v2722 = vunpack.c.l.b16 %v2703
    %v2723 = vunpack.c.h.b16 %v2703
    %v2724 = vunpack.c.l.b16 %v2704
    %v2725 = vunpack.c.h.b16 %v2704
    %v2726 = vunpack.c.l.b16 %v2705
    %v2727 = vunpack.c.h.b16 %v2705
    %v2728 = vunpack.c.l.b16 %v2706
    %v2729 = vunpack.c.h.b16 %v2706
    %v2730 = vunpack.c.l.b16 %v2707
    %v2731 = vunpack.c.h.b16 %v2707
    %v2732 = vpack.c.b16 %v2724, %v2722
    %v2733 = vpack.c.b16 %v2725, %v2723
    %v2734 = vpack.c.b16 %v2728, %v2726
    %v2735 = vpack.c.b16 %v2729, %v2727
    %v2736 = vpack.c.b16 %v2730, %v2730
    %v2737 = vpack.c.b16 %v2731, %v2731
    %vm2741 = vcmask 130048
    %v2743 = vsel %vm2741, %v2733, 0
    %v2746 = vsel %vm2741, %v2735, 0
    %v2749 = vsel %vm2741, %v2737, 0
    %2751 = vmatprep.subr.bf16.mxu0 0
    %2752 = vmatpush1.bf16.msra.mxu0 %v2708
    %2753 = vmatprep.subr.bf16.mxu0 0
    %2754 = vmatpush1.bf16.msra.mxu0 %v2709
    %2755 = vmatprep.subr.bf16.mxu0 0
    %2756 = vmatpush1.bf16.msra.mxu0 %v2710
    %2757 = vmatprep.subr.bf16.mxu0 0
    %2758 = vmatpush1.bf16.msra.mxu0 %v2711
    %2759 = vmatprep.subr.bf16.mxu0 0
    %2760 = vmatpush1.bf16.msra.mxu0 %v2712
    %2761 = vmatprep.subr.bf16.mxu0 0
    %2762 = vmatpush1.bf16.msra.mxu0 %v2713
    %2763 = vmatprep.subr.bf16.mxu0 0
    %2764 = vmatpush1.bf16.msra.mxu0 %v2714
    %2765 = vmatprep.subr.bf16.mxu0 0
    %2766 = vmatpush1.bf16.msra.mxu0 %v2715
    %2767 = vmatprep.subr.bf16.mxu0 0
    %2768 = vmatpush1.bf16.msra.mxu0 %v2716
    %2769 = vmatprep.subr.bf16.mxu0 0
    %2770 = vmatpush1.bf16.msra.mxu0 0
    %2771 = vmatprep.subr.bf16.mxu0 0
    %2772 = vmatpush1.bf16.msra.mxu0 0
    %2773 = vmatprep.subr.bf16.mxu0 0
    %2774 = vmatpush1.bf16.msra.mxu0 0
    %2775 = vmatprep.subr.bf16.mxu0 0
    %2776 = vmatpush1.bf16.msra.mxu0 0
    %2777 = vmatprep.subr.bf16.mxu0 0
    %2778 = vmatpush1.bf16.msra.mxu0 0
    %2779 = vmatprep.subr.bf16.mxu0 0
    %2780 = vmatpush1.bf16.msra.mxu0 0
    %2781 = vmatprep.subr.bf16.mxu0 0
    %2782 = vmatpush1.bf16.msra.mxu0 0
    %2783 = vmatprep.mubr.bf16.mxu0 %v2743
    %2784 = vmatmul.mubr.bf16.gmra.mrb[0].mxu0 %v2732
    %v2785 = vpop.f32.mrb[0].mxu0
    %v2786 = vadd.f32 0.0, %v2785
    %v2787 = vpop.f32.mrb[0].mxu0
    %v2788 = vpop.f32.mrb[0].mxu0
    %v2789 = vadd.f32 0.0, %v2788
    %v2790 = vpop.f32.mrb[0].mxu0
    %2791 = vmatprep.mubr.bf16.mxu0 %v2746
    %2792 = vmatmul.mubr.bf16.gmra.mrb[0].mxu0 %v2734
    %v2793 = vpop.f32.mrb[0].mxu0
    %v2794 = vadd.f32 0.0, %v2793
    %v2795 = vpop.f32.mrb[0].mxu0
    %v2796 = vpop.f32.mrb[0].mxu0
    %v2797 = vadd.f32 0.0, %v2796
    %v2798 = vpop.f32.mrb[0].mxu0
    %2799 = vmatprep.mubr.bf16.mxu0 %v2749
    %2800 = vmatmul.mubr.bf16.gmra.mrb[0].mxu0 %v2736
    %v2801 = vpop.f32.mrb[0].mxu0
    %v2802 = vadd.f32 0.0, %v2801
    %v2803 = vpop.f32.mrb[0].mxu0
    %v2804 = vpop.f32.mrb[0].mxu0
    %v2805 = vpop.f32.mrb[0].mxu0
    %2806 = vdwg.mxu0
    %v2807 = vld [vmem:[%s14] sm:$0xf]
    %v2808 = vld [vmem:[%s14 + $0x4] sm:$0xf]
    %v2809 = vld [vmem:[%s14 + $0x8] sm:$0xf]
    %v2810 = vld [vmem:[%s14 + $0xc] sm:$0xf]
    %v2811 = vpack.c.bf16 %v2789, %v2786
    %v2812 = vpack.c.bf16 %v2797, %v2794
    %v2813 = vpack.c.bf16 %v2802, %v2802
    %v2814 = vld [vmem:[%s15] sm:$0x1]
    %v2816 = vlaneseq
    %v2817 = vshrl.u32 %v2816, 7
    %v2818 = vsub.s32 0, %v2817
    %v2819 = vrot.slane %v2814, %v2818
    %v2825 = vunpack.c.l.b16 %v2807
    %v2826 = vunpack.c.l.b16 %v2808
    %v2827 = vunpack.c.l.b16 %v2809
    %v2828 = vunpack.c.l.b16 %v2810
    %v2829 = vpack.c.b16 %v2826, %v2825
    %v2830 = vpack.c.b16 %v2828, %v2827
    %v2834 = vsel %vm963, %v2811, 0
    %v2837 = vsel %vm963, %v2812, 0
    %v2840 = vsel %vm963, %v2813, 0
    %2842 = vmatprep.subr.bf16.mxu0 0
    %2843 = vmatpush1.bf16.msra.mxu0 %v2829
    %2844 = vmatprep.subr.bf16.mxu0 0
    %2845 = vmatpush1.bf16.msra.mxu0 %v2830
    %2846 = vmatprep.subr.bf16.mxu0 0
    %2847 = vmatpush1.bf16.msra.mxu0 0
    %2848 = vmatprep.subr.bf16.mxu0 0
    %2849 = vmatpush1.bf16.msra.mxu0 0
    %2850 = vmatprep.subr.bf16.mxu0 0
    %2851 = vmatpush1.bf16.msra.mxu0 0
    %2852 = vmatprep.subr.bf16.mxu0 0
    %2853 = vmatpush1.bf16.msra.mxu0 0
    %2854 = vmatprep.subr.bf16.mxu0 0
    %2855 = vmatpush1.bf16.msra.mxu0 0
    %2856 = vmatprep.subr.bf16.mxu0 0
    %2857 = vmatpush1.bf16.msra.mxu0 0
    %2858 = vmatprep.subr.bf16.mxu0 0
    %2859 = vmatpush1.bf16.msra.mxu0 0
    %2860 = vmatprep.subr.bf16.mxu0 0
    %2861 = vmatpush1.bf16.msra.mxu0 0
    %2862 = vmatprep.subr.bf16.mxu0 0
    %2863 = vmatpush1.bf16.msra.mxu0 0
    %2864 = vmatprep.subr.bf16.mxu0 0
    %2865 = vmatpush1.bf16.msra.mxu0 0
    %2866 = vmatprep.subr.bf16.mxu0 0
    %2867 = vmatpush1.bf16.msra.mxu0 0
    %2868 = vmatprep.subr.bf16.mxu0 0
    %2869 = vmatpush1.bf16.msra.mxu0 0
    %2870 = vmatprep.subr.bf16.mxu0 0
    %2871 = vmatpush1.bf16.msra.mxu0 0
    %2872 = vmatprep.subr.bf16.mxu0 0
    %2873 = vmatpush1.bf16.msra.mxu0 0
    %2874 = vmatprep.mubr.bf16.mxu0 0
    %2875 = vmatmul.mubr.bf16.gmra.mrb[0].mxu0 %v2834
    %v2876 = vpop.f32.mrb[0].mxu0
    %v2877 = vadd.f32 %v2819, %v2876
    %v2878 = vpop.f32.mrb[0].mxu0
    %v2879 = vpop.f32.mrb[0].mxu0
    %v2880 = vadd.f32 %v2819, %v2879
    %v2881 = vpop.f32.mrb[0].mxu0
    %2882 = vmatprep.mubr.bf16.mxu0 0
    %2883 = vmatmul.mubr.bf16.gmra.mrb[0].mxu0 %v2837
    %v2884 = vpop.f32.mrb[0].mxu0
    %v2885 = vadd.f32 %v2819, %v2884
    %v2886 = vpop.f32.mrb[0].mxu0
    %v2887 = vpop.f32.mrb[0].mxu0
    %v2888 = vadd.f32 %v2819, %v2887
    %v2889 = vpop.f32.mrb[0].mxu0
    %2890 = vmatprep.mubr.bf16.mxu0 0
    %2891 = vmatmul.mubr.bf16.gmra.mrb[0].mxu0 %v2840
    %v2892 = vpop.f32.mrb[0].mxu0
    %v2893 = vadd.f32 %v2819, %v2892
    %v2894 = vpop.f32.mrb[0].mxu0
    %v2895 = vpop.f32.mrb[0].mxu0
    %v2896 = vpop.f32.mrb[0].mxu0
    %2897 = vdwg.mxu0
    %v2898 = vmax.f32 %v2877, 0.0
    %v2899 = vmax.f32 %v2880, 0.0
    %v2900 = vmax.f32 %v2885, 0.0
    %v2901 = vmax.f32 %v2888, 0.0
    %v2902 = vmax.f32 %v2893, 0.0
    %v2903 = vld [vmem:[#allocation3] sm:$0x7]
    %v2904 = vpack.c.bf16 %v2899, %v2898
    %v2905 = vpack.c.bf16 %v2901, %v2900
    %v2906 = vpack.c.bf16 %v2902, %v2902
    %vm2907 = vcmask 293888
    %v2909 = vsel %vm2907, %v2903, 0
    %vm2911 = vcmask 1041408
    %v2913 = vsel %vm2911, %v2906, 0
    %2915 = vmatprep.subr.bf16.mxu0 0
    %2916 = vmatpush1.bf16.msra.mxu0 %v2904
    %2917 = vmatprep.subr.bf16.mxu0 0
    %2918 = vmatpush1.bf16.msra.mxu0 %v2905
    %2919 = vmatprep.subr.bf16.mxu0 0
    %2920 = vmatpush1.bf16.msra.mxu0 %v2913
    %2921 = vmatprep.subr.bf16.mxu0 0
    %2922 = vmatpush1.bf16.msra.mxu0 0
    %2923 = vmatprep.subr.bf16.mxu0 0
    %2924 = vmatpush1.bf16.msra.mxu0 0
    %2925 = vmatprep.subr.bf16.mxu0 0
    %2926 = vmatpush1.bf16.msra.mxu0 0
    %2927 = vmatprep.subr.bf16.mxu0 0
    %2928 = vmatpush1.bf16.msra.mxu0 0
    %2929 = vmatprep.subr.bf16.mxu0 0
    %2930 = vmatpush1.bf16.msra.mxu0 0
    %2931 = vmatprep.subr.bf16.mxu0 0
    %2932 = vmatpush1.bf16.msra.mxu0 0
    %2933 = vmatprep.subr.bf16.mxu0 0
    %2934 = vmatpush1.bf16.msra.mxu0 0
    %2935 = vmatprep.subr.bf16.mxu0 0
    %2936 = vmatpush1.bf16.msra.mxu0 0
    %2937 = vmatprep.subr.bf16.mxu0 0
    %2938 = vmatpush1.bf16.msra.mxu0 0
    %2939 = vmatprep.subr.bf16.mxu0 0
    %2940 = vmatpush1.bf16.msra.mxu0 0
    %2941 = vmatprep.subr.bf16.mxu0 0
    %2942 = vmatpush1.bf16.msra.mxu0 0
    %2943 = vmatprep.subr.bf16.mxu0 0
    %2944 = vmatpush1.bf16.msra.mxu0 0
    %2945 = vmatprep.subr.bf16.mxu0 0
    %2946 = vmatpush1.bf16.msra.mxu0 0
    %2947 = vmatprep.mubr.bf16.mxu0 0
    %2948 = vmatmul.mubr.bf16.gmra.mrb[0].mxu0 %v2909
    %v2949 = vpop.f32.mrb[0].mxu0
    %v2950 = vadd.f32 0.0, %v2949
    %v2951 = vpop.f32.mrb[0].mxu0
    %v2952 = vpop.f32.mrb[0].mxu0
    %v2953 = vpop.f32.mrb[0].mxu0
    %2954 = vdwg.mxu0
    %v2955 = vmul.f32 %v2950, 0.16666667
    %v2956 = vld [vmem:[%s16] sm:$0xf]
    %v2957 = vld [vmem:[%s16 + $0x4] sm:$0xf]
    %v2958 = vld [vmem:[%s16 + $0x8] sm:$0xf]
    %v2959 = vld [vmem:[%s16 + $0xc] sm:$0xf]
    %v2960 = vpack.c.bf16 %v2955, %v2955
    %v2961 = vld [vmem:[%s17] sm:$0x1]
    %v2963 = vlaneseq
    %v2964 = vshrl.u32 %v2963, 7
    %v2965 = vsub.s32 0, %v2964
    %v2966 = vrot.slane %v2961, %v2965
    %v2972 = vunpack.c.l.b16 %v2956
    %v2973 = vunpack.c.l.b16 %v2957
    %v2974 = vunpack.c.l.b16 %v2958
    %v2975 = vunpack.c.l.b16 %v2959
    %v2976 = vpack.c.b16 %v2973, %v2972
    %v2977 = vpack.c.b16 %v2975, %v2974
    %v2981 = vsel %vm963, %v2960, 0
    %2983 = vmatprep.subr.bf16.mxu0 0
    %2984 = vmatpush1.bf16.msra.mxu0 %v2976
    %2985 = vmatprep.subr.bf16.mxu0 0
    %2986 = vmatpush1.bf16.msra.mxu0 %v2977
    %2987 = vmatprep.subr.bf16.mxu0 0
    %2988 = vmatpush1.bf16.msra.mxu0 0
    %2989 = vmatprep.subr.bf16.mxu0 0
    %2990 = vmatpush1.bf16.msra.mxu0 0
    %2991 = vmatprep.subr.bf16.mxu0 0
    %2992 = vmatpush1.bf16.msra.mxu0 0
    %2993 = vmatprep.subr.bf16.mxu0 0
    %2994 = vmatpush1.bf16.msra.mxu0 0
    %2995 = vmatprep.subr.bf16.mxu0 0
    %2996 = vmatpush1.bf16.msra.mxu0 0
    %2997 = vmatprep.subr.bf16.mxu0 0
    %2998 = vmatpush1.bf16.msra.mxu0 0
    %2999 = vmatprep.subr.bf16.mxu0 0
    %3000 = vmatpush1.bf16.msra.mxu0 0
    %3001 = vmatprep.subr.bf16.mxu0 0
    %3002 = vmatpush1.bf16.msra.mxu0 0
    %3003 = vmatprep.subr.bf16.mxu0 0
    %3004 = vmatpush1.bf16.msra.mxu0 0
    %3005 = vmatprep.subr.bf16.mxu0 0
    %3006 = vmatpush1.bf16.msra.mxu0 0
    %3007 = vmatprep.subr.bf16.mxu0 0
    %3008 = vmatpush1.bf16.msra.mxu0 0
    %3009 = vmatprep.subr.bf16.mxu0 0
    %3010 = vmatpush1.bf16.msra.mxu0 0
    %3011 = vmatprep.subr.bf16.mxu0 0
    %3012 = vmatpush1.bf16.msra.mxu0 0
    %3013 = vmatprep.subr.bf16.mxu0 0
    %3014 = vmatpush1.bf16.msra.mxu0 0
    %3015 = vmatprep.mubr.bf16.mxu0 0
    %3016 = vmatmul.mubr.bf16.gmra.mrb[0].mxu0 %v2981
    %v3017 = vpop.f32.mrb[0].mxu0
    %v3018 = vadd.f32 %v2966, %v3017
    %v3019 = vpop.f32.mrb[0].mxu0
    %v3020 = vpop.f32.mrb[0].mxu0
    %v3021 = vpop.f32.mrb[0].mxu0
    %3022 = vdwg.mxu0
    %v3023 = vmax.f32 %v3018, 0.0
    %v3024 = vld [vmem:[#allocation2] sm:$0x1]
    %v3025 = vld [vmem:[%s197] sm:$0x1]
    %v3026 = vpack.c.bf16 %v3023, %v3023
    %vm3027 = vcmask 48128
    %v3029 = vsel %vm3027, %v3025, 0
    %vm3031 = vcmask 1042432
    %v3033 = vsel %vm3031, %v3026, 0
    %3035 = vmatprep.subr.bf16.mxu0 0
    %3036 = vmatpush1.bf16.msra.mxu0 %v3033
    %3037 = vmatprep.subr.bf16.mxu0 0
    %3038 = vmatpush1.bf16.msra.mxu0 0
    %3039 = vmatprep.subr.bf16.mxu0 0
    %3040 = vmatpush1.bf16.msra.mxu0 0
    %3041 = vmatprep.subr.bf16.mxu0 0
    %3042 = vmatpush1.bf16.msra.mxu0 0
    %3043 = vmatprep.subr.bf16.mxu0 0
    %3044 = vmatpush1.bf16.msra.mxu0 0
    %3045 = vmatprep.subr.bf16.mxu0 0
    %3046 = vmatpush1.bf16.msra.mxu0 0
    %3047 = vmatprep.subr.bf16.mxu0 0
    %3048 = vmatpush1.bf16.msra.mxu0 0
    %3049 = vmatprep.subr.bf16.mxu0 0
    %3050 = vmatpush1.bf16.msra.mxu0 0
    %3051 = vmatprep.subr.bf16.mxu0 0
    %3052 = vmatpush1.bf16.msra.mxu0 0
    %3053 = vmatprep.subr.bf16.mxu0 0
    %3054 = vmatpush1.bf16.msra.mxu0 0
    %3055 = vmatprep.subr.bf16.mxu0 0
    %3056 = vmatpush1.bf16.msra.mxu0 0
    %3057 = vmatprep.subr.bf16.mxu0 0
    %3058 = vmatpush1.bf16.msra.mxu0 0
    %3059 = vmatprep.subr.bf16.mxu0 0
    %3060 = vmatpush1.bf16.msra.mxu0 0
    %3061 = vmatprep.subr.bf16.mxu0 0
    %3062 = vmatpush1.bf16.msra.mxu0 0
    %3063 = vmatprep.subr.bf16.mxu0 0
    %3064 = vmatpush1.bf16.msra.mxu0 0
    %3065 = vmatprep.subr.bf16.mxu0 0
    %3066 = vmatpush1.bf16.msra.mxu0 0
    %3067 = vmatprep.mubr.bf16.mxu0 0
    %3068 = vmatmul.mubr.bf16.gmra.mrb[0].mxu0 %v3029
    %v3069 = vpop.f32.mrb[0].mxu0
    %v3070 = vadd.f32 0.0, %v3069
    %v3071 = vpop.f32.mrb[0].mxu0
    %v3072 = vpop.f32.mrb[0].mxu0
    %v3073 = vpop.f32.mrb[0].mxu0
    %3074 = vdwg.mxu0
    %v3075 = vadd.f32 %v3024, %v3070
    %vm3076 = vcmask 253952
    %3077 = vst.msk [vmem:[#allocation2] sm:$0x1] %vm3076, %v3075
    // Predicated region
    $region102: #{tpu_custom_call.1} parent=1 // pred_check
      %p3078 = pneg %p200
    $region103: #{tpu_custom_call.1} parent=1 // pred_check_branch
      %3080 = sbr.rel (%p3078) target = $region105
    $region104: #{tpu_custom_call.1} parent=1 // pred_region
      %v3081 = vld [vmem:[#allocation2] sm:$0x1]
      %v3082 = vld [vmem:[%s18] sm:$0xf]
      %v3083 = vld [vmem:[%s18 + $0x4] sm:$0xf]
      %v3084 = vld [vmem:[%s18 + $0x8] sm:$0xf]
      %v3085 = vld [vmem:[%s18 + $0xc] sm:$0xf]
      %v3086 = vpack.c.bf16 %v3081, %v3081
      %v3091 = vunpack.c.l.b16 %v3082
      %v3092 = vunpack.c.l.b16 %v3083
      %v3093 = vunpack.c.l.b16 %v3084
      %v3094 = vunpack.c.l.b16 %v3085
      %v3095 = vpack.c.b16 %v3092, %v3091
      %v3096 = vpack.c.b16 %v3094, %v3093
      %v3100 = vsel %vm963, %v3086, 0
      %3102 = vmatprep.subr.bf16.mxu0 0
      %3103 = vmatpush1.bf16.msra.mxu0 %v3095
      %3104 = vmatprep.subr.bf16.mxu0 0
      %3105 = vmatpush1.bf16.msra.mxu0 %v3096
      %3106 = vmatprep.subr.bf16.mxu0 0
      %3107 = vmatpush1.bf16.msra.mxu0 0
      %3108 = vmatprep.subr.bf16.mxu0 0
      %3109 = vmatpush1.bf16.msra.mxu0 0
      %3110 = vmatprep.subr.bf16.mxu0 0
      %3111 = vmatpush1.bf16.msra.mxu0 0
      %3112 = vmatprep.subr.bf16.mxu0 0
      %3113 = vmatpush1.bf16.msra.mxu0 0
      %3114 = vmatprep.subr.bf16.mxu0 0
      %3115 = vmatpush1.bf16.msra.mxu0 0
      %3116 = vmatprep.subr.bf16.mxu0 0
      %3117 = vmatpush1.bf16.msra.mxu0 0
      %3118 = vmatprep.subr.bf16.mxu0 0
      %3119 = vmatpush1.bf16.msra.mxu0 0
      %3120 = vmatprep.subr.bf16.mxu0 0
      %3121 = vmatpush1.bf16.msra.mxu0 0
      %3122 = vmatprep.subr.bf16.mxu0 0
      %3123 = vmatpush1.bf16.msra.mxu0 0
      %3124 = vmatprep.subr.bf16.mxu0 0
      %3125 = vmatpush1.bf16.msra.mxu0 0
      %3126 = vmatprep.subr.bf16.mxu0 0
      %3127 = vmatpush1.bf16.msra.mxu0 0
      %3128 = vmatprep.subr.bf16.mxu0 0
      %3129 = vmatpush1.bf16.msra.mxu0 0
      %3130 = vmatprep.subr.bf16.mxu0 0
      %3131 = vmatpush1.bf16.msra.mxu0 0
      %3132 = vmatprep.subr.bf16.mxu0 0
      %3133 = vmatpush1.bf16.msra.mxu0 0
      %3134 = vmatprep.mubr.bf16.mxu0 0
      %3135 = vmatmul.mubr.bf16.gmra.mrb[0].mxu0 %v3100
      %v3136 = vpop.f32.mrb[0].mxu0
      %v3137 = vadd.f32 0.0, %v3136
      %v3138 = vpop.f32.mrb[0].mxu0
      %v3139 = vpop.f32.mrb[0].mxu0
      %v3140 = vpop.f32.mrb[0].mxu0
      %3141 = vdwg.mxu0
      %vm3142 = vcmask 57344
      %3143 = vst.msk [vmem:[#allocation12] sm:$0x1] %vm3142, %v3137
    $region105: #{tpu_custom_call.1} parent=1 // pred_fallthru
      _
    // Predicated region
    $region106: #{tpu_custom_call.1} parent=1 // pred_check
      _
    $region107: #{tpu_custom_call.1} parent=1 // pred_check_branch
      %3145 = sbr.rel (0) target = $region109
    $region108: #{tpu_custom_call.1} parent=1 // pred_region
      %s3147 = ssub.s32 16, 16
      %3148 = vsyncadd [#allocation5], %s3147
      %s3150 = sshll.u32 [#allocation12], 4
      %s3151 = int_to_ptr.vmem [resolvable:$true] %s3150
      %3153 = dma.vmem_to_hbm [thread:$0]  %s3151, 16, %s19, [#allocation5]
    $region109: #{tpu_custom_call.1} parent=1 // pred_fallthru
      _
    // Predicated region
    $region110: #{tpu_custom_call.1} parent=1 // pred_check
      _
    $region111: #{tpu_custom_call.1} parent=1 // pred_check_branch
      %3155 = sbr.rel (0) target = $region113
    $region112: #{tpu_custom_call.1} parent=1 // pred_region
      %3156 = dma.done [#allocation5], 16
    $region113: #{tpu_custom_call.1} parent=1 // pred_fallthru
      _
    %3157 = vsyncpa [#allocation4], 1
    %3158 = vsyncpa [#allocation7], 1
    %3159 = vsyncpa [#allocation10], 1
    %3160 = vsyncpa [#allocation5], 1

</llo_original>
